<compile_context>
chip_gen: v6e
topology: v6e:2x2x1
jax: 0.10.0
libtpu: 0.0.40
codegen_flags: <defaults>
</compile_context>

<pallas_src>
import jax
import jax.numpy as jnp
from jax import lax
from jax.experimental import pallas as pl
from jax.experimental.pallas import tpu as pltpu

# ----- small hyper-parameters consistent with the module's structure ---------
NUM_SOURCES = 2          # S
NUM_CHANNELS = 2         # C
WIN = 64                 # time_win_size == spec_win_size
HOP = 32                 # hop == WIN // 2 (50% overlap)
M_FTR = 48               # time feature size
F_SPEC = WIN // 2 + 1    # spec feature size = 33
HID = 32                 # rnn_hidden_size (num_layers = 1)

MEM_KEYS = ("wi_ti", "wh_ti", "b_ti",
            "wi_si", "wh_si", "b_si",
            "wi_hy_t", "wi_hy_s", "wh_hy", "b_hy",
            "wi_to", "wh_to", "b_to",
            "wi_so", "wh_so", "b_so")


def _round_up(n, m):
    return (n + m - 1) // m * m


# ============================ Pallas kernels =================================

def _encoder_kernel(fr_ref, win_ref, ut_ref, vt_ref, cos_ref, sin_ref,
                    feat_ref, featn_ref, mag_ref, re_ref, im_ref):
    """Fused time + spec encoder over a tile of frames [TILE, WIN]."""
    fr = fr_ref[...]                                              # [TR, WIN]
    norm = jnp.sqrt(jnp.sum(fr * fr, axis=-1, keepdims=True)) + 1e-8
    frn = fr / norm
    a = jnp.dot(frn, ut_ref[...], preferred_element_type=jnp.float32)
    b = jnp.dot(frn, vt_ref[...], preferred_element_type=jnp.float32)
    feat = jax.nn.relu(a) * jax.nn.sigmoid(b)
    feat_ref[...] = feat.astype(feat_ref.dtype)
    featn_ref[...] = (feat * norm).astype(featn_ref.dtype)        # norm folded in
    fw = fr * win_ref[...]
    re = jnp.dot(fw, cos_ref[...], preferred_element_type=jnp.float32)
    im = jnp.dot(fw, sin_ref[...], preferred_element_type=jnp.float32)
    re_ref[...] = re.astype(re_ref.dtype)
    im_ref[...] = im.astype(im_ref.dtype)
    mag_ref[...] = jnp.sqrt(re * re + im * im).astype(mag_ref.dtype)


def _memory_kernel(st_ref, ss_ref,
                   wi_ti, wh_ti, b_ti,
                   wi_si, wh_si, b_si,
                   wi_hy_t, wi_hy_s, wh_hy, b_hy,
                   wi_to, wh_to, b_to,
                   wi_so, wh_so, b_so,
                   ht_ref, hs_ref):
    """All five LSTMs advanced together in a single fori_loop over T."""
    T = st_ref.shape[0]
    B = st_ref.shape[1]
    H, H2 = HID, 2 * HID

    # Load all weights once (hoisted out of the recurrence).
    Wti, Ghti, Bti = wi_ti[...], wh_ti[...], b_ti[...]
    Wsi, Ghsi, Bsi = wi_si[...], wh_si[...], b_si[...]
    Whyt, Whys, Ghhy, Bhy = wi_hy_t[...], wi_hy_s[...], wh_hy[...], b_hy[...]
    Wto, Ghto, Bto = wi_to[...], wh_to[...], b_to[...]
    Wso, Ghso, Bso = wi_so[...], wh_so[...], b_so[...]

    def mm(a, b):
        return jnp.dot(a, b, preferred_element_type=jnp.float32)

    def cell(gates, c, h):
        i = jax.nn.sigmoid(gates[:, 0:h])
        f = jax.nn.sigmoid(gates[:, h:2 * h])
        g = jnp.tanh(gates[:, 2 * h:3 * h])
        o = jax.nn.sigmoid(gates[:, 3 * h:4 * h])
        c_new = f * c + i * g
        return o * jnp.tanh(c_new), c_new

    def step(t, carry):
        (h_ti, c_ti, h_si, c_si, h_hy, c_hy, h_to, c_to, h_so, c_so) = carry
        # time_rnn_in / spec_rnn_in
        h_ti, c_ti = cell(mm(st_ref[t], Wti) + mm(h_ti, Ghti) + Bti, c_ti, H)
        h_si, c_si = cell(mm(ss_ref[t], Wsi) + mm(h_si, Ghsi) + Bsi, c_si, H)
        # hybrid_rnn: concat(h_ti, h_si) folded into two input matmuls
        h_hy, c_hy = cell(mm(h_ti, Whyt) + mm(h_si, Whys) + mm(h_hy, Ghhy) + Bhy,
                          c_hy, H2)
        # time_rnn_out / spec_rnn_out: hybrid-output split folded into
        # zero-padded input weights (no lane slicing in-loop)
        h_to, c_to = cell(mm(h_hy, Wto) + mm(h_to, Ghto) + Bto, c_to, H)
        h_so, c_so = cell(mm(h_hy, Wso) + mm(h_so, Ghso) + Bso, c_so, H)
        ht_ref[t] = h_to
        hs_ref[t] = h_so
        return (h_ti, c_ti, h_si, c_si, h_hy, c_hy, h_to, c_to, h_so, c_so)

    z = lambda d: jnp.zeros((B, d), jnp.float32)
    lax.fori_loop(0, T, step,
                  (z(H), z(H), z(H), z(H), z(H2), z(H2), z(H), z(H), z(H), z(H)))


def _time_decoder_kernel(h_ref, feat_ref, featn_ref, wsk_ref, bsk_ref,
                         wmk_ref, bmk_ref, basis_ref, o_ref):
    """skip-FC + mask-FC + masking + basis synthesis for one (row-tile, source)."""
    feat = feat_ref[...]                                          # [TR, C*M]
    skip = jnp.dot(feat, wsk_ref[...], preferred_element_type=jnp.float32) + bsk_ref[...]
    y = h_ref[...] + skip                                         # [TR, H]
    mask = (jnp.dot(y, wmk_ref[0], preferred_element_type=jnp.float32)
            + bmk_ref[0])                                         # [TR, C*M]
    prod = mask * featn_ref[...]                                  # norm already folded in
    o_ref[0] = jnp.dot(prod, basis_ref[...],
                       preferred_element_type=jnp.float32).astype(o_ref.dtype)


def _spec_decoder_kernel(h_ref, re_ref, im_ref, wsk_ref, bsk_ref,
                         wmk_ref, bmk_ref, icos_ref, isin_ref, winc_ref, o_ref):
    """skip-FC + mask-FC + masking + inverse real-DFT + synthesis window."""
    re = re_ref[...]                                              # [TR, C*F]
    im = im_ref[...]
    mag = jnp.sqrt(re * re + im * im)                             # == s_spec
    skip = jnp.dot(mag, wsk_ref[...], preferred_element_type=jnp.float32) + bsk_ref[...]
    y = h_ref[...] + skip
    mask = (jnp.dot(y, wmk_ref[0], preferred_element_type=jnp.float32)
            + bmk_ref[0])                                         # [TR, C*F]
    # mask * mag * exp(i*angle) == (mask*re) + i*(mask*im)
    fr = (jnp.dot(mask * re, icos_ref[...], preferred_element_type=jnp.float32)
          + jnp.dot(mask * im, isin_ref[...], preferred_element_type=jnp.float32))
    o_ref[0] = (fr * winc_ref[...]).astype(o_ref.dtype)


# ============================ Pallas wrappers ================================

def _encode_frames(frames2, prep):
    rows = frames2.shape[0]
    tile = min(512, _round_up(rows, 8))
    rows_p = _round_up(rows, tile)
    if rows_p != rows:
        frames2 = jnp.pad(frames2, ((0, rows_p - rows), (0, 0)))
    M, F = M_FTR, F_SPEC

    def row_spec(d):
        return pl.BlockSpec((tile, d), lambda r: (r, 0))

    def const_spec(a):
        return pl.BlockSpec(a.shape, lambda r: (0,) * a.ndim)

    outs = pl.pallas_call(
        _encoder_kernel,
        grid=(rows_p // tile,),
        in_specs=[row_spec(WIN),
                  const_spec(prep["win"]),
                  const_spec(prep["enc_ut"]), const_spec(prep["enc_vt"]),
                  const_spec(prep["cos_t"]), const_spec(prep["sin_t"])],
        out_specs=(row_spec(M), row_spec(M), row_spec(F), row_spec(F), row_spec(F)),
        out_shape=(jax.ShapeDtypeStruct((rows_p, M), jnp.float32),
                   jax.ShapeDtypeStruct((rows_p, M), jnp.float32),
                   jax.ShapeDtypeStruct((rows_p, F), jnp.float32),
                   jax.ShapeDtypeStruct((rows_p, F), jnp.float32),
                   jax.ShapeDtypeStruct((rows_p, F), jnp.float32)),
        compiler_params=pltpu.CompilerParams(dimension_semantics=("parallel",)),
    )(frames2, prep["win"], prep["enc_ut"], prep["enc_vt"],
      prep["cos_t"], prep["sin_t"])
    feat, featn, mag, re, im = outs
    return feat[:rows], featn[:rows], mag[:rows], re[:rows], im[:rows]


def _run_memory(s_time, s_spec, prep):
    """s_time [B,T,C*M], s_spec [B,T,C*F] -> h_time, h_spec [B,T,H]."""
    B, T, _ = s_time.shape
    st = jnp.transpose(s_time, (1, 0, 2))                         # [T,B,C*M]
    ss = jnp.transpose(s_spec, (1, 0, 2))                         # [T,B,C*F]
    mem = prep["mem"]
    args = [st, ss] + [mem[k] for k in MEM_KEYS]
    ht, hs = pl.pallas_call(
        _memory_kernel,
        out_shape=(jax.ShapeDtypeStruct((T, B, HID), jnp.float32),
                   jax.ShapeDtypeStruct((T, B, HID), jnp.float32)),
    )(*args)
    return jnp.transpose(ht, (1, 0, 2)), jnp.transpose(hs, (1, 0, 2))


def _decode_time(h2, feat2, featn2, prep):
    rows = h2.shape[0]
    tile = min(512, _round_up(rows, 8))
    rows_p = _round_up(rows, tile)
    pad = rows_p - rows
    if pad:
        h2 = jnp.pad(h2, ((0, pad), (0, 0)))
        feat2 = jnp.pad(feat2, ((0, pad), (0, 0)))
        featn2 = jnp.pad(featn2, ((0, pad), (0, 0)))
    C, M, S, H = NUM_CHANNELS, M_FTR, NUM_SOURCES, HID
    CM, CW = C * M, C * WIN
    out = pl.pallas_call(
        _time_decoder_kernel,
        grid=(rows_p // tile, S),
        in_specs=[
            pl.BlockSpec((tile, H), lambda r, s: (r, 0)),
            pl.BlockSpec((tile, CM), lambda r, s: (r, 0)),
            pl.BlockSpec((tile, CM), lambda r, s: (r, 0)),
            pl.BlockSpec((CM, H), lambda r, s: (0, 0)),
            pl.BlockSpec((1, H), lambda r, s: (0, 0)),
            pl.BlockSpec((1, H, CM), lambda r, s: (s, 0, 0)),
            pl.BlockSpec((1, 1, CM), lambda r, s: (s, 0, 0)),
            pl.BlockSpec((CM, CW), lambda r, s: (0, 0)),
        ],
        out_specs=pl.BlockSpec((1, tile, CW), lambda r, s: (s, r, 0)),
        out_shape=jax.ShapeDtypeStruct((S, rows_p, CW), jnp.float32),
        compiler_params=pltpu.CompilerParams(
            dimension_semantics=("parallel", "parallel")),
    )(h2, feat2, featn2,
      prep["time_skip_wt"], prep["time_skip_b"],
      prep["time_mask_wt"], prep["time_mask_b"],
      prep["basis_blk"])
    return out[:, :rows]                                          # [S, B*T, C*WIN]


def _decode_spec(h2, re2, im2, prep):
    rows = h2.shape[0]
    tile = min(512, _round_up(rows, 8))
    rows_p = _round_up(rows, tile)
    pad = rows_p - rows
    if pad:
        h2 = jnp.pad(h2, ((0, pad), (0, 0)))
        re2 = jnp.pad(re2, ((0, pad), (0, 0)))
        im2 = jnp.pad(im2, ((0, pad), (0, 0)))
    C, F, S, H = NUM_CHANNELS, F_SPEC, NUM_SOURCES, HID
    CF, CW = C * F, C * WIN
    out = pl.pallas_call(
        _spec_decoder_kernel,
        grid=(rows_p // tile, S),
        in_specs=[
            pl.BlockSpec((tile, H), lambda r, s: (r, 0)),
            pl.BlockSpec((tile, CF), lambda r, s: (r, 0)),
            pl.BlockSpec((tile, CF), lambda r, s: (r, 0)),
            pl.BlockSpec((CF, H), lambda r, s: (0, 0)),
            pl.BlockSpec((1, H), lambda r, s: (0, 0)),
            pl.BlockSpec((1, H, CF), lambda r, s: (s, 0, 0)),
            pl.BlockSpec((1, 1, CF), lambda r, s: (s, 0, 0)),
            pl.BlockSpec((CF, CW), lambda r, s: (0, 0)),
            pl.BlockSpec((CF, CW), lambda r, s: (0, 0)),
            pl.BlockSpec((1, CW), lambda r, s: (0, 0)),
        ],
        out_specs=pl.BlockSpec((1, tile, CW), lambda r, s: (s, r, 0)),
        out_shape=jax.ShapeDtypeStruct((S, rows_p, CW), jnp.float32),
        compiler_params=pltpu.CompilerParams(
            dimension_semantics=("parallel", "parallel")),
    )(h2, re2, im2,
      prep["spec_skip_wt"], prep["spec_skip_b"],
      prep["spec_mask_wt"], prep["spec_mask_b"],
      prep["icos_blk"], prep["isin_blk"], prep["win_c"])
    return out[:, :rows]                                          # [S, B*T, C*WIN]


# ============================ parameters =====================================

def _dft_matrices(nfft):
    F = nfft // 2 + 1
    n = jnp.arange(nfft, dtype=jnp.float32)[:, None]
    k = jnp.arange(F, dtype=jnp.float32)[None, :]
    ang = 2.0 * jnp.pi * n * k / nfft
    cos_t = jnp.cos(ang)                              # [nfft, F]  re =  sum x cos
    sin_t = -jnp.sin(ang)                             # [nfft, F]  im = -sum x sin
    w = jnp.where((jnp.arange(F) == 0) | (jnp.arange(F) == nfft // 2), 1.0, 2.0)
    ang_i = (2.0 * jnp.pi * jnp.arange(F, dtype=jnp.float32)[:, None]
             * jnp.arange(nfft, dtype=jnp.float32)[None, :] / nfft)
    icos_t = (w[:, None] * jnp.cos(ang_i)) / nfft     # [F, nfft]
    isin_t = (-w[:, None] * jnp.sin(ang_i)) / nfft    # [F, nfft]
    return cos_t, sin_t, icos_t, isin_t


def _block_diag(m, reps):
    k, n = m.shape
    out = jnp.zeros((reps * k, reps * n), m.dtype)
    for i in range(reps):
        out = out.at[i * k:(i + 1) * k, i * n:(i + 1) * n].set(m)
    return out


def init_params(key):
    keys = jax.random.split(key, 32)
    ki = iter(keys)

    def u(shape, scale):
        return jax.random.uniform(next(ki), shape, jnp.float32, -scale, scale)

    C, S, M, F, H = NUM_CHANNELS, NUM_SOURCES, M_FTR, F_SPEC, HID

    def lstm(din, h):
        s = 1.0 / float(h) ** 0.5
        return {"w_ih": u((4 * h, din), s), "w_hh": u((4 * h, h), s),
                "b_ih": u((4 * h,), s), "b_hh": u((4 * h,), s)}

    def linear(din, dout):
        s = 1.0 / float(din) ** 0.5
        return {"w": u((dout, din), s), "b": u((dout,), s)}

    p = {}
    p["enc_u"] = u((M, WIN), 1.0 / float(WIN) ** 0.5)
    p["enc_v"] = u((M, WIN), 1.0 / float(WIN) ** 0.5)
    p["dec_basis"] = u((M, WIN), 1.0 / float(M) ** 0.5)
    p["time_rnn_in"] = lstm(C * M, H)
    p["time_skip_fc"] = linear(C * M, H)
    p["time_rnn_out"] = lstm(H, H)
    p["time_mask_fc"] = linear(H, S * C * M)
    p["spec_rnn_in"] = lstm(C * F, H)
    p["spec_skip_fc"] = linear(C * F, H)
    p["spec_rnn_out"] = lstm(H, H)
    p["spec_mask_fc"] = linear(H, S * C * F)
    p["hybrid_rnn"] = lstm(2 * H, 2 * H)
    return p


def prepare_params(p):
    """Pre-transpose weights / pre-build DFT matrices once (outside the jit)."""
    C, S, M, F, H = NUM_CHANNELS, NUM_SOURCES, M_FTR, F_SPEC, HID
    cos_t, sin_t, icos_t, isin_t = _dft_matrices(WIN)
    win = (0.54 - 0.46 * jnp.cos(2.0 * jnp.pi * jnp.arange(WIN) / WIN)).astype(jnp.float32)

    def lstm(q):
        return {"wi": q["w_ih"].T, "wh": q["w_hh"].T,
                "b": (q["b_ih"] + q["b_hh"]).reshape(1, -1)}

    l_ti = lstm(p["time_rnn_in"])
    l_si = lstm(p["spec_rnn_in"])
    l_hy = lstm(p["hybrid_rnn"])
    l_to = lstm(p["time_rnn_out"])
    l_so = lstm(p["spec_rnn_out"])
    zpad = jnp.zeros((H, 4 * H), jnp.float32)
    mem = {
        "wi_ti": l_ti["wi"], "wh_ti": l_ti["wh"], "b_ti": l_ti["b"],
        "wi_si": l_si["wi"], "wh_si": l_si["wh"], "b_si": l_si["b"],
        # hybrid: input concat folded into two matmuls
        "wi_hy_t": l_hy["wi"][:H], "wi_hy_s": l_hy["wi"][H:],
        "wh_hy": l_hy["wh"], "b_hy": l_hy["b"],
        # rnn_out: hybrid-output split folded into zero-padded input weights
        "wi_to": jnp.concatenate([l_to["wi"], zpad], axis=0),
        "wh_to": l_to["wh"], "b_to": l_to["b"],
        "wi_so": jnp.concatenate([zpad, l_so["wi"]], axis=0),
        "wh_so": l_so["wh"], "b_so": l_so["b"],
    }

    def mask_fc(q, feat_dim):
        wt = q["w"].T.reshape(H, S, C * feat_dim).transpose(1, 0, 2)   # [S, H, C*feat]
        b = q["b"].reshape(S, 1, C * feat_dim)
        return wt, b

    tm_wt, tm_b = mask_fc(p["time_mask_fc"], M)
    sm_wt, sm_b = mask_fc(p["spec_mask_fc"], F)
    return {
        "enc_ut": p["enc_u"].T, "enc_vt": p["enc_v"].T,
        "cos_t": cos_t, "sin_t": sin_t,
        "win": win.reshape(1, WIN),
        "win_c": jnp.tile(win.reshape(1, WIN), (1, C)),
        "basis_blk": _block_diag(p["dec_basis"], C),
        "icos_blk": _block_diag(icos_t, C),
        "isin_blk": _block_diag(isin_t, C),
        "mem": mem,
        "time_skip_wt": p["time_skip_fc"]["w"].T,
        "time_skip_b": p["time_skip_fc"]["b"].reshape(1, -1),
        "spec_skip_wt": p["spec_skip_fc"]["w"].T,
        "spec_skip_b": p["spec_skip_fc"]["b"].reshape(1, -1),
        "time_mask_wt": tm_wt, "time_mask_b": tm_b,
        "spec_mask_wt": sm_wt, "spec_mask_b": sm_b,
    }


# ============================ forward pass ===================================

def hstasnet_forward(prep, waveform):
    B, C, L = waveform.shape
    S, M, F, H = NUM_SOURCES, M_FTR, F_SPEC, HID

    # ---- reshape-based framing (50% overlap, no gather) ----
    T = (L - WIN) // HOP + 1
    L_use = (T + 1) * HOP
    x = waveform[:, :, :L_use].reshape(B * C, L_use)
    halves = x.reshape(B * C, T + 1, HOP)
    frames = jnp.concatenate([halves[:, :-1], halves[:, 1:]], axis=-1)   # [BC,T,WIN]
    frames = frames.reshape(B, C, T, WIN).transpose(0, 2, 1, 3)          # [B,T,C,WIN]
    frames2 = frames.reshape(B * T * C, WIN)

    # ---- fused encoder (time features + norm-scaled features + DFT) ----
    feat, featn, mag, re, im = _encode_frames(frames2, prep)
    feat = feat.reshape(B, T, C, M)
    featn = featn.reshape(B, T, C, M)
    mag = mag.reshape(B, T, C, F)
    re = re.reshape(B, T, C, F)
    im = im.reshape(B, T, C, F)

    # ---- all five LSTMs in one kernel, one pass over T ----
    s_time = feat.reshape(B, T, C * M)
    s_spec = mag.reshape(B, T, C * F)
    h_time, h_spec = _run_memory(s_time, s_spec, prep)                   # [B,T,H]

    # ---- fused skip-FC + mask-FC + masking + synthesis (S via index_map) ----
    rows2 = B * T
    zt = _decode_time(h_time.reshape(rows2, H),
                      feat.reshape(rows2, C * M),
                      featn.reshape(rows2, C * M), prep)                 # [S,B*T,C*WIN]
    zs = _decode_spec(h_spec.reshape(rows2, H),
                      re.reshape(rows2, C * F),
                      im.reshape(rows2, C * F), prep)                    # [S,B*T,C*WIN]
    zt = zt.reshape(S, B, T, C, WIN)
    zs = zs.reshape(S, B, T, C, WIN)

    # ---- reshape-based 50% overlap-add (no scatter) ----
    def ola(fr):                                  # [S,B,T,C,WIN] -> [S,B,T+1,C,HOP]
        a, b = fr[..., :HOP], fr[..., HOP:]
        z = jnp.zeros(fr.shape[:-3] + (1,) + fr.shape[-2:-1] + (HOP,), fr.dtype)
        return jnp.concatenate([a, z], axis=-3) + jnp.concatenate([z, b], axis=-3)

    zt_h = ola(zt)
    zs_h = ola(zs)

    # COLA normalisation for the spectral branch (analysis * synthesis window)
    w2 = prep["win"][0] * prep["win"][0]
    ones_t = jnp.ones((T, 1), jnp.float32)
    zeros_1 = jnp.zeros((1, HOP), jnp.float32)
    wsq = (jnp.concatenate([ones_t * w2[None, :HOP], zeros_1], axis=0)
           + jnp.concatenate([zeros_1, ones_t * w2[None, HOP:]], axis=0))  # [T+1,HOP]
    zs_h = zs_h / jnp.maximum(wsq, 1e-8)[None, None, :, None, :]

    out = zt_h + zs_h                                               # [S,B,T+1,C,HOP]
    out = out.transpose(1, 0, 3, 2, 4).reshape(B, S, C, (T + 1) * HOP)
    return out                                                      # [B,S,C,L]


if __name__ == "__main__":
    key = jax.random.PRNGKey(0)
    pkey, dkey = jax.random.split(key)
    params = init_params(pkey)
    prep = prepare_params(params)

    B, C = 2, NUM_CHANNELS
    T = 8
    L = (T + 1) * HOP                                               # 288 samples
    waveform = jax.random.normal(dkey, (B, C, L), jnp.float32)

    out = jax.jit(hstasnet_forward)(prep, waveform)
    out = jax.block_until_ready(out)
    assert out.shape == (B, NUM_SOURCES, C, L), out.shape
    assert bool(jnp.all(jnp.isfinite(out)))
    print("KERNEL_OK")
</pallas_src>

<mosaic_0001>
module attributes {stable_mosaic.version = 11 : i64} {
  func.func @_encoder_kernel(%arg0: i32, %arg1: memref<32x64xf32, #tpu.memory_space<vmem>>, %arg2: memref<1x64xf32, #tpu.memory_space<vmem>>, %arg3: memref<64x48xf32, #tpu.memory_space<vmem>>, %arg4: memref<64x48xf32, #tpu.memory_space<vmem>>, %arg5: memref<64x33xf32, #tpu.memory_space<vmem>>, %arg6: memref<64x33xf32, #tpu.memory_space<vmem>>, %arg7: memref<32x48xf32, #tpu.memory_space<vmem>>, %arg8: memref<32x48xf32, #tpu.memory_space<vmem>>, %arg9: memref<32x33xf32, #tpu.memory_space<vmem>>, %arg10: memref<32x33xf32, #tpu.memory_space<vmem>>, %arg11: memref<32x33xf32, #tpu.memory_space<vmem>>) attributes {dimension_semantics = [#tpu.dimension_semantics<parallel>], iteration_bounds = array<i64: 1>, scalar_prefetch = 0 : i64, scratch_operands = 0 : i64, tpu.core_type = #tpu.core_type<tc>, window_params = [{transform_indices = @transform_0, window_bounds = array<i64: 32, 64>}, {pipeline_mode = #tpu.pipeline_mode<synchronous>, transform_indices = @transform_1, window_bounds = array<i64: 1, 64>}, {pipeline_mode = #tpu.pipeline_mode<synchronous>, transform_indices = @transform_2, window_bounds = array<i64: 64, 48>}, {pipeline_mode = #tpu.pipeline_mode<synchronous>, transform_indices = @transform_3, window_bounds = array<i64: 64, 48>}, {pipeline_mode = #tpu.pipeline_mode<synchronous>, transform_indices = @transform_4, window_bounds = array<i64: 64, 33>}, {pipeline_mode = #tpu.pipeline_mode<synchronous>, transform_indices = @transform_5, window_bounds = array<i64: 64, 33>}, {transform_indices = @transform_6, window_bounds = array<i64: 32, 48>}, {transform_indices = @transform_7, window_bounds = array<i64: 32, 48>}, {transform_indices = @transform_8, window_bounds = array<i64: 32, 33>}, {transform_indices = @transform_9, window_bounds = array<i64: 32, 33>}, {transform_indices = @transform_10, window_bounds = array<i64: 32, 33>}]} {
    %c0 = arith.constant 0 : index
    %c0_0 = arith.constant 0 : index
    %0 = vector.load %arg1[%c0, %c0_0] : memref<32x64xf32, #tpu.memory_space<vmem>>, vector<32x64xf32>
    %1 = arith.mulf %0, %0 : vector<32x64xf32>
    %cst = arith.constant dense<0.000000e+00> : vector<32xf32>
    %2 = vector.multi_reduction <add>, %1, %cst [1] : vector<32x64xf32> to vector<32xf32>
    %3 = vector.shape_cast %2 : vector<32xf32> to vector<32x1xf32>
    %4 = math.sqrt %3 : vector<32x1xf32>
    %cst_1 = arith.constant 9.99999993E-9 : f32
    %5 = vector.broadcast %cst_1 : f32 to vector<32x1xf32>
    %6 = arith.addf %4, %5 : vector<32x1xf32>
    %7 = vector.broadcast %6 : vector<32x1xf32> to vector<32x64xf32>
    %8 = arith.divf %0, %7 : vector<32x64xf32>
    %c0_2 = arith.constant 0 : index
    %c0_3 = arith.constant 0 : index
    %9 = vector.load %arg3[%c0_2, %c0_3] : memref<64x48xf32, #tpu.memory_space<vmem>>, vector<64x48xf32>
    %cst_4 = arith.constant dense<0.000000e+00> : vector<32x48xf32>
    %10 = tpu.matmul %8, %9, %cst_4 {dimension_numbers = #tpu.dot_dimension_numbers<[1], [0], [0], [1], [0, 0, 1, 1], [], []>} : vector<32x64xf32>, vector<64x48xf32>, vector<32x48xf32> -> vector<32x48xf32>
    %c0_5 = arith.constant 0 : index
    %c0_6 = arith.constant 0 : index
    %11 = vector.load %arg4[%c0_5, %c0_6] : memref<64x48xf32, #tpu.memory_space<vmem>>, vector<64x48xf32>
    %cst_7 = arith.constant dense<0.000000e+00> : vector<32x48xf32>
    %12 = tpu.matmul %8, %11, %cst_7 {dimension_numbers = #tpu.dot_dimension_numbers<[1], [0], [0], [1], [0, 0, 1, 1], [], []>} : vector<32x64xf32>, vector<64x48xf32>, vector<32x48xf32> -> vector<32x48xf32>
    %cst_8 = arith.constant 0.000000e+00 : f32
    %13 = vector.broadcast %cst_8 : f32 to vector<32x48xf32>
    %14 = arith.maximumf %10, %13 : vector<32x48xf32>
    %15 = arith.negf %12 : vector<32x48xf32>
    %16 = math.exp %15 : vector<32x48xf32>
    %cst_9 = arith.constant 1.000000e+00 : f32
    %17 = vector.broadcast %cst_9 : f32 to vector<32x48xf32>
    %18 = arith.addf %17, %16 : vector<32x48xf32>
    %19 = arith.divf %17, %18 : vector<32x48xf32>
    %20 = arith.mulf %14, %19 : vector<32x48xf32>
    %c0_10 = arith.constant 0 : index
    %c0_11 = arith.constant 0 : index
    %21 = vector.load %arg7[%c0_10, %c0_11] : memref<32x48xf32, #tpu.memory_space<vmem>>, vector<32x48xf32>
    tpu.vector_store %arg7[%c0_10, %c0_11], %20 {strides = array<i32>} : memref<32x48xf32, #tpu.memory_space<vmem>>, vector<32x48xf32>,
    %22 = vector.broadcast %6 : vector<32x1xf32> to vector<32x48xf32>
    %23 = arith.mulf %20, %22 : vector<32x48xf32>
    %c0_12 = arith.constant 0 : index
    %c0_13 = arith.constant 0 : index
    %24 = vector.load %arg8[%c0_12, %c0_13] : memref<32x48xf32, #tpu.memory_space<vmem>>, vector<32x48xf32>
    tpu.vector_store %arg8[%c0_12, %c0_13], %23 {strides = array<i32>} : memref<32x48xf32, #tpu.memory_space<vmem>>, vector<32x48xf32>,
    %c0_14 = arith.constant 0 : index
    %c0_15 = arith.constant 0 : index
    %25 = vector.load %arg2[%c0_14, %c0_15] : memref<1x64xf32, #tpu.memory_space<vmem>>, vector<1x64xf32>
    %26 = vector.broadcast %25 : vector<1x64xf32> to vector<32x64xf32>
    %27 = arith.mulf %0, %26 : vector<32x64xf32>
    %c0_16 = arith.constant 0 : index
    %c0_17 = arith.constant 0 : index
    %28 = vector.load %arg5[%c0_16, %c0_17] : memref<64x33xf32, #tpu.memory_space<vmem>>, vector<64x33xf32>
    %cst_18 = arith.constant dense<0.000000e+00> : vector<32x33xf32>
    %29 = tpu.matmul %27, %28, %cst_18 {dimension_numbers = #tpu.dot_dimension_numbers<[1], [0], [0], [1], [0, 0, 1, 1], [], []>} : vector<32x64xf32>, vector<64x33xf32>, vector<32x33xf32> -> vector<32x33xf32>
    %c0_19 = arith.constant 0 : index
    %c0_20 = arith.constant 0 : index
    %30 = vector.load %arg6[%c0_19, %c0_20] : memref<64x33xf32, #tpu.memory_space<vmem>>, vector<64x33xf32>
    %cst_21 = arith.constant dense<0.000000e+00> : vector<32x33xf32>
    %31 = tpu.matmul %27, %30, %cst_21 {dimension_numbers = #tpu.dot_dimension_numbers<[1], [0], [0], [1], [0, 0, 1, 1], [], []>} : vector<32x64xf32>, vector<64x33xf32>, vector<32x33xf32> -> vector<32x33xf32>
    %c0_22 = arith.constant 0 : index
    %c0_23 = arith.constant 0 : index
    %32 = vector.load %arg10[%c0_22, %c0_23] : memref<32x33xf32, #tpu.memory_space<vmem>>, vector<32x33xf32>
    tpu.vector_store %arg10[%c0_22, %c0_23], %29 {strides = array<i32>} : memref<32x33xf32, #tpu.memory_space<vmem>>, vector<32x33xf32>,
    %c0_24 = arith.constant 0 : index
    %c0_25 = arith.constant 0 : index
    %33 = vector.load %arg11[%c0_24, %c0_25] : memref<32x33xf32, #tpu.memory_space<vmem>>, vector<32x33xf32>
    tpu.vector_store %arg11[%c0_24, %c0_25], %31 {strides = array<i32>} : memref<32x33xf32, #tpu.memory_space<vmem>>, vector<32x33xf32>,
    %34 = arith.mulf %29, %29 : vector<32x33xf32>
    %35 = arith.mulf %31, %31 : vector<32x33xf32>
    %36 = arith.addf %34, %35 : vector<32x33xf32>
    %37 = math.sqrt %36 : vector<32x33xf32>
    %c0_26 = arith.constant 0 : index
    %c0_27 = arith.constant 0 : index
    %38 = vector.load %arg9[%c0_26, %c0_27] : memref<32x33xf32, #tpu.memory_space<vmem>>, vector<32x33xf32>
    tpu.vector_store %arg9[%c0_26, %c0_27], %37 {strides = array<i32>} : memref<32x33xf32, #tpu.memory_space<vmem>>, vector<32x33xf32>,
    return
  }
  func.func @transform_0(%arg0: i32) -> (i32, i32) {
    %c0_i32 = arith.constant 0 : i32
    %c0_i32_0 = arith.constant 0 : i32
    return %arg0, %c0_i32 : i32, i32
  }
  func.func @transform_1(%arg0: i32) -> (i32, i32) {
    %c0_i32 = arith.constant 0 : i32
    %c0_i32_0 = arith.constant 0 : i32
    %c0_i32_1 = arith.constant 0 : i32
    return %c0_i32, %c0_i32_0 : i32, i32
  }
  func.func @transform_2(%arg0: i32) -> (i32, i32) {
    %c0_i32 = arith.constant 0 : i32
    %c0_i32_0 = arith.constant 0 : i32
    %c0_i32_1 = arith.constant 0 : i32
    return %c0_i32, %c0_i32_0 : i32, i32
  }
  func.func @transform_3(%arg0: i32) -> (i32, i32) {
    %c0_i32 = arith.constant 0 : i32
    %c0_i32_0 = arith.constant 0 : i32
    %c0_i32_1 = arith.constant 0 : i32
    return %c0_i32, %c0_i32_0 : i32, i32
  }
  func.func @transform_4(%arg0: i32) -> (i32, i32) {
    %c0_i32 = arith.constant 0 : i32
    %c0_i32_0 = arith.constant 0 : i32
    %c0_i32_1 = arith.constant 0 : i32
    return %c0_i32, %c0_i32_0 : i32, i32
  }
  func.func @transform_5(%arg0: i32) -> (i32, i32) {
    %c0_i32 = arith.constant 0 : i32
    %c0_i32_0 = arith.constant 0 : i32
    %c0_i32_1 = arith.constant 0 : i32
    return %c0_i32, %c0_i32_0 : i32, i32
  }
  func.func @transform_6(%arg0: i32) -> (i32, i32) {
    %c0_i32 = arith.constant 0 : i32
    %c0_i32_0 = arith.constant 0 : i32
    return %arg0, %c0_i32 : i32, i32
  }
  func.func @transform_7(%arg0: i32) -> (i32, i32) {
    %c0_i32 = arith.constant 0 : i32
    %c0_i32_0 = arith.constant 0 : i32
    return %arg0, %c0_i32 : i32, i32
  }
  func.func @transform_8(%arg0: i32) -> (i32, i32) {
    %c0_i32 = arith.constant 0 : i32
    %c0_i32_0 = arith.constant 0 : i32
    return %arg0, %c0_i32 : i32, i32
  }
  func.func @transform_9(%arg0: i32) -> (i32, i32) {
    %c0_i32 = arith.constant 0 : i32
    %c0_i32_0 = arith.constant 0 : i32
    return %arg0, %c0_i32 : i32, i32
  }
  func.func @transform_10(%arg0: i32) -> (i32, i32) {
    %c0_i32 = arith.constant 0 : i32
    %c0_i32_0 = arith.constant 0 : i32
    return %arg0, %c0_i32 : i32, i32
  }
}

module attributes {stable_mosaic.version = 11 : i64} {
  func.func @_memory_kernel(%arg0: memref<8x2x96xf32, #tpu.memory_space<vmem>>, %arg1: memref<8x2x66xf32, #tpu.memory_space<vmem>>, %arg2: memref<96x128xf32, #tpu.memory_space<vmem>>, %arg3: memref<32x128xf32, #tpu.memory_space<vmem>>, %arg4: memref<1x128xf32, #tpu.memory_space<vmem>>, %arg5: memref<66x128xf32, #tpu.memory_space<vmem>>, %arg6: memref<32x128xf32, #tpu.memory_space<vmem>>, %arg7: memref<1x128xf32, #tpu.memory_space<vmem>>, %arg8: memref<32x256xf32, #tpu.memory_space<vmem>>, %arg9: memref<32x256xf32, #tpu.memory_space<vmem>>, %arg10: memref<64x256xf32, #tpu.memory_space<vmem>>, %arg11: memref<1x256xf32, #tpu.memory_space<vmem>>, %arg12: memref<64x128xf32, #tpu.memory_space<vmem>>, %arg13: memref<32x128xf32, #tpu.memory_space<vmem>>, %arg14: memref<1x128xf32, #tpu.memory_space<vmem>>, %arg15: memref<64x128xf32, #tpu.memory_space<vmem>>, %arg16: memref<32x128xf32, #tpu.memory_space<vmem>>, %arg17: memref<1x128xf32, #tpu.memory_space<vmem>>, %arg18: memref<8x2x32xf32, #tpu.memory_space<vmem>>, %arg19: memref<8x2x32xf32, #tpu.memory_space<vmem>>) attributes {dimension_semantics = [], scalar_prefetch = 0 : i64, scratch_operands = 0 : i64, tpu.core_type = #tpu.core_type<tc>} {
    %c0 = arith.constant 0 : index
    %c0_0 = arith.constant 0 : index
    %0 = vector.load %arg2[%c0, %c0_0] : memref<96x128xf32, #tpu.memory_space<vmem>>, vector<96x128xf32>
    %c0_1 = arith.constant 0 : index
    %c0_2 = arith.constant 0 : index
    %1 = vector.load %arg3[%c0_1, %c0_2] : memref<32x128xf32, #tpu.memory_space<vmem>>, vector<32x128xf32>
    %c0_3 = arith.constant 0 : index
    %c0_4 = arith.constant 0 : index
    %2 = vector.load %arg4[%c0_3, %c0_4] : memref<1x128xf32, #tpu.memory_space<vmem>>, vector<1x128xf32>
    %c0_5 = arith.constant 0 : index
    %c0_6 = arith.constant 0 : index
    %3 = vector.load %arg5[%c0_5, %c0_6] : memref<66x128xf32, #tpu.memory_space<vmem>>, vector<66x128xf32>
    %c0_7 = arith.constant 0 : index
    %c0_8 = arith.constant 0 : index
    %4 = vector.load %arg6[%c0_7, %c0_8] : memref<32x128xf32, #tpu.memory_space<vmem>>, vector<32x128xf32>
    %c0_9 = arith.constant 0 : index
    %c0_10 = arith.constant 0 : index
    %5 = vector.load %arg7[%c0_9, %c0_10] : memref<1x128xf32, #tpu.memory_space<vmem>>, vector<1x128xf32>
    %c0_11 = arith.constant 0 : index
    %c0_12 = arith.constant 0 : index
    %6 = vector.load %arg8[%c0_11, %c0_12] : memref<32x256xf32, #tpu.memory_space<vmem>>, vector<32x256xf32>
    %c0_13 = arith.constant 0 : index
    %c0_14 = arith.constant 0 : index
    %7 = vector.load %arg9[%c0_13, %c0_14] : memref<32x256xf32, #tpu.memory_space<vmem>>, vector<32x256xf32>
    %c0_15 = arith.constant 0 : index
    %c0_16 = arith.constant 0 : index
    %8 = vector.load %arg10[%c0_15, %c0_16] : memref<64x256xf32, #tpu.memory_space<vmem>>, vector<64x256xf32>
    %c0_17 = arith.constant 0 : index
    %c0_18 = arith.constant 0 : index
    %9 = vector.load %arg11[%c0_17, %c0_18] : memref<1x256xf32, #tpu.memory_space<vmem>>, vector<1x256xf32>
    %c0_19 = arith.constant 0 : index
    %c0_20 = arith.constant 0 : index
    %10 = vector.load %arg12[%c0_19, %c0_20] : memref<64x128xf32, #tpu.memory_space<vmem>>, vector<64x128xf32>
    %c0_21 = arith.constant 0 : index
    %c0_22 = arith.constant 0 : index
    %11 = vector.load %arg13[%c0_21, %c0_22] : memref<32x128xf32, #tpu.memory_space<vmem>>, vector<32x128xf32>
    %c0_23 = arith.constant 0 : index
    %c0_24 = arith.constant 0 : index
    %12 = vector.load %arg14[%c0_23, %c0_24] : memref<1x128xf32, #tpu.memory_space<vmem>>, vector<1x128xf32>
    %c0_25 = arith.constant 0 : index
    %c0_26 = arith.constant 0 : index
    %13 = vector.load %arg15[%c0_25, %c0_26] : memref<64x128xf32, #tpu.memory_space<vmem>>, vector<64x128xf32>
    %c0_27 = arith.constant 0 : index
    %c0_28 = arith.constant 0 : index
    %14 = vector.load %arg16[%c0_27, %c0_28] : memref<32x128xf32, #tpu.memory_space<vmem>>, vector<32x128xf32>
    %c0_29 = arith.constant 0 : index
    %c0_30 = arith.constant 0 : index
    %15 = vector.load %arg17[%c0_29, %c0_30] : memref<1x128xf32, #tpu.memory_space<vmem>>, vector<1x128xf32>
    %cst = arith.constant 0.000000e+00 : f32
    %16 = vector.broadcast %cst : f32 to vector<2x32xf32>
    %cst_31 = arith.constant 0.000000e+00 : f32
    %17 = vector.broadcast %cst_31 : f32 to vector<2x32xf32>
    %cst_32 = arith.constant 0.000000e+00 : f32
    %18 = vector.broadcast %cst_32 : f32 to vector<2x32xf32>
    %cst_33 = arith.constant 0.000000e+00 : f32
    %19 = vector.broadcast %cst_33 : f32 to vector<2x32xf32>
    %cst_34 = arith.constant 0.000000e+00 : f32
    %20 = vector.broadcast %cst_34 : f32 to vector<2x64xf32>
    %cst_35 = arith.constant 0.000000e+00 : f32
    %21 = vector.broadcast %cst_35 : f32 to vector<2x64xf32>
    %cst_36 = arith.constant 0.000000e+00 : f32
    %22 = vector.broadcast %cst_36 : f32 to vector<2x32xf32>
    %cst_37 = arith.constant 0.000000e+00 : f32
    %23 = vector.broadcast %cst_37 : f32 to vector<2x32xf32>
    %cst_38 = arith.constant 0.000000e+00 : f32
    %24 = vector.broadcast %cst_38 : f32 to vector<2x32xf32>
    %cst_39 = arith.constant 0.000000e+00 : f32
    %25 = vector.broadcast %cst_39 : f32 to vector<2x32xf32>
    %c0_i32 = arith.constant 0 : i32
    %c8_i32 = arith.constant 8 : i32
    %26 = arith.addi %c0_i32, %c8_i32 : i32
    %c1_i32 = arith.constant 1 : i32
    %27:10 = scf.for %arg20 = %c0_i32 to %26 step %c1_i32 iter_args(%arg21 = %16, %arg22 = %17, %arg23 = %18, %arg24 = %19, %arg25 = %20, %arg26 = %21, %arg27 = %22, %arg28 = %23, %arg29 = %24, %arg30 = %25) -> (vector<2x32xf32>, vector<2x32xf32>, vector<2x32xf32>, vector<2x32xf32>, vector<2x64xf32>, vector<2x64xf32>, vector<2x32xf32>, vector<2x32xf32>, vector<2x32xf32>, vector<2x32xf32>)  : i32 {
      %28 = arith.index_cast %arg20 : i32 to index
      %c0_41 = arith.constant 0 : index
      %c0_42 = arith.constant 0 : index
      %29 = vector.load %arg0[%28, %c0_41, %c0_42] : memref<8x2x96xf32, #tpu.memory_space<vmem>>, vector<1x2x96xf32>
      %30 = vector.shape_cast %29 : vector<1x2x96xf32> to vector<2x96xf32>
      %cst_43 = arith.constant dense<0.000000e+00> : vector<2x128xf32>
      %31 = tpu.matmul %30, %0, %cst_43 {dimension_numbers = #tpu.dot_dimension_numbers<[1], [0], [0], [1], [0, 0, 1, 1], [], []>} : vector<2x96xf32>, vector<96x128xf32>, vector<2x128xf32> -> vector<2x128xf32>
      %cst_44 = arith.constant dense<0.000000e+00> : vector<2x128xf32>
      %32 = tpu.matmul %arg21, %1, %cst_44 {dimension_numbers = #tpu.dot_dimension_numbers<[1], [0], [0], [1], [0, 0, 1, 1], [], []>} : vector<2x32xf32>, vector<32x128xf32>, vector<2x128xf32> -> vector<2x128xf32>
      %33 = arith.addf %31, %32 : vector<2x128xf32>
      %34 = vector.broadcast %2 : vector<1x128xf32> to vector<2x128xf32>
      %35 = arith.addf %33, %34 : vector<2x128xf32>
      %36 = vector.extract_strided_slice %35 {offsets = [0, 0], sizes = [2, 32], strides = [1, 1]} : vector<2x128xf32> to vector<2x32xf32>
      %37 = arith.negf %36 : vector<2x32xf32>
      %38 = math.exp %37 : vector<2x32xf32>
      %cst_45 = arith.constant 1.000000e+00 : f32
      %39 = vector.broadcast %cst_45 : f32 to vector<2x32xf32>
      %40 = arith.addf %39, %38 : vector<2x32xf32>
      %41 = arith.divf %39, %40 : vector<2x32xf32>
      %42 = vector.extract_strided_slice %35 {offsets = [0, 32], sizes = [2, 32], strides = [1, 1]} : vector<2x128xf32> to vector<2x32xf32>
      %43 = arith.negf %42 : vector<2x32xf32>
      %44 = math.exp %43 : vector<2x32xf32>
      %cst_46 = arith.constant 1.000000e+00 : f32
      %45 = vector.broadcast %cst_46 : f32 to vector<2x32xf32>
      %46 = arith.addf %45, %44 : vector<2x32xf32>
      %47 = arith.divf %45, %46 : vector<2x32xf32>
      %48 = vector.extract_strided_slice %35 {offsets = [0, 64], sizes = [2, 32], strides = [1, 1]} : vector<2x128xf32> to vector<2x32xf32>
      %49 = math.tanh %48 : vector<2x32xf32>
      %50 = vector.extract_strided_slice %35 {offsets = [0, 96], sizes = [2, 32], strides = [1, 1]} : vector<2x128xf32> to vector<2x32xf32>
      %51 = arith.negf %50 : vector<2x32xf32>
      %52 = math.exp %51 : vector<2x32xf32>
      %cst_47 = arith.constant 1.000000e+00 : f32
      %53 = vector.broadcast %cst_47 : f32 to vector<2x32xf32>
      %54 = arith.addf %53, %52 : vector<2x32xf32>
      %55 = arith.divf %53, %54 : vector<2x32xf32>
      %56 = arith.mulf %47, %arg22 : vector<2x32xf32>
      %57 = arith.mulf %41, %49 : vector<2x32xf32>
      %58 = arith.addf %56, %57 : vector<2x32xf32>
      %59 = math.tanh %58 : vector<2x32xf32>
      %60 = arith.mulf %55, %59 : vector<2x32xf32>
      %61 = arith.index_cast %arg20 : i32 to index
      %c0_48 = arith.constant 0 : index
      %c0_49 = arith.constant 0 : index
      %62 = vector.load %arg1[%61, %c0_48, %c0_49] : memref<8x2x66xf32, #tpu.memory_space<vmem>>, vector<1x2x66xf32>
      %63 = vector.shape_cast %62 : vector<1x2x66xf32> to vector<2x66xf32>
      %cst_50 = arith.constant dense<0.000000e+00> : vector<2x128xf32>
      %64 = tpu.matmul %63, %3, %cst_50 {dimension_numbers = #tpu.dot_dimension_numbers<[1], [0], [0], [1], [0, 0, 1, 1], [], []>} : vector<2x66xf32>, vector<66x128xf32>, vector<2x128xf32> -> vector<2x128xf32>
      %cst_51 = arith.constant dense<0.000000e+00> : vector<2x128xf32>
      %65 = tpu.matmul %arg23, %4, %cst_51 {dimension_numbers = #tpu.dot_dimension_numbers<[1], [0], [0], [1], [0, 0, 1, 1], [], []>} : vector<2x32xf32>, vector<32x128xf32>, vector<2x128xf32> -> vector<2x128xf32>
      %66 = arith.addf %64, %65 : vector<2x128xf32>
      %67 = vector.broadcast %5 : vector<1x128xf32> to vector<2x128xf32>
      %68 = arith.addf %66, %67 : vector<2x128xf32>
      %69 = vector.extract_strided_slice %68 {offsets = [0, 0], sizes = [2, 32], strides = [1, 1]} : vector<2x128xf32> to vector<2x32xf32>
      %70 = arith.negf %69 : vector<2x32xf32>
      %71 = math.exp %70 : vector<2x32xf32>
      %cst_52 = arith.constant 1.000000e+00 : f32
      %72 = vector.broadcast %cst_52 : f32 to vector<2x32xf32>
      %73 = arith.addf %72, %71 : vector<2x32xf32>
      %74 = arith.divf %72, %73 : vector<2x32xf32>
      %75 = vector.extract_strided_slice %68 {offsets = [0, 32], sizes = [2, 32], strides = [1, 1]} : vector<2x128xf32> to vector<2x32xf32>
      %76 = arith.negf %75 : vector<2x32xf32>
      %77 = math.exp %76 : vector<2x32xf32>
      %cst_53 = arith.constant 1.000000e+00 : f32
      %78 = vector.broadcast %cst_53 : f32 to vector<2x32xf32>
      %79 = arith.addf %78, %77 : vector<2x32xf32>
      %80 = arith.divf %78, %79 : vector<2x32xf32>
      %81 = vector.extract_strided_slice %68 {offsets = [0, 64], sizes = [2, 32], strides = [1, 1]} : vector<2x128xf32> to vector<2x32xf32>
      %82 = math.tanh %81 : vector<2x32xf32>
      %83 = vector.extract_strided_slice %68 {offsets = [0, 96], sizes = [2, 32], strides = [1, 1]} : vector<2x128xf32> to vector<2x32xf32>
      %84 = arith.negf %83 : vector<2x32xf32>
      %85 = math.exp %84 : vector<2x32xf32>
      %cst_54 = arith.constant 1.000000e+00 : f32
      %86 = vector.broadcast %cst_54 : f32 to vector<2x32xf32>
      %87 = arith.addf %86, %85 : vector<2x32xf32>
      %88 = arith.divf %86, %87 : vector<2x32xf32>
      %89 = arith.mulf %80, %arg24 : vector<2x32xf32>
      %90 = arith.mulf %74, %82 : vector<2x32xf32>
      %91 = arith.addf %89, %90 : vector<2x32xf32>
      %92 = math.tanh %91 : vector<2x32xf32>
      %93 = arith.mulf %88, %92 : vector<2x32xf32>
      %cst_55 = arith.constant dense<0.000000e+00> : vector<2x256xf32>
      %94 = tpu.matmul %60, %6, %cst_55 {dimension_numbers = #tpu.dot_dimension_numbers<[1], [0], [0], [1], [0, 0, 1, 1], [], []>} : vector<2x32xf32>, vector<32x256xf32>, vector<2x256xf32> -> vector<2x256xf32>
      %cst_56 = arith.constant dense<0.000000e+00> : vector<2x256xf32>
      %95 = tpu.matmul %93, %7, %cst_56 {dimension_numbers = #tpu.dot_dimension_numbers<[1], [0], [0], [1], [0, 0, 1, 1], [], []>} : vector<2x32xf32>, vector<32x256xf32>, vector<2x256xf32> -> vector<2x256xf32>
      %96 = arith.addf %94, %95 : vector<2x256xf32>
      %cst_57 = arith.constant dense<0.000000e+00> : vector<2x256xf32>
      %97 = tpu.matmul %arg25, %8, %cst_57 {dimension_numbers = #tpu.dot_dimension_numbers<[1], [0], [0], [1], [0, 0, 1, 1], [], []>} : vector<2x64xf32>, vector<64x256xf32>, vector<2x256xf32> -> vector<2x256xf32>
      %98 = arith.addf %96, %97 : vector<2x256xf32>
      %99 = vector.broadcast %9 : vector<1x256xf32> to vector<2x256xf32>
      %100 = arith.addf %98, %99 : vector<2x256xf32>
      %101 = vector.extract_strided_slice %100 {offsets = [0, 0], sizes = [2, 64], strides = [1, 1]} : vector<2x256xf32> to vector<2x64xf32>
      %102 = arith.negf %101 : vector<2x64xf32>
      %103 = math.exp %102 : vector<2x64xf32>
      %cst_58 = arith.constant 1.000000e+00 : f32
      %104 = vector.broadcast %cst_58 : f32 to vector<2x64xf32>
      %105 = arith.addf %104, %103 : vector<2x64xf32>
      %106 = arith.divf %104, %105 : vector<2x64xf32>
      %107 = vector.extract_strided_slice %100 {offsets = [0, 64], sizes = [2, 64], strides = [1, 1]} : vector<2x256xf32> to vector<2x64xf32>
      %108 = arith.negf %107 : vector<2x64xf32>
      %109 = math.exp %108 : vector<2x64xf32>
      %cst_59 = arith.constant 1.000000e+00 : f32
      %110 = vector.broadcast %cst_59 : f32 to vector<2x64xf32>
      %111 = arith.addf %110, %109 : vector<2x64xf32>
      %112 = arith.divf %110, %111 : vector<2x64xf32>
      %113 = vector.extract_strided_slice %100 {offsets = [0, 128], sizes = [2, 64], strides = [1, 1]} : vector<2x256xf32> to vector<2x64xf32>
      %114 = math.tanh %113 : vector<2x64xf32>
      %115 = vector.extract_strided_slice %100 {offsets = [0, 192], sizes = [2, 64], strides = [1, 1]} : vector<2x256xf32> to vector<2x64xf32>
      %116 = arith.negf %115 : vector<2x64xf32>
      %117 = math.exp %116 : vector<2x64xf32>
      %cst_60 = arith.constant 1.000000e+00 : f32
      %118 = vector.broadcast %cst_60 : f32 to vector<2x64xf32>
      %119 = arith.addf %118, %117 : vector<2x64xf32>
      %120 = arith.divf %118, %119 : vector<2x64xf32>
      %121 = arith.mulf %112, %arg26 : vector<2x64xf32>
      %122 = arith.mulf %106, %114 : vector<2x64xf32>
      %123 = arith.addf %121, %122 : vector<2x64xf32>
      %124 = math.tanh %123 : vector<2x64xf32>
      %125 = arith.mulf %120, %124 : vector<2x64xf32>
      %cst_61 = arith.constant dense<0.000000e+00> : vector<2x128xf32>
      %126 = tpu.matmul %125, %10, %cst_61 {dimension_numbers = #tpu.dot_dimension_numbers<[1], [0], [0], [1], [0, 0, 1, 1], [], []>} : vector<2x64xf32>, vector<64x128xf32>, vector<2x128xf32> -> vector<2x128xf32>
      %cst_62 = arith.constant dense<0.000000e+00> : vector<2x128xf32>
      %127 = tpu.matmul %arg27, %11, %cst_62 {dimension_numbers = #tpu.dot_dimension_numbers<[1], [0], [0], [1], [0, 0, 1, 1], [], []>} : vector<2x32xf32>, vector<32x128xf32>, vector<2x128xf32> -> vector<2x128xf32>
      %128 = arith.addf %126, %127 : vector<2x128xf32>
      %129 = vector.broadcast %12 : vector<1x128xf32> to vector<2x128xf32>
      %130 = arith.addf %128, %129 : vector<2x128xf32>
      %131 = vector.extract_strided_slice %130 {offsets = [0, 0], sizes = [2, 32], strides = [1, 1]} : vector<2x128xf32> to vector<2x32xf32>
      %132 = arith.negf %131 : vector<2x32xf32>
      %133 = math.exp %132 : vector<2x32xf32>
      %cst_63 = arith.constant 1.000000e+00 : f32
      %134 = vector.broadcast %cst_63 : f32 to vector<2x32xf32>
      %135 = arith.addf %134, %133 : vector<2x32xf32>
      %136 = arith.divf %134, %135 : vector<2x32xf32>
      %137 = vector.extract_strided_slice %130 {offsets = [0, 32], sizes = [2, 32], strides = [1, 1]} : vector<2x128xf32> to vector<2x32xf32>
      %138 = arith.negf %137 : vector<2x32xf32>
      %139 = math.exp %138 : vector<2x32xf32>
      %cst_64 = arith.constant 1.000000e+00 : f32
      %140 = vector.broadcast %cst_64 : f32 to vector<2x32xf32>
      %141 = arith.addf %140, %139 : vector<2x32xf32>
      %142 = arith.divf %140, %141 : vector<2x32xf32>
      %143 = vector.extract_strided_slice %130 {offsets = [0, 64], sizes = [2, 32], strides = [1, 1]} : vector<2x128xf32> to vector<2x32xf32>
      %144 = math.tanh %143 : vector<2x32xf32>
      %145 = vector.extract_strided_slice %130 {offsets = [0, 96], sizes = [2, 32], strides = [1, 1]} : vector<2x128xf32> to vector<2x32xf32>
      %146 = arith.negf %145 : vector<2x32xf32>
      %147 = math.exp %146 : vector<2x32xf32>
      %cst_65 = arith.constant 1.000000e+00 : f32
      %148 = vector.broadcast %cst_65 : f32 to vector<2x32xf32>
      %149 = arith.addf %148, %147 : vector<2x32xf32>
      %150 = arith.divf %148, %149 : vector<2x32xf32>
      %151 = arith.mulf %142, %arg28 : vector<2x32xf32>
      %152 = arith.mulf %136, %144 : vector<2x32xf32>
      %153 = arith.addf %151, %152 : vector<2x32xf32>
      %154 = math.tanh %153 : vector<2x32xf32>
      %155 = arith.mulf %150, %154 : vector<2x32xf32>
      %cst_66 = arith.constant dense<0.000000e+00> : vector<2x128xf32>
      %156 = tpu.matmul %125, %13, %cst_66 {dimension_numbers = #tpu.dot_dimension_numbers<[1], [0], [0], [1], [0, 0, 1, 1], [], []>} : vector<2x64xf32>, vector<64x128xf32>, vector<2x128xf32> -> vector<2x128xf32>
      %cst_67 = arith.constant dense<0.000000e+00> : vector<2x128xf32>
      %157 = tpu.matmul %arg29, %14, %cst_67 {dimension_numbers = #tpu.dot_dimension_numbers<[1], [0], [0], [1], [0, 0, 1, 1], [], []>} : vector<2x32xf32>, vector<32x128xf32>, vector<2x128xf32> -> vector<2x128xf32>
      %158 = arith.addf %156, %157 : vector<2x128xf32>
      %159 = vector.broadcast %15 : vector<1x128xf32> to vector<2x128xf32>
      %160 = arith.addf %158, %159 : vector<2x128xf32>
      %161 = vector.extract_strided_slice %160 {offsets = [0, 0], sizes = [2, 32], strides = [1, 1]} : vector<2x128xf32> to vector<2x32xf32>
      %162 = arith.negf %161 : vector<2x32xf32>
      %163 = math.exp %162 : vector<2x32xf32>
      %cst_68 = arith.constant 1.000000e+00 : f32
      %164 = vector.broadcast %cst_68 : f32 to vector<2x32xf32>
      %165 = arith.addf %164, %163 : vector<2x32xf32>
      %166 = arith.divf %164, %165 : vector<2x32xf32>
      %167 = vector.extract_strided_slice %160 {offsets = [0, 32], sizes = [2, 32], strides = [1, 1]} : vector<2x128xf32> to vector<2x32xf32>
      %168 = arith.negf %167 : vector<2x32xf32>
      %169 = math.exp %168 : vector<2x32xf32>
      %cst_69 = arith.constant 1.000000e+00 : f32
      %170 = vector.broadcast %cst_69 : f32 to vector<2x32xf32>
      %171 = arith.addf %170, %169 : vector<2x32xf32>
      %172 = arith.divf %170, %171 : vector<2x32xf32>
      %173 = vector.extract_strided_slice %160 {offsets = [0, 64], sizes = [2, 32], strides = [1, 1]} : vector<2x128xf32> to vector<2x32xf32>
      %174 = math.tanh %173 : vector<2x32xf32>
      %175 = vector.extract_strided_slice %160 {offsets = [0, 96], sizes = [2, 32], strides = [1, 1]} : vector<2x128xf32> to vector<2x32xf32>
      %176 = arith.negf %175 : vector<2x32xf32>
      %177 = math.exp %176 : vector<2x32xf32>
      %cst_70 = arith.constant 1.000000e+00 : f32
      %178 = vector.broadcast %cst_70 : f32 to vector<2x32xf32>
      %179 = arith.addf %178, %177 : vector<2x32xf32>
      %180 = arith.divf %178, %179 : vector<2x32xf32>
      %181 = arith.mulf %172, %arg30 : vector<2x32xf32>
      %182 = arith.mulf %166, %174 : vector<2x32xf32>
      %183 = arith.addf %181, %182 : vector<2x32xf32>
      %184 = math.tanh %183 : vector<2x32xf32>
      %185 = arith.mulf %180, %184 : vector<2x32xf32>
      %186 = arith.index_cast %arg20 : i32 to index
      %c0_71 = arith.constant 0 : index
      %c0_72 = arith.constant 0 : index
      %187 = vector.load %arg18[%186, %c0_71, %c0_72] : memref<8x2x32xf32, #tpu.memory_space<vmem>>, vector<1x2x32xf32>
      %188 = vector.shape_cast %187 : vector<1x2x32xf32> to vector<2x32xf32>
      %189 = vector.shape_cast %155 : vector<2x32xf32> to vector<1x2x32xf32>
      tpu.vector_store %arg18[%186, %c0_71, %c0_72], %189 {strides = array<i32>} : memref<8x2x32xf32, #tpu.memory_space<vmem>>, vector<1x2x32xf32>,
      %190 = arith.index_cast %arg20 : i32 to index
      %c0_73 = arith.constant 0 : index
      %c0_74 = arith.constant 0 : index
      %191 = vector.load %arg19[%190, %c0_73, %c0_74] : memref<8x2x32xf32, #tpu.memory_space<vmem>>, vector<1x2x32xf32>
      %192 = vector.shape_cast %191 : vector<1x2x32xf32> to vector<2x32xf32>
      %193 = vector.shape_cast %185 : vector<2x32xf32> to vector<1x2x32xf32>
      tpu.vector_store %arg19[%190, %c0_73, %c0_74], %193 {strides = array<i32>} : memref<8x2x32xf32, #tpu.memory_space<vmem>>, vector<1x2x32xf32>,
      scf.yield %60, %58, %93, %91, %125, %123, %155, %153, %185, %183 : vector<2x32xf32>, vector<2x32xf32>, vector<2x32xf32>, vector<2x32xf32>, vector<2x64xf32>, vector<2x64xf32>, vector<2x32xf32>, vector<2x32xf32>, vector<2x32xf32>, vector<2x32xf32>
    }
    %c8_i32_40 = arith.constant 8 : i32
    return
  }
}

module attributes {stable_mosaic.version = 11 : i64} {
  func.func @_time_decoder_kernel(%arg0: i32, %arg1: i32, %arg2: memref<16x32xf32, #tpu.memory_space<vmem>>, %arg3: memref<16x96xf32, #tpu.memory_space<vmem>>, %arg4: memref<16x96xf32, #tpu.memory_space<vmem>>, %arg5: memref<96x32xf32, #tpu.memory_space<vmem>>, %arg6: memref<1x32xf32, #tpu.memory_space<vmem>>, %arg7: memref<1x32x96xf32, #tpu.memory_space<vmem>>, %arg8: memref<1x1x96xf32, #tpu.memory_space<vmem>>, %arg9: memref<96x128xf32, #tpu.memory_space<vmem>>, %arg10: memref<1x16x128xf32, #tpu.memory_space<vmem>>) attributes {dimension_semantics = [#tpu.dimension_semantics<parallel>, #tpu.dimension_semantics<parallel>], iteration_bounds = array<i64: 1, 2>, scalar_prefetch = 0 : i64, scratch_operands = 0 : i64, tpu.core_type = #tpu.core_type<tc>, window_params = [{transform_indices = @transform_0, window_bounds = array<i64: 16, 32>}, {transform_indices = @transform_1, window_bounds = array<i64: 16, 96>}, {transform_indices = @transform_2, window_bounds = array<i64: 16, 96>}, {pipeline_mode = #tpu.pipeline_mode<synchronous>, transform_indices = @transform_3, window_bounds = array<i64: 96, 32>}, {pipeline_mode = #tpu.pipeline_mode<synchronous>, transform_indices = @transform_4, window_bounds = array<i64: 1, 32>}, {transform_indices = @transform_5, window_bounds = array<i64: 1, 32, 96>}, {transform_indices = @transform_6, window_bounds = array<i64: 1, 1, 96>}, {pipeline_mode = #tpu.pipeline_mode<synchronous>, transform_indices = @transform_7, window_bounds = array<i64: 96, 128>}, {transform_indices = @transform_8, window_bounds = array<i64: 1, 16, 128>}]} {
    %c0 = arith.constant 0 : index
    %c0_0 = arith.constant 0 : index
    %0 = vector.load %arg3[%c0, %c0_0] : memref<16x96xf32, #tpu.memory_space<vmem>>, vector<16x96xf32>
    %c0_1 = arith.constant 0 : index
    %c0_2 = arith.constant 0 : index
    %1 = vector.load %arg5[%c0_1, %c0_2] : memref<96x32xf32, #tpu.memory_space<vmem>>, vector<96x32xf32>
    %cst = arith.constant dense<0.000000e+00> : vector<16x32xf32>
    %2 = tpu.matmul %0, %1, %cst {dimension_numbers = #tpu.dot_dimension_numbers<[1], [0], [0], [1], [0, 0, 1, 1], [], []>} : vector<16x96xf32>, vector<96x32xf32>, vector<16x32xf32> -> vector<16x32xf32>
    %c0_3 = arith.constant 0 : index
    %c0_4 = arith.constant 0 : index
    %3 = vector.load %arg6[%c0_3, %c0_4] : memref<1x32xf32, #tpu.memory_space<vmem>>, vector<1x32xf32>
    %4 = vector.broadcast %3 : vector<1x32xf32> to vector<16x32xf32>
    %5 = arith.addf %2, %4 : vector<16x32xf32>
    %c0_5 = arith.constant 0 : index
    %c0_6 = arith.constant 0 : index
    %6 = vector.load %arg2[%c0_5, %c0_6] : memref<16x32xf32, #tpu.memory_space<vmem>>, vector<16x32xf32>
    %7 = arith.addf %6, %5 : vector<16x32xf32>
    %c0_7 = arith.constant 0 : index
    %c0_8 = arith.constant 0 : index
    %c0_9 = arith.constant 0 : index
    %8 = vector.load %arg7[%c0_7, %c0_8, %c0_9] : memref<1x32x96xf32, #tpu.memory_space<vmem>>, vector<1x32x96xf32>
    %9 = vector.shape_cast %8 : vector<1x32x96xf32> to vector<32x96xf32>
    %cst_10 = arith.constant dense<0.000000e+00> : vector<16x96xf32>
    %10 = tpu.matmul %7, %9, %cst_10 {dimension_numbers = #tpu.dot_dimension_numbers<[1], [0], [0], [1], [0, 0, 1, 1], [], []>} : vector<16x32xf32>, vector<32x96xf32>, vector<16x96xf32> -> vector<16x96xf32>
    %c0_11 = arith.constant 0 : index
    %c0_12 = arith.constant 0 : index
    %c0_13 = arith.constant 0 : index
    %11 = vector.load %arg8[%c0_11, %c0_12, %c0_13] : memref<1x1x96xf32, #tpu.memory_space<vmem>>, vector<1x1x96xf32>
    %12 = vector.shape_cast %11 : vector<1x1x96xf32> to vector<1x96xf32>
    %13 = vector.broadcast %12 : vector<1x96xf32> to vector<16x96xf32>
    %14 = arith.addf %10, %13 : vector<16x96xf32>
    %c0_14 = arith.constant 0 : index
    %c0_15 = arith.constant 0 : index
    %15 = vector.load %arg4[%c0_14, %c0_15] : memref<16x96xf32, #tpu.memory_space<vmem>>, vector<16x96xf32>
    %16 = arith.mulf %14, %15 : vector<16x96xf32>
    %c0_16 = arith.constant 0 : index
    %c0_17 = arith.constant 0 : index
    %17 = vector.load %arg9[%c0_16, %c0_17] : memref<96x128xf32, #tpu.memory_space<vmem>>, vector<96x128xf32>
    %cst_18 = arith.constant dense<0.000000e+00> : vector<16x128xf32>
    %18 = tpu.matmul %16, %17, %cst_18 {dimension_numbers = #tpu.dot_dimension_numbers<[1], [0], [0], [1], [0, 0, 1, 1], [], []>} : vector<16x96xf32>, vector<96x128xf32>, vector<16x128xf32> -> vector<16x128xf32>
    %c0_19 = arith.constant 0 : index
    %c0_20 = arith.constant 0 : index
    %c0_21 = arith.constant 0 : index
    %19 = vector.load %arg10[%c0_19, %c0_20, %c0_21] : memref<1x16x128xf32, #tpu.memory_space<vmem>>, vector<1x16x128xf32>
    %20 = vector.shape_cast %19 : vector<1x16x128xf32> to vector<16x128xf32>
    %21 = vector.shape_cast %18 : vector<16x128xf32> to vector<1x16x128xf32>
    tpu.vector_store %arg10[%c0_19, %c0_20, %c0_21], %21 {strides = array<i32>} : memref<1x16x128xf32, #tpu.memory_space<vmem>>, vector<1x16x128xf32>,
    return
  }
  func.func @transform_0(%arg0: i32, %arg1: i32) -> (i32, i32) {
    %c0_i32 = arith.constant 0 : i32
    %c0_i32_0 = arith.constant 0 : i32
    return %arg0, %c0_i32 : i32, i32
  }
  func.func @transform_1(%arg0: i32, %arg1: i32) -> (i32, i32) {
    %c0_i32 = arith.constant 0 : i32
    %c0_i32_0 = arith.constant 0 : i32
    return %arg0, %c0_i32 : i32, i32
  }
  func.func @transform_2(%arg0: i32, %arg1: i32) -> (i32, i32) {
    %c0_i32 = arith.constant 0 : i32
    %c0_i32_0 = arith.constant 0 : i32
    return %arg0, %c0_i32 : i32, i32
  }
  func.func @transform_3(%arg0: i32, %arg1: i32) -> (i32, i32) {
    %c0_i32 = arith.constant 0 : i32
    %c0_i32_0 = arith.constant 0 : i32
    %c0_i32_1 = arith.constant 0 : i32
    return %c0_i32, %c0_i32_0 : i32, i32
  }
  func.func @transform_4(%arg0: i32, %arg1: i32) -> (i32, i32) {
    %c0_i32 = arith.constant 0 : i32
    %c0_i32_0 = arith.constant 0 : i32
    %c0_i32_1 = arith.constant 0 : i32
    return %c0_i32, %c0_i32_0 : i32, i32
  }
  func.func @transform_5(%arg0: i32, %arg1: i32) -> (i32, i32, i32) {
    %c0_i32 = arith.constant 0 : i32
    %c0_i32_0 = arith.constant 0 : i32
    %c0_i32_1 = arith.constant 0 : i32
    return %arg1, %c0_i32, %c0_i32_0 : i32, i32, i32
  }
  func.func @transform_6(%arg0: i32, %arg1: i32) -> (i32, i32, i32) {
    %c0_i32 = arith.constant 0 : i32
    %c0_i32_0 = arith.constant 0 : i32
    %c0_i32_1 = arith.constant 0 : i32
    return %arg1, %c0_i32, %c0_i32_0 : i32, i32, i32
  }
  func.func @transform_7(%arg0: i32, %arg1: i32) -> (i32, i32) {
    %c0_i32 = arith.constant 0 : i32
    %c0_i32_0 = arith.constant 0 : i32
    %c0_i32_1 = arith.constant 0 : i32
    return %c0_i32, %c0_i32_0 : i32, i32
  }
  func.func @transform_8(%arg0: i32, %arg1: i32) -> (i32, i32, i32) {
    %c0_i32 = arith.constant 0 : i32
    %c0_i32_0 = arith.constant 0 : i32
    return %arg1, %arg0, %c0_i32 : i32, i32, i32
  }
}

module attributes {stable_mosaic.version = 11 : i64} {
  func.func @_spec_decoder_kernel(%arg0: i32, %arg1: i32, %arg2: memref<16x32xf32, #tpu.memory_space<vmem>>, %arg3: memref<16x66xf32, #tpu.memory_space<vmem>>, %arg4: memref<16x66xf32, #tpu.memory_space<vmem>>, %arg5: memref<66x32xf32, #tpu.memory_space<vmem>>, %arg6: memref<1x32xf32, #tpu.memory_space<vmem>>, %arg7: memref<1x32x66xf32, #tpu.memory_space<vmem>>, %arg8: memref<1x1x66xf32, #tpu.memory_space<vmem>>, %arg9: memref<66x128xf32, #tpu.memory_space<vmem>>, %arg10: memref<66x128xf32, #tpu.memory_space<vmem>>, %arg11: memref<1x128xf32, #tpu.memory_space<vmem>>, %arg12: memref<1x16x128xf32, #tpu.memory_space<vmem>>) attributes {dimension_semantics = [#tpu.dimension_semantics<parallel>, #tpu.dimension_semantics<parallel>], iteration_bounds = array<i64: 1, 2>, scalar_prefetch = 0 : i64, scratch_operands = 0 : i64, tpu.core_type = #tpu.core_type<tc>, window_params = [{transform_indices = @transform_0, window_bounds = array<i64: 16, 32>}, {transform_indices = @transform_1, window_bounds = array<i64: 16, 66>}, {transform_indices = @transform_2, window_bounds = array<i64: 16, 66>}, {pipeline_mode = #tpu.pipeline_mode<synchronous>, transform_indices = @transform_3, window_bounds = array<i64: 66, 32>}, {pipeline_mode = #tpu.pipeline_mode<synchronous>, transform_indices = @transform_4, window_bounds = array<i64: 1, 32>}, {transform_indices = @transform_5, window_bounds = array<i64: 1, 32, 66>}, {transform_indices = @transform_6, window_bounds = array<i64: 1, 1, 66>}, {pipeline_mode = #tpu.pipeline_mode<synchronous>, transform_indices = @transform_7, window_bounds = array<i64: 66, 128>}, {pipeline_mode = #tpu.pipeline_mode<synchronous>, transform_indices = @transform_8, window_bounds = array<i64: 66, 128>}, {pipeline_mode = #tpu.pipeline_mode<synchronous>, transform_indices = @transform_9, window_bounds = array<i64: 1, 128>}, {transform_indices = @transform_10, window_bounds = array<i64: 1, 16, 128>}]} {
    %c0 = arith.constant 0 : index
    %c0_0 = arith.constant 0 : index
    %0 = vector.load %arg3[%c0, %c0_0] : memref<16x66xf32, #tpu.memory_space<vmem>>, vector<16x66xf32>
    %c0_1 = arith.constant 0 : index
    %c0_2 = arith.constant 0 : index
    %1 = vector.load %arg4[%c0_1, %c0_2] : memref<16x66xf32, #tpu.memory_space<vmem>>, vector<16x66xf32>
    %2 = arith.mulf %0, %0 : vector<16x66xf32>
    %3 = arith.mulf %1, %1 : vector<16x66xf32>
    %4 = arith.addf %2, %3 : vector<16x66xf32>
    %5 = math.sqrt %4 : vector<16x66xf32>
    %c0_3 = arith.constant 0 : index
    %c0_4 = arith.constant 0 : index
    %6 = vector.load %arg5[%c0_3, %c0_4] : memref<66x32xf32, #tpu.memory_space<vmem>>, vector<66x32xf32>
    %cst = arith.constant dense<0.000000e+00> : vector<16x32xf32>
    %7 = tpu.matmul %5, %6, %cst {dimension_numbers = #tpu.dot_dimension_numbers<[1], [0], [0], [1], [0, 0, 1, 1], [], []>} : vector<16x66xf32>, vector<66x32xf32>, vector<16x32xf32> -> vector<16x32xf32>
    %c0_5 = arith.constant 0 : index
    %c0_6 = arith.constant 0 : index
    %8 = vector.load %arg6[%c0_5, %c0_6] : memref<1x32xf32, #tpu.memory_space<vmem>>, vector<1x32xf32>
    %9 = vector.broadcast %8 : vector<1x32xf32> to vector<16x32xf32>
    %10 = arith.addf %7, %9 : vector<16x32xf32>
    %c0_7 = arith.constant 0 : index
    %c0_8 = arith.constant 0 : index
    %11 = vector.load %arg2[%c0_7, %c0_8] : memref<16x32xf32, #tpu.memory_space<vmem>>, vector<16x32xf32>
    %12 = arith.addf %11, %10 : vector<16x32xf32>
    %c0_9 = arith.constant 0 : index
    %c0_10 = arith.constant 0 : index
    %c0_11 = arith.constant 0 : index
    %13 = vector.load %arg7[%c0_9, %c0_10, %c0_11] : memref<1x32x66xf32, #tpu.memory_space<vmem>>, vector<1x32x66xf32>
    %14 = vector.shape_cast %13 : vector<1x32x66xf32> to vector<32x66xf32>
    %cst_12 = arith.constant dense<0.000000e+00> : vector<16x66xf32>
    %15 = tpu.matmul %12, %14, %cst_12 {dimension_numbers = #tpu.dot_dimension_numbers<[1], [0], [0], [1], [0, 0, 1, 1], [], []>} : vector<16x32xf32>, vector<32x66xf32>, vector<16x66xf32> -> vector<16x66xf32>
    %c0_13 = arith.constant 0 : index
    %c0_14 = arith.constant 0 : index
    %c0_15 = arith.constant 0 : index
    %16 = vector.load %arg8[%c0_13, %c0_14, %c0_15] : memref<1x1x66xf32, #tpu.memory_space<vmem>>, vector<1x1x66xf32>
    %17 = vector.shape_cast %16 : vector<1x1x66xf32> to vector<1x66xf32>
    %18 = vector.broadcast %17 : vector<1x66xf32> to vector<16x66xf32>
    %19 = arith.addf %15, %18 : vector<16x66xf32>
    %20 = arith.mulf %19, %0 : vector<16x66xf32>
    %c0_16 = arith.constant 0 : index
    %c0_17 = arith.constant 0 : index
    %21 = vector.load %arg9[%c0_16, %c0_17] : memref<66x128xf32, #tpu.memory_space<vmem>>, vector<66x128xf32>
    %cst_18 = arith.constant dense<0.000000e+00> : vector<16x128xf32>
    %22 = tpu.matmul %20, %21, %cst_18 {dimension_numbers = #tpu.dot_dimension_numbers<[1], [0], [0], [1], [0, 0, 1, 1], [], []>} : vector<16x66xf32>, vector<66x128xf32>, vector<16x128xf32> -> vector<16x128xf32>
    %23 = arith.mulf %19, %1 : vector<16x66xf32>
    %c0_19 = arith.constant 0 : index
    %c0_20 = arith.constant 0 : index
    %24 = vector.load %arg10[%c0_19, %c0_20] : memref<66x128xf32, #tpu.memory_space<vmem>>, vector<66x128xf32>
    %cst_21 = arith.constant dense<0.000000e+00> : vector<16x128xf32>
    %25 = tpu.matmul %23, %24, %cst_21 {dimension_numbers = #tpu.dot_dimension_numbers<[1], [0], [0], [1], [0, 0, 1, 1], [], []>} : vector<16x66xf32>, vector<66x128xf32>, vector<16x128xf32> -> vector<16x128xf32>
    %26 = arith.addf %22, %25 : vector<16x128xf32>
    %c0_22 = arith.constant 0 : index
    %c0_23 = arith.constant 0 : index
    %27 = vector.load %arg11[%c0_22, %c0_23] : memref<1x128xf32, #tpu.memory_space<vmem>>, vector<1x128xf32>
    %28 = vector.broadcast %27 : vector<1x128xf32> to vector<16x128xf32>
    %29 = arith.mulf %26, %28 : vector<16x128xf32>
    %c0_24 = arith.constant 0 : index
    %c0_25 = arith.constant 0 : index
    %c0_26 = arith.constant 0 : index
    %30 = vector.load %arg12[%c0_24, %c0_25, %c0_26] : memref<1x16x128xf32, #tpu.memory_space<vmem>>, vector<1x16x128xf32>
    %31 = vector.shape_cast %30 : vector<1x16x128xf32> to vector<16x128xf32>
    %32 = vector.shape_cast %29 : vector<16x128xf32> to vector<1x16x128xf32>
    tpu.vector_store %arg12[%c0_24, %c0_25, %c0_26], %32 {strides = array<i32>} : memref<1x16x128xf32, #tpu.memory_space<vmem>>, vector<1x16x128xf32>,
    return
  }
  func.func @transform_0(%arg0: i32, %arg1: i32) -> (i32, i32) {
    %c0_i32 = arith.constant 0 : i32
    %c0_i32_0 = arith.constant 0 : i32
    return %arg0, %c0_i32 : i32, i32
  }
  func.func @transform_1(%arg0: i32, %arg1: i32) -> (i32, i32) {
    %c0_i32 = arith.constant 0 : i32
    %c0_i32_0 = arith.constant 0 : i32
    return %arg0, %c0_i32 : i32, i32
  }
  func.func @transform_2(%arg0: i32, %arg1: i32) -> (i32, i32) {
    %c0_i32 = arith.constant 0 : i32
    %c0_i32_0 = arith.constant 0 : i32
    return %arg0, %c0_i32 : i32, i32
  }
  func.func @transform_3(%arg0: i32, %arg1: i32) -> (i32, i32) {
    %c0_i32 = arith.constant 0 : i32
    %c0_i32_0 = arith.constant 0 : i32
    %c0_i32_1 = arith.constant 0 : i32
    return %c0_i32, %c0_i32_0 : i32, i32
  }
  func.func @transform_4(%arg0: i32, %arg1: i32) -> (i32, i32) {
    %c0_i32 = arith.constant 0 : i32
    %c0_i32_0 = arith.constant 0 : i32
    %c0_i32_1 = arith.constant 0 : i32
    return %c0_i32, %c0_i32_0 : i32, i32
  }
  func.func @transform_5(%arg0: i32, %arg1: i32) -> (i32, i32, i32) {
    %c0_i32 = arith.constant 0 : i32
    %c0_i32_0 = arith.constant 0 : i32
    %c0_i32_1 = arith.constant 0 : i32
    return %arg1, %c0_i32, %c0_i32_0 : i32, i32, i32
  }
  func.func @transform_6(%arg0: i32, %arg1: i32) -> (i32, i32, i32) {
    %c0_i32 = arith.constant 0 : i32
    %c0_i32_0 = arith.constant 0 : i32
    %c0_i32_1 = arith.constant 0 : i32
    return %arg1, %c0_i32, %c0_i32_0 : i32, i32, i32
  }
  func.func @transform_7(%arg0: i32, %arg1: i32) -> (i32, i32) {
    %c0_i32 = arith.constant 0 : i32
    %c0_i32_0 = arith.constant 0 : i32
    %c0_i32_1 = arith.constant 0 : i32
    return %c0_i32, %c0_i32_0 : i32, i32
  }
  func.func @transform_8(%arg0: i32, %arg1: i32) -> (i32, i32) {
    %c0_i32 = arith.constant 0 : i32
    %c0_i32_0 = arith.constant 0 : i32
    %c0_i32_1 = arith.constant 0 : i32
    return %c0_i32, %c0_i32_0 : i32, i32
  }
  func.func @transform_9(%arg0: i32, %arg1: i32) -> (i32, i32) {
    %c0_i32 = arith.constant 0 : i32
    %c0_i32_0 = arith.constant 0 : i32
    %c0_i32_1 = arith.constant 0 : i32
    return %c0_i32, %c0_i32_0 : i32, i32
  }
  func.func @transform_10(%arg0: i32, %arg1: i32) -> (i32, i32, i32) {
    %c0_i32 = arith.constant 0 : i32
    %c0_i32_0 = arith.constant 0 : i32
    return %arg1, %arg0, %c0_i32 : i32, i32, i32
  }
}

</mosaic_0001>

<llo_original>
// kernel: hstasnet_forward.6
$region0: #{hstasnet_forward.6}
  #allocation0 [shape = 'u32[]', space=smem, size = 0x4, offset = 0x4, fixed_abs, tag = 'smem constant byte address 0x4 - core index']
  #allocation1 [shape = 'u32[144,128]{1,0:T(1,128)}', space=vmem, size = 0x12000, scoped, tag = 'internal scratch']
  %s0 = inlined_call_operand.vmem [shape: f32[16,32], index: 0, kind: input, shape index: {}]
  %s1 = inlined_call_operand.vmem [shape: f32[16,96], index: 1, kind: input, shape index: {}]
  %s2 = inlined_call_operand.vmem [shape: f32[16,96], index: 2, kind: input, shape index: {}]
  %s3 = inlined_call_operand.vmem [shape: f32[96,32], index: 3, kind: input, shape index: {}]
  %s4 = inlined_call_operand.vmem [shape: f32[1,32], index: 4, kind: input, shape index: {}]
  %s5 = inlined_call_operand.vmem [shape: f32[2,32,96], index: 5, kind: input, shape index: {}]
  %s6 = inlined_call_operand.vmem [shape: f32[2,1,96], index: 6, kind: input, shape index: {}]
  %s7 = inlined_call_operand.vmem [shape: f32[96,128], index: 7, kind: input, shape index: {}]
  %s8 = inlined_call_operand.vmem [shape: f32[2,16,128], index: 8, kind: output, shape index: {}]
  %s9 = sld [smem:[#allocation0]]
  $region65: #{hstasnet_forward.6} parent=0
    _
  %s11 = ssub.s32 1, %s9
  %s12 = scalar_select 0, %s11, %s9
  loop: start=0, step=1, limit=4
  $region2: #{hstasnet_forward.6} parent=0 // loop_pre_header
    _
  $region3: #{hstasnet_forward.6} parent=0 // loop_header
    %s14 = sphi 0, %s18
    %p15 = scmp.ge.s32.totalorder %s14, 4
    %s21 = sphi 0, %s33
    %s22 = sphi 0, %s29
    %s23 = sphi 0, %s21
    %s24 = sphi 0, %s22
    %s25 = sphi 0, %s23
    %s26 = sphi 0, %s24
    %s36 = sphi 0, %s38
    %s39 = sphi 0, %s36
    %s40 = sphi 0, %s39
    %s56 = sphi 0, %s40
    %s62 = sphi 0, %s64
    %s65 = sphi 0, %s62
    %s66 = sphi 0, %s65
    %s82 = sphi 0, %s66
    %s88 = sphi 0, %s90
    %s91 = sphi 0, %s88
    %s92 = sphi 0, %s91
    %s108 = sphi 0, %s92
    %s112 = sphi 0, %s112
    %s114 = sphi 0, %s112
    %s115 = sphi 0, %s114
    %s129 = sphi 0, %s115
    %s133 = sphi 0, %s133
    %s135 = sphi 0, %s133
    %s136 = sphi 0, %s135
    %s150 = sphi 0, %s136
    %s156 = sphi 0, %s158
    %s159 = sphi 0, %s156
    %s160 = sphi 0, %s159
    %s176 = sphi 0, %s160
    %s182 = sphi 0, %s184
    %s185 = sphi 0, %s182
    %s186 = sphi 0, %s185
    %s202 = sphi 0, %s186
    %s206 = sphi 0, %s206
    %s208 = sphi 0, %s206
    %s209 = sphi 0, %s208
    %s223 = sphi 0, %s209
    %s231 = sphi 0, %s233
    %s234 = sphi 0, %s231
    %s235 = sphi 0, %s234
    %s251 = sphi 0, %s235
  $region4: #{hstasnet_forward.6} parent=0 // loop_header_branch
    %17 = sbr.rel (%p15) target = $region8
  $region5: #{hstasnet_forward.6} parent=0 // loop_body
    %s19 = ssub.s32 %s14, 1
    %s20 = ssub.s32 %s14, 2
    %s27 = sadd.s32 1, %s22
    %p28 = scmp.ge.s32.totalorder %s27, 2
    %s29 = scalar_select %p28, 0, %s27
    %s30 = sadd.s32 1, %s21
    %s31 = scalar_select %p28, %s30, %s21
    %p32 = scmp.ge.s32.totalorder %s31, 1
    %s33 = scalar_select %p32, 0, %s31
    %s34 = ssub.s32 %s21, %s33
    %p35 = scmp.eq.s32.totalorder %s34, 0
    %s37 = sadd.s32 %s36, 1
    %s38 = scalar_select %p35, %s36, %s37
    %p41 = pneg %p35
    %p42 = scmp.eq.s32.totalorder %s14, 1
    %p43 = por %p41, %p42
    %p44 = scmp.ne.s32.totalorder %s36, %s39
    %p45 = scmp.eq.s32.totalorder %s14, 0
    %p46 = por %p44, %p45
    %p47 = scmp.ne.s32.totalorder %s36, %s39
    %p48 = scmp.eq.s32.totalorder %s19, 1
    %p49 = por %p47, %p48
    %p50 = scmp.ne.s32.totalorder %s39, %s40
    %p51 = scmp.eq.s32.totalorder %s19, 0
    %p52 = por %p50, %p51
    %p53 = scmp.ne.s32.totalorder %s39, %s40
    %p54 = scmp.eq.s32.totalorder %s20, 1
    %p55 = por %p53, %p54
    %p57 = scmp.ne.s32.totalorder %s40, %s56
    %p58 = scmp.eq.s32.totalorder %s20, 0
    %p59 = por %p57, %p58
    %s60 = ssub.s32 %s21, %s33
    %p61 = scmp.eq.s32.totalorder %s60, 0
    %s63 = sadd.s32 %s62, 1
    %s64 = scalar_select %p61, %s62, %s63
    %p67 = pneg %p61
    %p68 = scmp.eq.s32.totalorder %s14, 1
    %p69 = por %p67, %p68
    %p70 = scmp.ne.s32.totalorder %s62, %s65
    %p71 = scmp.eq.s32.totalorder %s14, 0
    %p72 = por %p70, %p71
    %p73 = scmp.ne.s32.totalorder %s62, %s65
    %p74 = scmp.eq.s32.totalorder %s19, 1
    %p75 = por %p73, %p74
    %p76 = scmp.ne.s32.totalorder %s65, %s66
    %p77 = scmp.eq.s32.totalorder %s19, 0
    %p78 = por %p76, %p77
    %p79 = scmp.ne.s32.totalorder %s65, %s66
    %p80 = scmp.eq.s32.totalorder %s20, 1
    %p81 = por %p79, %p80
    %p83 = scmp.ne.s32.totalorder %s66, %s82
    %p84 = scmp.eq.s32.totalorder %s20, 0
    %p85 = por %p83, %p84
    %s86 = ssub.s32 %s21, %s33
    %p87 = scmp.eq.s32.totalorder %s86, 0
    %s89 = sadd.s32 %s88, 1
    %s90 = scalar_select %p87, %s88, %s89
    %p93 = pneg %p87
    %p94 = scmp.eq.s32.totalorder %s14, 1
    %p95 = por %p93, %p94
    %p96 = scmp.ne.s32.totalorder %s88, %s91
    %p97 = scmp.eq.s32.totalorder %s14, 0
    %p98 = por %p96, %p97
    %p99 = scmp.ne.s32.totalorder %s88, %s91
    %p100 = scmp.eq.s32.totalorder %s19, 1
    %p101 = por %p99, %p100
    %p102 = scmp.ne.s32.totalorder %s91, %s92
    %p103 = scmp.eq.s32.totalorder %s19, 0
    %p104 = por %p102, %p103
    %p105 = scmp.ne.s32.totalorder %s91, %s92
    %p106 = scmp.eq.s32.totalorder %s20, 1
    %p107 = por %p105, %p106
    %p109 = scmp.ne.s32.totalorder %s92, %s108
    %p110 = scmp.eq.s32.totalorder %s20, 0
    %p111 = por %p109, %p110
    %s113 = sadd.s32 %s112, 1
    %p116 = scmp.eq.s32.totalorder %s14, 1
    %p117 = scmp.ne.s32.totalorder %s112, %s114
    %p118 = scmp.eq.s32.totalorder %s14, 0
    %p119 = por %p117, %p118
    %p120 = scmp.ne.s32.totalorder %s112, %s114
    %p121 = scmp.eq.s32.totalorder %s19, 1
    %p122 = por %p120, %p121
    %p123 = scmp.ne.s32.totalorder %s114, %s115
    %p124 = scmp.eq.s32.totalorder %s19, 0
    %p125 = por %p123, %p124
    %p126 = scmp.ne.s32.totalorder %s114, %s115
    %p127 = scmp.eq.s32.totalorder %s20, 1
    %p128 = por %p126, %p127
    %p130 = scmp.ne.s32.totalorder %s115, %s129
    %p131 = scmp.eq.s32.totalorder %s20, 0
    %p132 = por %p130, %p131
    %s134 = sadd.s32 %s133, 1
    %p137 = scmp.eq.s32.totalorder %s14, 1
    %p138 = scmp.ne.s32.totalorder %s133, %s135
    %p139 = scmp.eq.s32.totalorder %s14, 0
    %p140 = por %p138, %p139
    %p141 = scmp.ne.s32.totalorder %s133, %s135
    %p142 = scmp.eq.s32.totalorder %s19, 1
    %p143 = por %p141, %p142
    %p144 = scmp.ne.s32.totalorder %s135, %s136
    %p145 = scmp.eq.s32.totalorder %s19, 0
    %p146 = por %p144, %p145
    %p147 = scmp.ne.s32.totalorder %s135, %s136
    %p148 = scmp.eq.s32.totalorder %s20, 1
    %p149 = por %p147, %p148
    %p151 = scmp.ne.s32.totalorder %s136, %s150
    %p152 = scmp.eq.s32.totalorder %s20, 0
    %p153 = por %p151, %p152
    %s154 = ssub.s32 %s22, %s29
    %p155 = scmp.eq.s32.totalorder %s154, 0
    %s157 = sadd.s32 %s156, 1
    %s158 = scalar_select %p155, %s156, %s157
    %p161 = pneg %p155
    %p162 = scmp.eq.s32.totalorder %s14, 1
    %p163 = por %p161, %p162
    %p164 = scmp.ne.s32.totalorder %s156, %s159
    %p165 = scmp.eq.s32.totalorder %s14, 0
    %p166 = por %p164, %p165
    %p167 = scmp.ne.s32.totalorder %s156, %s159
    %p168 = scmp.eq.s32.totalorder %s19, 1
    %p169 = por %p167, %p168
    %p170 = scmp.ne.s32.totalorder %s159, %s160
    %p171 = scmp.eq.s32.totalorder %s19, 0
    %p172 = por %p170, %p171
    %p173 = scmp.ne.s32.totalorder %s159, %s160
    %p174 = scmp.eq.s32.totalorder %s20, 1
    %p175 = por %p173, %p174
    %p177 = scmp.ne.s32.totalorder %s160, %s176
    %p178 = scmp.eq.s32.totalorder %s20, 0
    %p179 = por %p177, %p178
    %s180 = ssub.s32 %s22, %s29
    %p181 = scmp.eq.s32.totalorder %s180, 0
    %s183 = sadd.s32 %s182, 1
    %s184 = scalar_select %p181, %s182, %s183
    %p187 = pneg %p181
    %p188 = scmp.eq.s32.totalorder %s14, 1
    %p189 = por %p187, %p188
    %p190 = scmp.ne.s32.totalorder %s182, %s185
    %p191 = scmp.eq.s32.totalorder %s14, 0
    %p192 = por %p190, %p191
    %p193 = scmp.ne.s32.totalorder %s182, %s185
    %p194 = scmp.eq.s32.totalorder %s19, 1
    %p195 = por %p193, %p194
    %p196 = scmp.ne.s32.totalorder %s185, %s186
    %p197 = scmp.eq.s32.totalorder %s19, 0
    %p198 = por %p196, %p197
    %p199 = scmp.ne.s32.totalorder %s185, %s186
    %p200 = scmp.eq.s32.totalorder %s20, 1
    %p201 = por %p199, %p200
    %p203 = scmp.ne.s32.totalorder %s186, %s202
    %p204 = scmp.eq.s32.totalorder %s20, 0
    %p205 = por %p203, %p204
    %s207 = sadd.s32 %s206, 1
    %p210 = scmp.eq.s32.totalorder %s14, 1
    %p211 = scmp.ne.s32.totalorder %s206, %s208
    %p212 = scmp.eq.s32.totalorder %s14, 0
    %p213 = por %p211, %p212
    %p214 = scmp.ne.s32.totalorder %s206, %s208
    %p215 = scmp.eq.s32.totalorder %s19, 1
    %p216 = por %p214, %p215
    %p217 = scmp.ne.s32.totalorder %s208, %s209
    %p218 = scmp.eq.s32.totalorder %s19, 0
    %p219 = por %p217, %p218
    %p220 = scmp.ne.s32.totalorder %s208, %s209
    %p221 = scmp.eq.s32.totalorder %s20, 1
    %p222 = por %p220, %p221
    %p224 = scmp.ne.s32.totalorder %s209, %s223
    %p225 = scmp.eq.s32.totalorder %s20, 0
    %p226 = por %p224, %p225
    %s227 = ssub.s32 %s22, %s29
    %s228 = ssub.s32 %s21, %s33
    %s229 = sor.u32 %s227, %s228
    %p230 = scmp.eq.s32.totalorder %s229, 0
    %s232 = sadd.s32 %s231, 1
    %s233 = scalar_select %p230, %s231, %s232
    %p236 = pneg %p230
    %p237 = scmp.eq.s32.totalorder %s14, 1
    %p238 = por %p236, %p237
    %p239 = scmp.ne.s32.totalorder %s231, %s234
    %p240 = scmp.eq.s32.totalorder %s14, 0
    %p241 = por %p239, %p240
    %p242 = scmp.ne.s32.totalorder %s231, %s234
    %p243 = scmp.eq.s32.totalorder %s19, 1
    %p244 = por %p242, %p243
    %p245 = scmp.ne.s32.totalorder %s234, %s235
    %p246 = scmp.eq.s32.totalorder %s19, 0
    %p247 = por %p245, %p246
    %p248 = scmp.ne.s32.totalorder %s234, %s235
    %p249 = scmp.eq.s32.totalorder %s20, 1
    %p250 = por %p248, %p249
    %p252 = scmp.ne.s32.totalorder %s235, %s251
    %p253 = scmp.eq.s32.totalorder %s20, 0
    %p254 = por %p252, %p253
    %p255 = scmp.le.s32.totalorder 1, %s14
    %p256 = scmp.lt.s32.totalorder %s14, 3
    %p257 = pnand %p255, %p256
    %p258 = pneg %p257
    // Predicated region
    $region9: #{hstasnet_forward.6} parent=5 // pred_check
      _
    $region10: #{hstasnet_forward.6} parent=5 // pred_check_branch
      %260 = sbr.rel (%p257) target = $region12
    $region11: #{hstasnet_forward.6} parent=5 // pred_region
      %s261 = ssub.s32 %s14, 1
      // Predicated region
      $region13: #{hstasnet_forward.6} parent=11 // pred_check
        %p262 = pneg %p52
      $region14: #{hstasnet_forward.6} parent=11 // pred_check_branch
        %264 = sbr.rel (%p262) target = $region16
      $region15: #{hstasnet_forward.6} parent=11 // pred_region
        %s265 = smul.u32 2, %s23
        %p266 = scmp.lt.s32.totalorder %s265, 1
        %s267 = scalar_select %p266, %s265, 1
        %s268 = smul.addr %s267, 8
        %s269 = scalar_lea.vmem %s0, %s268
        %s270 = smul.u32 2, %s23
      $region16: #{hstasnet_forward.6} parent=11 // pred_fallthru
        _
      // Predicated region
      $region17: #{hstasnet_forward.6} parent=11 // pred_check
        %p271 = pneg %p78
      $region18: #{hstasnet_forward.6} parent=11 // pred_check_branch
        %273 = sbr.rel (%p271) target = $region20
      $region19: #{hstasnet_forward.6} parent=11 // pred_region
        %s274 = smul.u32 2, %s23
        %p275 = scmp.lt.s32.totalorder %s274, 1
        %s276 = scalar_select %p275, %s274, 1
        %s277 = smul.addr %s276, 8
        %s278 = scalar_lea.vmem %s1, %s277
        %s279 = smul.u32 2, %s23
      $region20: #{hstasnet_forward.6} parent=11 // pred_fallthru
        _
      // Predicated region
      $region21: #{hstasnet_forward.6} parent=11 // pred_check
        %p280 = pneg %p104
      $region22: #{hstasnet_forward.6} parent=11 // pred_check_branch
        %282 = sbr.rel (%p280) target = $region24
      $region23: #{hstasnet_forward.6} parent=11 // pred_region
        %s283 = smul.u32 2, %s23
        %p284 = scmp.lt.s32.totalorder %s283, 1
        %s285 = scalar_select %p284, %s283, 1
        %s286 = smul.addr %s285, 8
        %s287 = scalar_lea.vmem %s2, %s286
        %s288 = smul.u32 2, %s23
      $region24: #{hstasnet_forward.6} parent=11 // pred_fallthru
        _
      // Predicated region
      $region25: #{hstasnet_forward.6} parent=11 // pred_check
        %p289 = pneg %p125
      $region26: #{hstasnet_forward.6} parent=11 // pred_check_branch
        %291 = sbr.rel (%p289) target = $region28
      $region27: #{hstasnet_forward.6} parent=11 // pred_region
        _
      $region28: #{hstasnet_forward.6} parent=11 // pred_fallthru
        _
      // Predicated region
      $region29: #{hstasnet_forward.6} parent=11 // pred_check
        %p292 = pneg %p146
      $region30: #{hstasnet_forward.6} parent=11 // pred_check_branch
        %294 = sbr.rel (%p292) target = $region32
      $region31: #{hstasnet_forward.6} parent=11 // pred_region
        _
      $region32: #{hstasnet_forward.6} parent=11 // pred_fallthru
        _
      // Predicated region
      $region33: #{hstasnet_forward.6} parent=11 // pred_check
        %p295 = pneg %p219
      $region34: #{hstasnet_forward.6} parent=11 // pred_check_branch
        %297 = sbr.rel (%p295) target = $region36
      $region35: #{hstasnet_forward.6} parent=11 // pred_region
        _
      $region36: #{hstasnet_forward.6} parent=11 // pred_fallthru
        _
    $region12: #{hstasnet_forward.6} parent=5 // pred_fallthru
      _
    %p298 = scmp.lt.s32.totalorder %s14, 2
    // Predicated region
    $region37: #{hstasnet_forward.6} parent=5 // pred_check
      %p299 = pneg %p298
    $region38: #{hstasnet_forward.6} parent=5 // pred_check_branch
      %301 = sbr.rel (%p299) target = $region40
    $region39: #{hstasnet_forward.6} parent=5 // pred_region
      // Predicated region
      $region41: #{hstasnet_forward.6} parent=39 // pred_check
        %p302 = pneg %p166
      $region42: #{hstasnet_forward.6} parent=39 // pred_check_branch
        %304 = sbr.rel (%p302) target = $region44
      $region43: #{hstasnet_forward.6} parent=39 // pred_region
        %p305 = scmp.lt.s32.totalorder %s22, 1
        %s306 = scalar_select %p305, %s22, 1
        %s307 = smul.addr %s306, 4
        %s308 = smul.addr %s307, 8
        %s309 = scalar_lea.vmem %s5, %s308
      $region44: #{hstasnet_forward.6} parent=39 // pred_fallthru
        _
      // Predicated region
      $region45: #{hstasnet_forward.6} parent=39 // pred_check
        %p310 = pneg %p192
      $region46: #{hstasnet_forward.6} parent=39 // pred_check_branch
        %312 = sbr.rel (%p310) target = $region48
      $region47: #{hstasnet_forward.6} parent=39 // pred_region
        %p313 = scmp.lt.s32.totalorder %s22, 1
        %s314 = scalar_select %p313, %s22, 1
        %s315 = scalar_lea.vmem %s6, %s314
      $region48: #{hstasnet_forward.6} parent=39 // pred_fallthru
        _
    $region40: #{hstasnet_forward.6} parent=5 // pred_fallthru
      _
    %p316 = scmp.le.s32.totalorder 1, %s14
    %p317 = scmp.lt.s32.totalorder %s14, 3
    %p318 = pnand %p316, %p317
    %p319 = pneg %p318
    // Predicated region
    $region49: #{hstasnet_forward.6} parent=5 // pred_check
      _
    $region50: #{hstasnet_forward.6} parent=5 // pred_check_branch
      %321 = sbr.rel (%p318) target = $region52
    $region51: #{hstasnet_forward.6} parent=5 // pred_region
      %s322 = ssub.s32 %s14, 1
      %s323 = smul.u32 2, %s23
      %p324 = scmp.lt.s32.totalorder %s323, 1
      %s325 = scalar_select %p324, %s323, 1
      %s326 = smul.addr %s325, 8
      %s327 = scalar_lea.vmem %s0, %s326
      %p328 = pneg %p52
      %p329 = pneg %p49
      %s330 = smul.u32 2, %s23
      %p331 = scmp.lt.s32.totalorder %s330, 1
      %s332 = scalar_select %p331, %s330, 1
      %s333 = smul.addr %s332, 8
      %s334 = scalar_lea.vmem %s1, %s333
      %p335 = pneg %p78
      %p336 = pneg %p75
      %s337 = smul.u32 2, %s23
      %p338 = scmp.lt.s32.totalorder %s337, 1
      %s339 = scalar_select %p338, %s337, 1
      %s340 = smul.addr %s339, 8
      %s341 = scalar_lea.vmem %s2, %s340
      %p342 = pneg %p104
      %p343 = pneg %p101
      %p344 = pneg %p125
      %p345 = pneg %p122
      %p346 = pneg %p146
      %p347 = pneg %p143
      %p348 = scmp.lt.s32.totalorder %s24, 1
      %s349 = scalar_select %p348, %s24, 1
      %s350 = smul.addr %s349, 4
      %s351 = smul.addr %s350, 8
      %s352 = scalar_lea.vmem %s5, %s351
      %p353 = pneg %p172
      %p354 = pneg %p169
      %p355 = scmp.lt.s32.totalorder %s24, 1
      %s356 = scalar_select %p355, %s24, 1
      %s357 = scalar_lea.vmem %s6, %s356
      %p358 = pneg %p198
      %p359 = pneg %p195
      %p360 = pneg %p219
      %p361 = pneg %p216
      %p362 = pneg %p247
      %p363 = pneg %p244
      %s364 = smul.u32 2, %s23
      %p365 = scmp.lt.s32.totalorder %s24, 1
      %s366 = scalar_select %p365, %s24, 1
      %p367 = scmp.lt.s32.totalorder %s364, 1
      %s368 = scalar_select %p367, %s364, 1
      %s369 = smul.addr %s366, 2
      %s370 = sadd.s32 %s368, %s369
      %s371 = smul.addr %s370, 8
      %s372 = scalar_lea.vmem %s8, %s371
      %s373 = smul.u32 2, %s23
      %p374 = scmp.lt.s32.totalorder %s373, 1
      %s375 = scalar_select %p374, %s373, 1
      %s376 = smul.addr %s375, 8
      %s377 = scalar_lea.vmem %s0, %s376
      %s378 = smul.u32 2, %s23
      %s379 = smul.u32 2, %s23
      %p380 = scmp.lt.s32.totalorder %s379, 1
      %s381 = scalar_select %p380, %s379, 1
      %s382 = smul.addr %s381, 8
      %s383 = scalar_lea.vmem %s1, %s382
      %s384 = smul.u32 2, %s23
      %s385 = smul.u32 2, %s23
      %p386 = scmp.lt.s32.totalorder %s385, 1
      %s387 = scalar_select %p386, %s385, 1
      %s388 = smul.addr %s387, 8
      %s389 = scalar_lea.vmem %s2, %s388
      %s390 = smul.u32 2, %s23
      %p391 = scmp.lt.s32.totalorder %s24, 1
      %s392 = scalar_select %p391, %s24, 1
      %s393 = smul.addr %s392, 4
      %s394 = smul.addr %s393, 8
      %s395 = scalar_lea.vmem %s5, %s394
      %p396 = scmp.lt.s32.totalorder %s24, 1
      %s397 = scalar_select %p396, %s24, 1
      %s398 = scalar_lea.vmem %s6, %s397
      %s399 = smul.u32 2, %s23
      %p400 = scmp.lt.s32.totalorder %s24, 1
      %s401 = scalar_select %p400, %s24, 1
      %p402 = scmp.lt.s32.totalorder %s399, 1
      %s403 = scalar_select %p402, %s399, 1
      %s404 = smul.addr %s401, 2
      %s405 = sadd.s32 %s403, %s404
      %s406 = smul.addr %s405, 8
      %s407 = scalar_lea.vmem %s8, %s406
      %s408 = smul.u32 2, %s23
      %v409 = vld [vmem:[%s383] sm:$0xff]
      %v410 = vld [vmem:[%s383 + $0x8] sm:$0xff]
      %v411 = vld [vmem:[%s3] sm:$0xff]
      %v412 = vld [vmem:[%s3 + $0x8] sm:$0xff]
      %v413 = vld [vmem:[%s3 + $0x10] sm:$0xff]
      %v414 = vld [vmem:[%s3 + $0x18] sm:$0xff]
      %v415 = vld [vmem:[%s3 + $0x20] sm:$0xff]
      %v416 = vld [vmem:[%s3 + $0x28] sm:$0xff]
      %v417 = vld [vmem:[%s3 + $0x30] sm:$0xff]
      %v418 = vld [vmem:[%s3 + $0x38] sm:$0xff]
      %v419 = vld [vmem:[%s3 + $0x40] sm:$0xff]
      %v420 = vld [vmem:[%s3 + $0x48] sm:$0xff]
      %v421 = vld [vmem:[%s3 + $0x50] sm:$0xff]
      %v422 = vld [vmem:[%s3 + $0x58] sm:$0xff]
      %v423 = vld [vmem:[%s4] sm:$0x1]
      %v425 = vlaneseq
      %v426 = vshrl.u32 %v425, 7
      %v427 = vsub.s32 0, %v426
      %v428 = vrot.slane %v423, %v427
      %vm430 = vcmask 785408
      %v432 = vsel %vm430, %v409, 0
      %v435 = vsel %vm430, %v410, 0
      %437 = vmatprep.subr.mxu0 0.0
      %438 = vmatpush1.msra.mxu0 0.0
      %439 = vmatprep.subr.mxu0 0.0
      %440 = vmatpush1.msra.mxu0 0.0
      %441 = vmatprep.subr.mxu0 0.0
      %442 = vmatpush1.msra.mxu0 0.0
      %443 = vmatprep.subr.mxu0 0.0
      %444 = vmatpush1.msra.mxu0 0.0
      %445 = vmatprep.subr.mxu0 0.0
      %446 = vmatpush1.msra.mxu0 %v422
      %447 = vmatprep.subr.mxu0 0.0
      %448 = vmatpush1.msra.mxu0 %v421
      %449 = vmatprep.subr.mxu0 0.0
      %450 = vmatpush1.msra.mxu0 %v420
      %451 = vmatprep.subr.mxu0 0.0
      %452 = vmatpush1.msra.mxu0 %v419
      %453 = vmatprep.subr.mxu0 0.0
      %454 = vmatpush1.msra.mxu0 %v418
      %455 = vmatprep.subr.mxu0 0.0
      %456 = vmatpush1.msra.mxu0 %v417
      %457 = vmatprep.subr.mxu0 0.0
      %458 = vmatpush1.msra.mxu0 %v416
      %459 = vmatprep.subr.mxu0 0.0
      %460 = vmatpush1.msra.mxu0 %v415
      %461 = vmatprep.subr.mxu0 0.0
      %462 = vmatpush1.msra.mxu0 %v414
      %463 = vmatprep.subr.mxu0 0.0
      %464 = vmatpush1.msra.mxu0 %v413
      %465 = vmatprep.subr.mxu0 0.0
      %466 = vmatpush1.msra.mxu0 %v412
      %467 = vmatprep.subr.mxu0 0.0
      %468 = vmatpush1.msra.mxu0 %v411
      %469 = vmatprep.subr.mxu0 0.0
      %470 = vmatpush2.msra.mxu0 0.0
      %471 = vmatprep.subr.mxu0 0.0
      %472 = vmatpush2.msra.mxu0 0.0
      %473 = vmatprep.subr.mxu0 0.0
      %474 = vmatpush2.msra.mxu0 0.0
      %475 = vmatprep.subr.mxu0 0.0
      %476 = vmatpush2.msra.mxu0 0.0
      %477 = vmatprep.subr.mxu0 0.0
      %478 = vmatpush2.msra.mxu0 0.0
      %479 = vmatprep.subr.mxu0 0.0
      %480 = vmatpush2.msra.mxu0 0.0
      %481 = vmatprep.subr.mxu0 0.0
      %482 = vmatpush2.msra.mxu0 0.0
      %483 = vmatprep.subr.mxu0 0.0
      %484 = vmatpush2.msra.mxu0 0.0
      %485 = vmatprep.subr.mxu0 0.0
      %486 = vmatpush2.msra.mxu0 0.0
      %487 = vmatprep.subr.mxu0 0.0
      %488 = vmatpush2.msra.mxu0 0.0
      %489 = vmatprep.subr.mxu0 0.0
      %490 = vmatpush2.msra.mxu0 0.0
      %491 = vmatprep.subr.mxu0 0.0
      %492 = vmatpush2.msra.mxu0 0.0
      %493 = vmatprep.subr.mxu0 0.0
      %494 = vmatpush2.msra.mxu0 0.0
      %495 = vmatprep.subr.mxu0 0.0
      %496 = vmatpush2.msra.mxu0 0.0
      %497 = vmatprep.subr.mxu0 0.0
      %498 = vmatpush2.msra.mxu0 0.0
      %499 = vmatprep.subr.mxu0 0.0
      %500 = vmatpush2.msra.mxu0 0.0
      %501 = vmatprep.mubr.f32.mxu0 0.0
      %502 = vmatmul.mubr.f32.gmra.mxu0 %v432
      %v503 = vpop.f32.mrf.mxu0
      %v504 = vadd.f32 %v428, %v503
      %v505 = vpop.f32.mrf.mxu0
      %506 = vmatprep.mubr.f32.mxu0 0.0
      %507 = vmatmul.mubr.f32.gmra.mxu0 %v435
      %v508 = vpop.f32.mrf.mxu0
      %v509 = vadd.f32 %v428, %v508
      %v510 = vpop.f32.mrf.mxu0
      %511 = vdwg.mxu0
      %v512 = vld [vmem:[%s377] sm:$0xff]
      %v513 = vld [vmem:[%s377 + $0x8] sm:$0xff]
      %v514 = vadd.f32 %v512, %v504
      %v515 = vadd.f32 %v513, %v509
      %v516 = vld [vmem:[%s395] sm:$0xff]
      %v517 = vld [vmem:[%s395 + $0x8] sm:$0xff]
      %v518 = vld [vmem:[%s395 + $0x10] sm:$0xff]
      %v519 = vld [vmem:[%s395 + $0x18] sm:$0xff]
      %v520 = vld [vmem:[%s398] sm:$0x1]
      %v522 = vlaneseq
      %v523 = vshrl.u32 %v522, 7
      %v524 = vsub.s32 0, %v523
      %v525 = vrot.slane %v520, %v524
      %vm527 = vcmask 261120
      %v529 = vsel %vm527, %v514, 0
      %v532 = vsel %vm527, %v515, 0
      %534 = vmatprep.subr.mxu0 0.0
      %535 = vmatpush1.msra.mxu0 0.0
      %536 = vmatprep.subr.mxu0 0.0
      %537 = vmatpush1.msra.mxu0 0.0
      %538 = vmatprep.subr.mxu0 0.0
      %539 = vmatpush1.msra.mxu0 0.0
      %540 = vmatprep.subr.mxu0 0.0
      %541 = vmatpush1.msra.mxu0 0.0
      %542 = vmatprep.subr.mxu0 0.0
      %543 = vmatpush1.msra.mxu0 0.0
      %544 = vmatprep.subr.mxu0 0.0
      %545 = vmatpush1.msra.mxu0 0.0
      %546 = vmatprep.subr.mxu0 0.0
      %547 = vmatpush1.msra.mxu0 0.0
      %548 = vmatprep.subr.mxu0 0.0
      %549 = vmatpush1.msra.mxu0 0.0
      %550 = vmatprep.subr.mxu0 0.0
      %551 = vmatpush1.msra.mxu0 0.0
      %552 = vmatprep.subr.mxu0 0.0
      %553 = vmatpush1.msra.mxu0 0.0
      %554 = vmatprep.subr.mxu0 0.0
      %555 = vmatpush1.msra.mxu0 0.0
      %556 = vmatprep.subr.mxu0 0.0
      %557 = vmatpush1.msra.mxu0 0.0
      %558 = vmatprep.subr.mxu0 0.0
      %559 = vmatpush1.msra.mxu0 %v519
      %560 = vmatprep.subr.mxu0 0.0
      %561 = vmatpush1.msra.mxu0 %v518
      %562 = vmatprep.subr.mxu0 0.0
      %563 = vmatpush1.msra.mxu0 %v517
      %564 = vmatprep.subr.mxu0 0.0
      %565 = vmatpush1.msra.mxu0 %v516
      %566 = vmatprep.subr.mxu0 0.0
      %567 = vmatpush2.msra.mxu0 0.0
      %568 = vmatprep.subr.mxu0 0.0
      %569 = vmatpush2.msra.mxu0 0.0
      %570 = vmatprep.subr.mxu0 0.0
      %571 = vmatpush2.msra.mxu0 0.0
      %572 = vmatprep.subr.mxu0 0.0
      %573 = vmatpush2.msra.mxu0 0.0
      %574 = vmatprep.subr.mxu0 0.0
      %575 = vmatpush2.msra.mxu0 0.0
      %576 = vmatprep.subr.mxu0 0.0
      %577 = vmatpush2.msra.mxu0 0.0
      %578 = vmatprep.subr.mxu0 0.0
      %579 = vmatpush2.msra.mxu0 0.0
      %580 = vmatprep.subr.mxu0 0.0
      %581 = vmatpush2.msra.mxu0 0.0
      %582 = vmatprep.subr.mxu0 0.0
      %583 = vmatpush2.msra.mxu0 0.0
      %584 = vmatprep.subr.mxu0 0.0
      %585 = vmatpush2.msra.mxu0 0.0
      %586 = vmatprep.subr.mxu0 0.0
      %587 = vmatpush2.msra.mxu0 0.0
      %588 = vmatprep.subr.mxu0 0.0
      %589 = vmatpush2.msra.mxu0 0.0
      %590 = vmatprep.subr.mxu0 0.0
      %591 = vmatpush2.msra.mxu0 0.0
      %592 = vmatprep.subr.mxu0 0.0
      %593 = vmatpush2.msra.mxu0 0.0
      %594 = vmatprep.subr.mxu0 0.0
      %595 = vmatpush2.msra.mxu0 0.0
      %596 = vmatprep.subr.mxu0 0.0
      %597 = vmatpush2.msra.mxu0 0.0
      %598 = vmatprep.mubr.f32.mxu0 0.0
      %599 = vmatmul.mubr.f32.gmra.mxu0 %v529
      %v600 = vpop.f32.mrf.mxu0
      %v601 = vadd.f32 %v525, %v600
      %v602 = vpop.f32.mrf.mxu0
      %603 = vmatprep.mubr.f32.mxu0 0.0
      %604 = vmatmul.mubr.f32.gmra.mxu0 %v532
      %v605 = vpop.f32.mrf.mxu0
      %v606 = vadd.f32 %v525, %v605
      %v607 = vpop.f32.mrf.mxu0
      %608 = vdwg.mxu0
      %v609 = vld [vmem:[%s389] sm:$0xff]
      %v610 = vld [vmem:[%s389 + $0x8] sm:$0xff]
      %v611 = vmul.f32 %v601, %v609
      %v612 = vmul.f32 %v606, %v610
      %v613 = vld [vmem:[%s7] sm:$0xff]
      %v614 = vld [vmem:[%s7 + $0x8] sm:$0xff]
      %v615 = vld [vmem:[%s7 + $0x10] sm:$0xff]
      %v616 = vld [vmem:[%s7 + $0x18] sm:$0xff]
      %v617 = vld [vmem:[%s7 + $0x20] sm:$0xff]
      %v618 = vld [vmem:[%s7 + $0x28] sm:$0xff]
      %v619 = vld [vmem:[%s7 + $0x30] sm:$0xff]
      %v620 = vld [vmem:[%s7 + $0x38] sm:$0xff]
      %v621 = vld [vmem:[%s7 + $0x40] sm:$0xff]
      %v622 = vld [vmem:[%s7 + $0x48] sm:$0xff]
      %v623 = vld [vmem:[%s7 + $0x50] sm:$0xff]
      %v624 = vld [vmem:[%s7 + $0x58] sm:$0xff]
      %v626 = vsel %vm430, %v611, 0
      %v629 = vsel %vm430, %v612, 0
      %631 = vmatprep.subr.mxu0 0.0
      %632 = vmatpush1.msra.mxu0 0.0
      %633 = vmatprep.subr.mxu0 0.0
      %634 = vmatpush1.msra.mxu0 0.0
      %635 = vmatprep.subr.mxu0 0.0
      %636 = vmatpush1.msra.mxu0 0.0
      %637 = vmatprep.subr.mxu0 0.0
      %638 = vmatpush1.msra.mxu0 0.0
      %639 = vmatprep.subr.mxu0 0.0
      %640 = vmatpush1.msra.mxu0 %v624
      %641 = vmatprep.subr.mxu0 0.0
      %642 = vmatpush1.msra.mxu0 %v623
      %643 = vmatprep.subr.mxu0 0.0
      %644 = vmatpush1.msra.mxu0 %v622
      %645 = vmatprep.subr.mxu0 0.0
      %646 = vmatpush1.msra.mxu0 %v621
      %647 = vmatprep.subr.mxu0 0.0
      %648 = vmatpush1.msra.mxu0 %v620
      %649 = vmatprep.subr.mxu0 0.0
      %650 = vmatpush1.msra.mxu0 %v619
      %651 = vmatprep.subr.mxu0 0.0
      %652 = vmatpush1.msra.mxu0 %v618
      %653 = vmatprep.subr.mxu0 0.0
      %654 = vmatpush1.msra.mxu0 %v617
      %655 = vmatprep.subr.mxu0 0.0
      %656 = vmatpush1.msra.mxu0 %v616
      %657 = vmatprep.subr.mxu0 0.0
      %658 = vmatpush1.msra.mxu0 %v615
      %659 = vmatprep.subr.mxu0 0.0
      %660 = vmatpush1.msra.mxu0 %v614
      %661 = vmatprep.subr.mxu0 0.0
      %662 = vmatpush1.msra.mxu0 %v613
      %663 = vmatprep.subr.mxu0 0.0
      %664 = vmatpush2.msra.mxu0 0.0
      %665 = vmatprep.subr.mxu0 0.0
      %666 = vmatpush2.msra.mxu0 0.0
      %667 = vmatprep.subr.mxu0 0.0
      %668 = vmatpush2.msra.mxu0 0.0
      %669 = vmatprep.subr.mxu0 0.0
      %670 = vmatpush2.msra.mxu0 0.0
      %671 = vmatprep.subr.mxu0 0.0
      %672 = vmatpush2.msra.mxu0 0.0
      %673 = vmatprep.subr.mxu0 0.0
      %674 = vmatpush2.msra.mxu0 0.0
      %675 = vmatprep.subr.mxu0 0.0
      %676 = vmatpush2.msra.mxu0 0.0
      %677 = vmatprep.subr.mxu0 0.0
      %678 = vmatpush2.msra.mxu0 0.0
      %679 = vmatprep.subr.mxu0 0.0
      %680 = vmatpush2.msra.mxu0 0.0
      %681 = vmatprep.subr.mxu0 0.0
      %682 = vmatpush2.msra.mxu0 0.0
      %683 = vmatprep.subr.mxu0 0.0
      %684 = vmatpush2.msra.mxu0 0.0
      %685 = vmatprep.subr.mxu0 0.0
      %686 = vmatpush2.msra.mxu0 0.0
      %687 = vmatprep.subr.mxu0 0.0
      %688 = vmatpush2.msra.mxu0 0.0
      %689 = vmatprep.subr.mxu0 0.0
      %690 = vmatpush2.msra.mxu0 0.0
      %691 = vmatprep.subr.mxu0 0.0
      %692 = vmatpush2.msra.mxu0 0.0
      %693 = vmatprep.subr.mxu0 0.0
      %694 = vmatpush2.msra.mxu0 0.0
      %695 = vmatprep.mubr.f32.mxu0 0.0
      %696 = vmatmul.mubr.f32.gmra.mxu0 %v626
      %v697 = vpop.f32.mrf.mxu0
      %v698 = vadd.f32 0.0, %v697
      %v699 = vpop.f32.mrf.mxu0
      %700 = vmatprep.mubr.f32.mxu0 0.0
      %701 = vmatmul.mubr.f32.gmra.mxu0 %v629
      %v702 = vpop.f32.mrf.mxu0
      %v703 = vadd.f32 0.0, %v702
      %v704 = vpop.f32.mrf.mxu0
      %705 = vdwg.mxu0
      %706 = vst [vmem:[%s407] sm:$0xff] %v698
      %707 = vst [vmem:[%s407 + $0x8] sm:$0xff] %v703
      %s708 = smul.u32 2, %s23
      %p709 = scmp.lt.s32.totalorder %s24, 1
      %s710 = scalar_select %p709, %s24, 1
      %p711 = scmp.lt.s32.totalorder %s708, 1
      %s712 = scalar_select %p711, %s708, 1
      %s713 = smul.addr %s710, 2
      %s714 = sadd.s32 %s712, %s713
      %s715 = smul.addr %s714, 8
      %s716 = scalar_lea.vmem %s8, %s715
      // Predicated region
      $region53: #{hstasnet_forward.6} parent=51 // pred_check
        %p717 = pneg %p244
      $region54: #{hstasnet_forward.6} parent=51 // pred_check_branch
        %719 = sbr.rel (%p717) target = $region56
      $region55: #{hstasnet_forward.6} parent=51 // pred_region
        %s720 = smul.u32 2, %s23
      $region56: #{hstasnet_forward.6} parent=51 // pred_fallthru
        _
    $region52: #{hstasnet_forward.6} parent=5 // pred_fallthru
      _
    %p721 = scmp.le.s32.totalorder 2, %s14
    // Predicated region
    $region57: #{hstasnet_forward.6} parent=5 // pred_check
      %p722 = pneg %p721
    $region58: #{hstasnet_forward.6} parent=5 // pred_check_branch
      %724 = sbr.rel (%p722) target = $region60
    $region59: #{hstasnet_forward.6} parent=5 // pred_region
      %s725 = ssub.s32 %s14, 2
      // Predicated region
      $region61: #{hstasnet_forward.6} parent=59 // pred_check
        %p726 = pneg %p250
      $region62: #{hstasnet_forward.6} parent=59 // pred_check_branch
        %728 = sbr.rel (%p726) target = $region64
      $region63: #{hstasnet_forward.6} parent=59 // pred_region
        %s729 = smul.u32 2, %s25
        %p730 = scmp.lt.s32.totalorder %s26, 1
        %s731 = scalar_select %p730, %s26, 1
        %p732 = scmp.lt.s32.totalorder %s729, 1
        %s733 = scalar_select %p732, %s729, 1
        %s734 = smul.addr %s731, 2
        %s735 = sadd.s32 %s733, %s734
        %s736 = smul.addr %s735, 8
        %s737 = scalar_lea.vmem %s8, %s736
      $region64: #{hstasnet_forward.6} parent=59 // pred_fallthru
        _
    $region60: #{hstasnet_forward.6} parent=5 // pred_fallthru
      _
  $region6: #{hstasnet_forward.6} parent=0 // loop_footer
    %s18 = sadd.s32 1, %s14
  $region7: #{hstasnet_forward.6} parent=0 // loop_footer_branch
    %13 = sbr.rel target = $region3
  $region8: #{hstasnet_forward.6} parent=0 // loop_exit
    _

// kernel: hstasnet_forward.4
$region0: #{hstasnet_forward.4}
  #allocation0 [shape = 'u32[]', space=smem, size = 0x4, offset = 0x4, fixed_abs, tag = 'smem constant byte address 0x4 - core index']
  #allocation1 [shape = 'u32[144,128]{1,0:T(1,128)}', space=vmem, size = 0x12000, scoped, tag = 'internal scratch']
  %s0 = inlined_call_operand.vmem [shape: f32[32,64], index: 0, kind: input, shape index: {}]
  %s1 = inlined_call_operand.vmem [shape: f32[1,64], index: 1, kind: input, shape index: {}]
  %s2 = inlined_call_operand.vmem [shape: f32[64,48], index: 2, kind: input, shape index: {}]
  %s3 = inlined_call_operand.vmem [shape: f32[64,48], index: 3, kind: input, shape index: {}]
  %s4 = inlined_call_operand.vmem [shape: f32[64,33], index: 4, kind: input, shape index: {}]
  %s5 = inlined_call_operand.vmem [shape: f32[64,33], index: 5, kind: input, shape index: {}]
  %s6 = inlined_call_operand.vmem [shape: f32[32,48], index: 6, kind: output, shape index: {0}]
  %s7 = inlined_call_operand.vmem [shape: f32[32,48], index: 7, kind: output, shape index: {1}]
  %s8 = inlined_call_operand.vmem [shape: f32[32,33], index: 8, kind: output, shape index: {2}]
  %s9 = inlined_call_operand.vmem [shape: f32[32,33], index: 9, kind: output, shape index: {3}]
  %s10 = inlined_call_operand.vmem [shape: f32[32,33], index: 10, kind: output, shape index: {4}]
  %11 = xla_tuple %s6, %s7, %s8, %s9, %s10
  %s12 = sld [smem:[#allocation0]]
  $region66: #{hstasnet_forward.4} parent=0
    _
  %s14 = ssub.s32 1, %s12
  %s15 = scalar_select 0, %s14, %s12
  // Predicated region
  $region2: #{hstasnet_forward.4} parent=0 // pred_check
    _
  $region3: #{hstasnet_forward.4} parent=0 // pred_check_branch
    %17 = sbr.rel (0) target = $region5
  $region4: #{hstasnet_forward.4} parent=0 // pred_region
    _
  $region5: #{hstasnet_forward.4} parent=0 // pred_fallthru
    _
  // Predicated region
  $region6: #{hstasnet_forward.4} parent=0 // pred_check
    _
  $region7: #{hstasnet_forward.4} parent=0 // pred_check_branch
    %19 = sbr.rel (0) target = $region9
  $region8: #{hstasnet_forward.4} parent=0 // pred_region
    _
  $region9: #{hstasnet_forward.4} parent=0 // pred_fallthru
    _
  // Predicated region
  $region10: #{hstasnet_forward.4} parent=0 // pred_check
    _
  $region11: #{hstasnet_forward.4} parent=0 // pred_check_branch
    %21 = sbr.rel (0) target = $region13
  $region12: #{hstasnet_forward.4} parent=0 // pred_region
    _
  $region13: #{hstasnet_forward.4} parent=0 // pred_fallthru
    _
  // Predicated region
  $region14: #{hstasnet_forward.4} parent=0 // pred_check
    _
  $region15: #{hstasnet_forward.4} parent=0 // pred_check_branch
    %23 = sbr.rel (0) target = $region17
  $region16: #{hstasnet_forward.4} parent=0 // pred_region
    _
  $region17: #{hstasnet_forward.4} parent=0 // pred_fallthru
    _
  // Predicated region
  $region18: #{hstasnet_forward.4} parent=0 // pred_check
    _
  $region19: #{hstasnet_forward.4} parent=0 // pred_check_branch
    %25 = sbr.rel (0) target = $region21
  $region20: #{hstasnet_forward.4} parent=0 // pred_region
    _
  $region21: #{hstasnet_forward.4} parent=0 // pred_fallthru
    _
  // Predicated region
  $region22: #{hstasnet_forward.4} parent=0 // pred_check
    _
  $region23: #{hstasnet_forward.4} parent=0 // pred_check_branch
    %27 = sbr.rel (0) target = $region25
  $region24: #{hstasnet_forward.4} parent=0 // pred_region
    _
  $region25: #{hstasnet_forward.4} parent=0 // pred_fallthru
    _
  %v28 = vld [vmem:[%s0] sm:$0xff]
  %v29 = vld [vmem:[%s0 + $0x8] sm:$0xff]
  %v30 = vld [vmem:[%s0 + $0x10] sm:$0xff]
  %v31 = vld [vmem:[%s0 + $0x18] sm:$0xff]
  %v32 = vmul.f32 %v28, %v28
  %v33 = vmul.f32 %v29, %v29
  %v34 = vmul.f32 %v30, %v30
  %v35 = vmul.f32 %v31, %v31
  %vm36 = vcmask 523264
  %v37 = vsel %vm36, %v32, 0.0
  %38 = vadd.xlane.f32.xlu0 %v37
  %v39 = vpop.xlane.xlu0 %38
  %v40 = vsel %vm36, %v33, 0.0
  %41 = vadd.xlane.f32.xlu0 %v40
  %v42 = vpop.xlane.xlu0 %41
  %v43 = vsel %vm36, %v34, 0.0
  %44 = vadd.xlane.f32.xlu0 %v43
  %v45 = vpop.xlane.xlu0 %44
  %v46 = vsel %vm36, %v35, 0.0
  %47 = vadd.xlane.f32.xlu0 %v46
  %v48 = vpop.xlane.xlu0 %47
  %v49 = vrsqrt.pop %v39
  %v50 = vmul.f32 %v39, %v49
  %vm51 = vcmp.eq.f32.partialorder %v39, inf
  %v52 = vsel %vm51, %v39, %v50
  %vm53 = vcmp.eq.f32.partialorder %v39, 0.0
  %v54 = vand.u32 %v39, 2147483648
  %v55 = vsel %vm53, %v54, %v52
  %v56 = vrsqrt.pop %v42
  %v57 = vmul.f32 %v42, %v56
  %vm58 = vcmp.eq.f32.partialorder %v42, inf
  %v59 = vsel %vm58, %v42, %v57
  %vm60 = vcmp.eq.f32.partialorder %v42, 0.0
  %v61 = vand.u32 %v42, 2147483648
  %v62 = vsel %vm60, %v61, %v59
  %v63 = vrsqrt.pop %v45
  %v64 = vmul.f32 %v45, %v63
  %vm65 = vcmp.eq.f32.partialorder %v45, inf
  %v66 = vsel %vm65, %v45, %v64
  %vm67 = vcmp.eq.f32.partialorder %v45, 0.0
  %v68 = vand.u32 %v45, 2147483648
  %v69 = vsel %vm67, %v68, %v66
  %v70 = vrsqrt.pop %v48
  %v71 = vmul.f32 %v48, %v70
  %vm72 = vcmp.eq.f32.partialorder %v48, inf
  %v73 = vsel %vm72, %v48, %v71
  %vm74 = vcmp.eq.f32.partialorder %v48, 0.0
  %v75 = vand.u32 %v48, 2147483648
  %v76 = vsel %vm74, %v75, %v73
  %v77 = vadd.f32 %v55, 1e-08
  %v78 = vadd.f32 %v62, 1e-08
  %v79 = vadd.f32 %v69, 1e-08
  %v80 = vadd.f32 %v76, 1e-08
  %v81 = vrcp.pop %v77
  %v82 = vmul.f32 %v28, %v81
  %v83 = vrcp.pop %v78
  %v84 = vmul.f32 %v29, %v83
  %v85 = vrcp.pop %v79
  %v86 = vmul.f32 %v30, %v85
  %v87 = vrcp.pop %v80
  %v88 = vmul.f32 %v31, %v87
  %v89 = vld [vmem:[%s2] sm:$0xff]
  %v90 = vld [vmem:[%s2 + $0x8] sm:$0xff]
  %v91 = vld [vmem:[%s2 + $0x10] sm:$0xff]
  %v92 = vld [vmem:[%s2 + $0x18] sm:$0xff]
  %v93 = vld [vmem:[%s2 + $0x20] sm:$0xff]
  %v94 = vld [vmem:[%s2 + $0x28] sm:$0xff]
  %v95 = vld [vmem:[%s2 + $0x30] sm:$0xff]
  %v96 = vld [vmem:[%s2 + $0x38] sm:$0xff]
  %v98 = vsel %vm36, %v82, 0
  %v101 = vsel %vm36, %v84, 0
  %v104 = vsel %vm36, %v86, 0
  %v107 = vsel %vm36, %v88, 0
  %109 = vmatprep.subr.mxu0 0.0
  %110 = vmatpush1.msra.mxu0 0.0
  %111 = vmatprep.subr.mxu0 0.0
  %112 = vmatpush1.msra.mxu0 0.0
  %113 = vmatprep.subr.mxu0 0.0
  %114 = vmatpush1.msra.mxu0 0.0
  %115 = vmatprep.subr.mxu0 0.0
  %116 = vmatpush1.msra.mxu0 0.0
  %117 = vmatprep.subr.mxu0 0.0
  %118 = vmatpush1.msra.mxu0 0.0
  %119 = vmatprep.subr.mxu0 0.0
  %120 = vmatpush1.msra.mxu0 0.0
  %121 = vmatprep.subr.mxu0 0.0
  %122 = vmatpush1.msra.mxu0 0.0
  %123 = vmatprep.subr.mxu0 0.0
  %124 = vmatpush1.msra.mxu0 0.0
  %125 = vmatprep.subr.mxu0 0.0
  %126 = vmatpush1.msra.mxu0 %v96
  %127 = vmatprep.subr.mxu0 0.0
  %128 = vmatpush1.msra.mxu0 %v95
  %129 = vmatprep.subr.mxu0 0.0
  %130 = vmatpush1.msra.mxu0 %v94
  %131 = vmatprep.subr.mxu0 0.0
  %132 = vmatpush1.msra.mxu0 %v93
  %133 = vmatprep.subr.mxu0 0.0
  %134 = vmatpush1.msra.mxu0 %v92
  %135 = vmatprep.subr.mxu0 0.0
  %136 = vmatpush1.msra.mxu0 %v91
  %137 = vmatprep.subr.mxu0 0.0
  %138 = vmatpush1.msra.mxu0 %v90
  %139 = vmatprep.subr.mxu0 0.0
  %140 = vmatpush1.msra.mxu0 %v89
  %141 = vmatprep.subr.mxu0 0.0
  %142 = vmatpush2.msra.mxu0 0.0
  %143 = vmatprep.subr.mxu0 0.0
  %144 = vmatpush2.msra.mxu0 0.0
  %145 = vmatprep.subr.mxu0 0.0
  %146 = vmatpush2.msra.mxu0 0.0
  %147 = vmatprep.subr.mxu0 0.0
  %148 = vmatpush2.msra.mxu0 0.0
  %149 = vmatprep.subr.mxu0 0.0
  %150 = vmatpush2.msra.mxu0 0.0
  %151 = vmatprep.subr.mxu0 0.0
  %152 = vmatpush2.msra.mxu0 0.0
  %153 = vmatprep.subr.mxu0 0.0
  %154 = vmatpush2.msra.mxu0 0.0
  %155 = vmatprep.subr.mxu0 0.0
  %156 = vmatpush2.msra.mxu0 0.0
  %157 = vmatprep.subr.mxu0 0.0
  %158 = vmatpush2.msra.mxu0 0.0
  %159 = vmatprep.subr.mxu0 0.0
  %160 = vmatpush2.msra.mxu0 0.0
  %161 = vmatprep.subr.mxu0 0.0
  %162 = vmatpush2.msra.mxu0 0.0
  %163 = vmatprep.subr.mxu0 0.0
  %164 = vmatpush2.msra.mxu0 0.0
  %165 = vmatprep.subr.mxu0 0.0
  %166 = vmatpush2.msra.mxu0 0.0
  %167 = vmatprep.subr.mxu0 0.0
  %168 = vmatpush2.msra.mxu0 0.0
  %169 = vmatprep.subr.mxu0 0.0
  %170 = vmatpush2.msra.mxu0 0.0
  %171 = vmatprep.subr.mxu0 0.0
  %172 = vmatpush2.msra.mxu0 0.0
  %173 = vmatprep.mubr.f32.mxu0 0.0
  %174 = vmatmul.mubr.f32.gmra.mxu0 %v98
  %v175 = vpop.f32.mrf.mxu0
  %v176 = vadd.f32 0.0, %v175
  %v177 = vpop.f32.mrf.mxu0
  %178 = vmatprep.mubr.f32.mxu0 0.0
  %179 = vmatmul.mubr.f32.gmra.mxu0 %v101
  %v180 = vpop.f32.mrf.mxu0
  %v181 = vadd.f32 0.0, %v180
  %v182 = vpop.f32.mrf.mxu0
  %183 = vmatprep.mubr.f32.mxu0 0.0
  %184 = vmatmul.mubr.f32.gmra.mxu0 %v104
  %v185 = vpop.f32.mrf.mxu0
  %v186 = vadd.f32 0.0, %v185
  %v187 = vpop.f32.mrf.mxu0
  %188 = vmatprep.mubr.f32.mxu0 0.0
  %189 = vmatmul.mubr.f32.gmra.mxu0 %v107
  %v190 = vpop.f32.mrf.mxu0
  %v191 = vadd.f32 0.0, %v190
  %v192 = vpop.f32.mrf.mxu0
  %193 = vdwg.mxu0
  %v194 = vld [vmem:[%s3] sm:$0xff]
  %v195 = vld [vmem:[%s3 + $0x8] sm:$0xff]
  %v196 = vld [vmem:[%s3 + $0x10] sm:$0xff]
  %v197 = vld [vmem:[%s3 + $0x18] sm:$0xff]
  %v198 = vld [vmem:[%s3 + $0x20] sm:$0xff]
  %v199 = vld [vmem:[%s3 + $0x28] sm:$0xff]
  %v200 = vld [vmem:[%s3 + $0x30] sm:$0xff]
  %v201 = vld [vmem:[%s3 + $0x38] sm:$0xff]
  %202 = vmatprep.subr.mxu0 0.0
  %203 = vmatpush1.msra.mxu0 0.0
  %204 = vmatprep.subr.mxu0 0.0
  %205 = vmatpush1.msra.mxu0 0.0
  %206 = vmatprep.subr.mxu0 0.0
  %207 = vmatpush1.msra.mxu0 0.0
  %208 = vmatprep.subr.mxu0 0.0
  %209 = vmatpush1.msra.mxu0 0.0
  %210 = vmatprep.subr.mxu0 0.0
  %211 = vmatpush1.msra.mxu0 0.0
  %212 = vmatprep.subr.mxu0 0.0
  %213 = vmatpush1.msra.mxu0 0.0
  %214 = vmatprep.subr.mxu0 0.0
  %215 = vmatpush1.msra.mxu0 0.0
  %216 = vmatprep.subr.mxu0 0.0
  %217 = vmatpush1.msra.mxu0 0.0
  %218 = vmatprep.subr.mxu0 0.0
  %219 = vmatpush1.msra.mxu0 %v201
  %220 = vmatprep.subr.mxu0 0.0
  %221 = vmatpush1.msra.mxu0 %v200
  %222 = vmatprep.subr.mxu0 0.0
  %223 = vmatpush1.msra.mxu0 %v199
  %224 = vmatprep.subr.mxu0 0.0
  %225 = vmatpush1.msra.mxu0 %v198
  %226 = vmatprep.subr.mxu0 0.0
  %227 = vmatpush1.msra.mxu0 %v197
  %228 = vmatprep.subr.mxu0 0.0
  %229 = vmatpush1.msra.mxu0 %v196
  %230 = vmatprep.subr.mxu0 0.0
  %231 = vmatpush1.msra.mxu0 %v195
  %232 = vmatprep.subr.mxu0 0.0
  %233 = vmatpush1.msra.mxu0 %v194
  %234 = vmatprep.subr.mxu0 0.0
  %235 = vmatpush2.msra.mxu0 0.0
  %236 = vmatprep.subr.mxu0 0.0
  %237 = vmatpush2.msra.mxu0 0.0
  %238 = vmatprep.subr.mxu0 0.0
  %239 = vmatpush2.msra.mxu0 0.0
  %240 = vmatprep.subr.mxu0 0.0
  %241 = vmatpush2.msra.mxu0 0.0
  %242 = vmatprep.subr.mxu0 0.0
  %243 = vmatpush2.msra.mxu0 0.0
  %244 = vmatprep.subr.mxu0 0.0
  %245 = vmatpush2.msra.mxu0 0.0
  %246 = vmatprep.subr.mxu0 0.0
  %247 = vmatpush2.msra.mxu0 0.0
  %248 = vmatprep.subr.mxu0 0.0
  %249 = vmatpush2.msra.mxu0 0.0
  %250 = vmatprep.subr.mxu0 0.0
  %251 = vmatpush2.msra.mxu0 0.0
  %252 = vmatprep.subr.mxu0 0.0
  %253 = vmatpush2.msra.mxu0 0.0
  %254 = vmatprep.subr.mxu0 0.0
  %255 = vmatpush2.msra.mxu0 0.0
  %256 = vmatprep.subr.mxu0 0.0
  %257 = vmatpush2.msra.mxu0 0.0
  %258 = vmatprep.subr.mxu0 0.0
  %259 = vmatpush2.msra.mxu0 0.0
  %260 = vmatprep.subr.mxu0 0.0
  %261 = vmatpush2.msra.mxu0 0.0
  %262 = vmatprep.subr.mxu0 0.0
  %263 = vmatpush2.msra.mxu0 0.0
  %264 = vmatprep.subr.mxu0 0.0
  %265 = vmatpush2.msra.mxu0 0.0
  %266 = vmatprep.mubr.f32.mxu0 0.0
  %267 = vmatmul.mubr.f32.gmra.mxu0 %v98
  %v268 = vpop.f32.mrf.mxu0
  %v269 = vadd.f32 0.0, %v268
  %v270 = vpop.f32.mrf.mxu0
  %271 = vmatprep.mubr.f32.mxu0 0.0
  %272 = vmatmul.mubr.f32.gmra.mxu0 %v101
  %v273 = vpop.f32.mrf.mxu0
  %v274 = vadd.f32 0.0, %v273
  %v275 = vpop.f32.mrf.mxu0
  %276 = vmatprep.mubr.f32.mxu0 0.0
  %277 = vmatmul.mubr.f32.gmra.mxu0 %v104
  %v278 = vpop.f32.mrf.mxu0
  %v279 = vadd.f32 0.0, %v278
  %v280 = vpop.f32.mrf.mxu0
  %281 = vmatprep.mubr.f32.mxu0 0.0
  %282 = vmatmul.mubr.f32.gmra.mxu0 %v107
  %v283 = vpop.f32.mrf.mxu0
  %v284 = vadd.f32 0.0, %v283
  %v285 = vpop.f32.mrf.mxu0
  %286 = vdwg.mxu0
  %v287 = vmax.f32 %v176, 0.0
  %v288 = vmax.f32 %v181, 0.0
  %v289 = vmax.f32 %v186, 0.0
  %v290 = vmax.f32 %v191, 0.0
  %v291 = vxor.u32 %v269, 2147483648
  %v292 = vxor.u32 %v274, 2147483648
  %v293 = vxor.u32 %v279, 2147483648
  %v294 = vxor.u32 %v284, 2147483648
  %v295 = vmul.f32 %v291, 1.442695
  %v296 = vpow.pop %v295
  %v297 = vmul.f32 %v292, 1.442695
  %v298 = vpow.pop %v297
  %v299 = vmul.f32 %v293, 1.442695
  %v300 = vpow.pop %v299
  %v301 = vmul.f32 %v294, 1.442695
  %v302 = vpow.pop %v301
  %v303 = vadd.f32 %v296, 1.0
  %v304 = vadd.f32 %v298, 1.0
  %v305 = vadd.f32 %v300, 1.0
  %v306 = vadd.f32 %v302, 1.0
  %v307 = vrcp.pop %v303
  %v308 = vmul.f32 1.0, %v307
  %v309 = vrcp.pop %v304
  %v310 = vmul.f32 1.0, %v309
  %v311 = vrcp.pop %v305
  %v312 = vmul.f32 1.0, %v311
  %v313 = vrcp.pop %v306
  %v314 = vmul.f32 1.0, %v313
  %v315 = vmul.f32 %v287, %v308
  %v316 = vmul.f32 %v288, %v310
  %v317 = vmul.f32 %v289, %v312
  %v318 = vmul.f32 %v290, %v314
  %vm319 = vcmask 392192
  %320 = vst.msk [vmem:[%s6] sm:$0xff] %vm319, %v315
  %321 = vst.msk [vmem:[%s6 + $0x8] sm:$0xff] %vm319, %v316
  %322 = vst.msk [vmem:[%s6 + $0x10] sm:$0xff] %vm319, %v317
  %323 = vst.msk [vmem:[%s6 + $0x18] sm:$0xff] %vm319, %v318
  %v324 = vmul.f32 %v315, %v77
  %v325 = vmul.f32 %v316, %v78
  %v326 = vmul.f32 %v317, %v79
  %v327 = vmul.f32 %v318, %v80
  %328 = vst.msk [vmem:[%s7] sm:$0xff] %vm319, %v324
  %329 = vst.msk [vmem:[%s7 + $0x8] sm:$0xff] %vm319, %v325
  %330 = vst.msk [vmem:[%s7 + $0x10] sm:$0xff] %vm319, %v326
  %331 = vst.msk [vmem:[%s7 + $0x18] sm:$0xff] %vm319, %v327
  %v332 = vld [vmem:[%s1] sm:$0x1]
  %v334 = vlaneseq
  %v335 = vshrl.u32 %v334, 7
  %v336 = vsub.s32 0, %v335
  %v337 = vrot.slane %v332, %v336
  %v339 = vmul.f32 %v28, %v337
  %v340 = vmul.f32 %v29, %v337
  %v341 = vmul.f32 %v30, %v337
  %v342 = vmul.f32 %v31, %v337
  %v343 = vld [vmem:[%s4] sm:$0xff]
  %v344 = vld [vmem:[%s4 + $0x8] sm:$0xff]
  %v345 = vld [vmem:[%s4 + $0x10] sm:$0xff]
  %v346 = vld [vmem:[%s4 + $0x18] sm:$0xff]
  %v347 = vld [vmem:[%s4 + $0x20] sm:$0xff]
  %v348 = vld [vmem:[%s4 + $0x28] sm:$0xff]
  %v349 = vld [vmem:[%s4 + $0x30] sm:$0xff]
  %v350 = vld [vmem:[%s4 + $0x38] sm:$0xff]
  %v352 = vsel %vm36, %v339, 0
  %v355 = vsel %vm36, %v340, 0
  %v358 = vsel %vm36, %v341, 0
  %v361 = vsel %vm36, %v342, 0
  %363 = vmatprep.subr.mxu0 0.0
  %364 = vmatpush1.msra.mxu0 0.0
  %365 = vmatprep.subr.mxu0 0.0
  %366 = vmatpush1.msra.mxu0 0.0
  %367 = vmatprep.subr.mxu0 0.0
  %368 = vmatpush1.msra.mxu0 0.0
  %369 = vmatprep.subr.mxu0 0.0
  %370 = vmatpush1.msra.mxu0 0.0
  %371 = vmatprep.subr.mxu0 0.0
  %372 = vmatpush1.msra.mxu0 0.0
  %373 = vmatprep.subr.mxu0 0.0
  %374 = vmatpush1.msra.mxu0 0.0
  %375 = vmatprep.subr.mxu0 0.0
  %376 = vmatpush1.msra.mxu0 0.0
  %377 = vmatprep.subr.mxu0 0.0
  %378 = vmatpush1.msra.mxu0 0.0
  %379 = vmatprep.subr.mxu0 0.0
  %380 = vmatpush1.msra.mxu0 %v350
  %381 = vmatprep.subr.mxu0 0.0
  %382 = vmatpush1.msra.mxu0 %v349
  %383 = vmatprep.subr.mxu0 0.0
  %384 = vmatpush1.msra.mxu0 %v348
  %385 = vmatprep.subr.mxu0 0.0
  %386 = vmatpush1.msra.mxu0 %v347
  %387 = vmatprep.subr.mxu0 0.0
  %388 = vmatpush1.msra.mxu0 %v346
  %389 = vmatprep.subr.mxu0 0.0
  %390 = vmatpush1.msra.mxu0 %v345
  %391 = vmatprep.subr.mxu0 0.0
  %392 = vmatpush1.msra.mxu0 %v344
  %393 = vmatprep.subr.mxu0 0.0
  %394 = vmatpush1.msra.mxu0 %v343
  %395 = vmatprep.subr.mxu0 0.0
  %396 = vmatpush2.msra.mxu0 0.0
  %397 = vmatprep.subr.mxu0 0.0
  %398 = vmatpush2.msra.mxu0 0.0
  %399 = vmatprep.subr.mxu0 0.0
  %400 = vmatpush2.msra.mxu0 0.0
  %401 = vmatprep.subr.mxu0 0.0
  %402 = vmatpush2.msra.mxu0 0.0
  %403 = vmatprep.subr.mxu0 0.0
  %404 = vmatpush2.msra.mxu0 0.0
  %405 = vmatprep.subr.mxu0 0.0
  %406 = vmatpush2.msra.mxu0 0.0
  %407 = vmatprep.subr.mxu0 0.0
  %408 = vmatpush2.msra.mxu0 0.0
  %409 = vmatprep.subr.mxu0 0.0
  %410 = vmatpush2.msra.mxu0 0.0
  %411 = vmatprep.subr.mxu0 0.0
  %412 = vmatpush2.msra.mxu0 0.0
  %413 = vmatprep.subr.mxu0 0.0
  %414 = vmatpush2.msra.mxu0 0.0
  %415 = vmatprep.subr.mxu0 0.0
  %416 = vmatpush2.msra.mxu0 0.0
  %417 = vmatprep.subr.mxu0 0.0
  %418 = vmatpush2.msra.mxu0 0.0
  %419 = vmatprep.subr.mxu0 0.0
  %420 = vmatpush2.msra.mxu0 0.0
  %421 = vmatprep.subr.mxu0 0.0
  %422 = vmatpush2.msra.mxu0 0.0
  %423 = vmatprep.subr.mxu0 0.0
  %424 = vmatpush2.msra.mxu0 0.0
  %425 = vmatprep.subr.mxu0 0.0
  %426 = vmatpush2.msra.mxu0 0.0
  %427 = vmatprep.mubr.f32.mxu0 0.0
  %428 = vmatmul.mubr.f32.gmra.mxu0 %v352
  %v429 = vpop.f32.mrf.mxu0
  %v430 = vadd.f32 0.0, %v429
  %v431 = vpop.f32.mrf.mxu0
  %432 = vmatprep.mubr.f32.mxu0 0.0
  %433 = vmatmul.mubr.f32.gmra.mxu0 %v355
  %v434 = vpop.f32.mrf.mxu0
  %v435 = vadd.f32 0.0, %v434
  %v436 = vpop.f32.mrf.mxu0
  %437 = vmatprep.mubr.f32.mxu0 0.0
  %438 = vmatmul.mubr.f32.gmra.mxu0 %v358
  %v439 = vpop.f32.mrf.mxu0
  %v440 = vadd.f32 0.0, %v439
  %v441 = vpop.f32.mrf.mxu0
  %442 = vmatprep.mubr.f32.mxu0 0.0
  %443 = vmatmul.mubr.f32.gmra.mxu0 %v361
  %v444 = vpop.f32.mrf.mxu0
  %v445 = vadd.f32 0.0, %v444
  %v446 = vpop.f32.mrf.mxu0
  %447 = vdwg.mxu0
  %v448 = vld [vmem:[%s5] sm:$0xff]
  %v449 = vld [vmem:[%s5 + $0x8] sm:$0xff]
  %v450 = vld [vmem:[%s5 + $0x10] sm:$0xff]
  %v451 = vld [vmem:[%s5 + $0x18] sm:$0xff]
  %v452 = vld [vmem:[%s5 + $0x20] sm:$0xff]
  %v453 = vld [vmem:[%s5 + $0x28] sm:$0xff]
  %v454 = vld [vmem:[%s5 + $0x30] sm:$0xff]
  %v455 = vld [vmem:[%s5 + $0x38] sm:$0xff]
  %456 = vmatprep.subr.mxu0 0.0
  %457 = vmatpush1.msra.mxu0 0.0
  %458 = vmatprep.subr.mxu0 0.0
  %459 = vmatpush1.msra.mxu0 0.0
  %460 = vmatprep.subr.mxu0 0.0
  %461 = vmatpush1.msra.mxu0 0.0
  %462 = vmatprep.subr.mxu0 0.0
  %463 = vmatpush1.msra.mxu0 0.0
  %464 = vmatprep.subr.mxu0 0.0
  %465 = vmatpush1.msra.mxu0 0.0
  %466 = vmatprep.subr.mxu0 0.0
  %467 = vmatpush1.msra.mxu0 0.0
  %468 = vmatprep.subr.mxu0 0.0
  %469 = vmatpush1.msra.mxu0 0.0
  %470 = vmatprep.subr.mxu0 0.0
  %471 = vmatpush1.msra.mxu0 0.0
  %472 = vmatprep.subr.mxu0 0.0
  %473 = vmatpush1.msra.mxu0 %v455
  %474 = vmatprep.subr.mxu0 0.0
  %475 = vmatpush1.msra.mxu0 %v454
  %476 = vmatprep.subr.mxu0 0.0
  %477 = vmatpush1.msra.mxu0 %v453
  %478 = vmatprep.subr.mxu0 0.0
  %479 = vmatpush1.msra.mxu0 %v452
  %480 = vmatprep.subr.mxu0 0.0
  %481 = vmatpush1.msra.mxu0 %v451
  %482 = vmatprep.subr.mxu0 0.0
  %483 = vmatpush1.msra.mxu0 %v450
  %484 = vmatprep.subr.mxu0 0.0
  %485 = vmatpush1.msra.mxu0 %v449
  %486 = vmatprep.subr.mxu0 0.0
  %487 = vmatpush1.msra.mxu0 %v448
  %488 = vmatprep.subr.mxu0 0.0
  %489 = vmatpush2.msra.mxu0 0.0
  %490 = vmatprep.subr.mxu0 0.0
  %491 = vmatpush2.msra.mxu0 0.0
  %492 = vmatprep.subr.mxu0 0.0
  %493 = vmatpush2.msra.mxu0 0.0
  %494 = vmatprep.subr.mxu0 0.0
  %495 = vmatpush2.msra.mxu0 0.0
  %496 = vmatprep.subr.mxu0 0.0
  %497 = vmatpush2.msra.mxu0 0.0
  %498 = vmatprep.subr.mxu0 0.0
  %499 = vmatpush2.msra.mxu0 0.0
  %500 = vmatprep.subr.mxu0 0.0
  %501 = vmatpush2.msra.mxu0 0.0
  %502 = vmatprep.subr.mxu0 0.0
  %503 = vmatpush2.msra.mxu0 0.0
  %504 = vmatprep.subr.mxu0 0.0
  %505 = vmatpush2.msra.mxu0 0.0
  %506 = vmatprep.subr.mxu0 0.0
  %507 = vmatpush2.msra.mxu0 0.0
  %508 = vmatprep.subr.mxu0 0.0
  %509 = vmatpush2.msra.mxu0 0.0
  %510 = vmatprep.subr.mxu0 0.0
  %511 = vmatpush2.msra.mxu0 0.0
  %512 = vmatprep.subr.mxu0 0.0
  %513 = vmatpush2.msra.mxu0 0.0
  %514 = vmatprep.subr.mxu0 0.0
  %515 = vmatpush2.msra.mxu0 0.0
  %516 = vmatprep.subr.mxu0 0.0
  %517 = vmatpush2.msra.mxu0 0.0
  %518 = vmatprep.subr.mxu0 0.0
  %519 = vmatpush2.msra.mxu0 0.0
  %520 = vmatprep.mubr.f32.mxu0 0.0
  %521 = vmatmul.mubr.f32.gmra.mxu0 %v352
  %v522 = vpop.f32.mrf.mxu0
  %v523 = vadd.f32 0.0, %v522
  %v524 = vpop.f32.mrf.mxu0
  %525 = vmatprep.mubr.f32.mxu0 0.0
  %526 = vmatmul.mubr.f32.gmra.mxu0 %v355
  %v527 = vpop.f32.mrf.mxu0
  %v528 = vadd.f32 0.0, %v527
  %v529 = vpop.f32.mrf.mxu0
  %530 = vmatprep.mubr.f32.mxu0 0.0
  %531 = vmatmul.mubr.f32.gmra.mxu0 %v358
  %v532 = vpop.f32.mrf.mxu0
  %v533 = vadd.f32 0.0, %v532
  %v534 = vpop.f32.mrf.mxu0
  %535 = vmatprep.mubr.f32.mxu0 0.0
  %536 = vmatmul.mubr.f32.gmra.mxu0 %v361
  %v537 = vpop.f32.mrf.mxu0
  %v538 = vadd.f32 0.0, %v537
  %v539 = vpop.f32.mrf.mxu0
  %540 = vdwg.mxu0
  %vm541 = vcmask 269312
  %542 = vst.msk [vmem:[%s9] sm:$0xff] %vm541, %v430
  %543 = vst.msk [vmem:[%s9 + $0x8] sm:$0xff] %vm541, %v435
  %544 = vst.msk [vmem:[%s9 + $0x10] sm:$0xff] %vm541, %v440
  %545 = vst.msk [vmem:[%s9 + $0x18] sm:$0xff] %vm541, %v445
  %546 = vst.msk [vmem:[%s10] sm:$0xff] %vm541, %v523
  %547 = vst.msk [vmem:[%s10 + $0x8] sm:$0xff] %vm541, %v528
  %548 = vst.msk [vmem:[%s10 + $0x10] sm:$0xff] %vm541, %v533
  %549 = vst.msk [vmem:[%s10 + $0x18] sm:$0xff] %vm541, %v538
  %v550 = vmul.f32 %v430, %v430
  %v551 = vmul.f32 %v435, %v435
  %v552 = vmul.f32 %v440, %v440
  %v553 = vmul.f32 %v445, %v445
  %v554 = vmul.f32 %v523, %v523
  %v555 = vmul.f32 %v528, %v528
  %v556 = vmul.f32 %v533, %v533
  %v557 = vmul.f32 %v538, %v538
  %v558 = vadd.f32 %v550, %v554
  %v559 = vadd.f32 %v551, %v555
  %v560 = vadd.f32 %v552, %v556
  %v561 = vadd.f32 %v553, %v557
  %v562 = vrsqrt.pop %v558
  %v563 = vmul.f32 %v558, %v562
  %vm564 = vcmp.eq.f32.partialorder %v558, inf
  %v565 = vsel %vm564, %v558, %v563
  %vm566 = vcmp.eq.f32.partialorder %v558, 0.0
  %v567 = vand.u32 %v558, 2147483648
  %v568 = vsel %vm566, %v567, %v565
  %v569 = vrsqrt.pop %v559
  %v570 = vmul.f32 %v559, %v569
  %vm571 = vcmp.eq.f32.partialorder %v559, inf
  %v572 = vsel %vm571, %v559, %v570
  %vm573 = vcmp.eq.f32.partialorder %v559, 0.0
  %v574 = vand.u32 %v559, 2147483648
  %v575 = vsel %vm573, %v574, %v572
  %v576 = vrsqrt.pop %v560
  %v577 = vmul.f32 %v560, %v576
  %vm578 = vcmp.eq.f32.partialorder %v560, inf
  %v579 = vsel %vm578, %v560, %v577
  %vm580 = vcmp.eq.f32.partialorder %v560, 0.0
  %v581 = vand.u32 %v560, 2147483648
  %v582 = vsel %vm580, %v581, %v579
  %v583 = vrsqrt.pop %v561
  %v584 = vmul.f32 %v561, %v583
  %vm585 = vcmp.eq.f32.partialorder %v561, inf
  %v586 = vsel %vm585, %v561, %v584
  %vm587 = vcmp.eq.f32.partialorder %v561, 0.0
  %v588 = vand.u32 %v561, 2147483648
  %v589 = vsel %vm587, %v588, %v586
  %590 = vst.msk [vmem:[%s8] sm:$0xff] %vm541, %v568
  %591 = vst.msk [vmem:[%s8 + $0x8] sm:$0xff] %vm541, %v575
  %592 = vst.msk [vmem:[%s8 + $0x10] sm:$0xff] %vm541, %v582
  %593 = vst.msk [vmem:[%s8 + $0x18] sm:$0xff] %vm541, %v589
  // Predicated region
  $region26: #{hstasnet_forward.4} parent=0 // pred_check
    _
  $region27: #{hstasnet_forward.4} parent=0 // pred_check_branch
    %595 = sbr.rel (0) target = $region29
  $region28: #{hstasnet_forward.4} parent=0 // pred_region
    _
  $region29: #{hstasnet_forward.4} parent=0 // pred_fallthru
    _
  // Predicated region
  $region30: #{hstasnet_forward.4} parent=0 // pred_check
    _
  $region31: #{hstasnet_forward.4} parent=0 // pred_check_branch
    %597 = sbr.rel (0) target = $region33
  $region32: #{hstasnet_forward.4} parent=0 // pred_region
    _
  $region33: #{hstasnet_forward.4} parent=0 // pred_fallthru
    _
  // Predicated region
  $region34: #{hstasnet_forward.4} parent=0 // pred_check
    _
  $region35: #{hstasnet_forward.4} parent=0 // pred_check_branch
    %599 = sbr.rel (0) target = $region37
  $region36: #{hstasnet_forward.4} parent=0 // pred_region
    _
  $region37: #{hstasnet_forward.4} parent=0 // pred_fallthru
    _
  // Predicated region
  $region38: #{hstasnet_forward.4} parent=0 // pred_check
    _
  $region39: #{hstasnet_forward.4} parent=0 // pred_check_branch
    %601 = sbr.rel (0) target = $region41
  $region40: #{hstasnet_forward.4} parent=0 // pred_region
    _
  $region41: #{hstasnet_forward.4} parent=0 // pred_fallthru
    _
  // Predicated region
  $region42: #{hstasnet_forward.4} parent=0 // pred_check
    _
  $region43: #{hstasnet_forward.4} parent=0 // pred_check_branch
    %603 = sbr.rel (0) target = $region45
  $region44: #{hstasnet_forward.4} parent=0 // pred_region
    _
  $region45: #{hstasnet_forward.4} parent=0 // pred_fallthru
    _
  // Predicated region
  $region46: #{hstasnet_forward.4} parent=0 // pred_check
    _
  $region47: #{hstasnet_forward.4} parent=0 // pred_check_branch
    %605 = sbr.rel (0) target = $region49
  $region48: #{hstasnet_forward.4} parent=0 // pred_region
    _
  $region49: #{hstasnet_forward.4} parent=0 // pred_fallthru
    _
  // Predicated region
  $region50: #{hstasnet_forward.4} parent=0 // pred_check
    _
  $region51: #{hstasnet_forward.4} parent=0 // pred_check_branch
    %607 = sbr.rel (0) target = $region53
  $region52: #{hstasnet_forward.4} parent=0 // pred_region
    _
  $region53: #{hstasnet_forward.4} parent=0 // pred_fallthru
    _
  // Predicated region
  $region54: #{hstasnet_forward.4} parent=0 // pred_check
    _
  $region55: #{hstasnet_forward.4} parent=0 // pred_check_branch
    %609 = sbr.rel (0) target = $region57
  $region56: #{hstasnet_forward.4} parent=0 // pred_region
    _
  $region57: #{hstasnet_forward.4} parent=0 // pred_fallthru
    _
  // Predicated region
  $region58: #{hstasnet_forward.4} parent=0 // pred_check
    _
  $region59: #{hstasnet_forward.4} parent=0 // pred_check_branch
    %611 = sbr.rel (0) target = $region61
  $region60: #{hstasnet_forward.4} parent=0 // pred_region
    _
  $region61: #{hstasnet_forward.4} parent=0 // pred_fallthru
    _
  // Predicated region
  $region62: #{hstasnet_forward.4} parent=0 // pred_check
    _
  $region63: #{hstasnet_forward.4} parent=0 // pred_check_branch
    %613 = sbr.rel (0) target = $region65
  $region64: #{hstasnet_forward.4} parent=0 // pred_region
    _
  $region65: #{hstasnet_forward.4} parent=0 // pred_fallthru
    _

// kernel: mul.10
$region0: #{mul.10}
  #allocation0 [shape = 's32[1]{0}', space=sflag, size = 0x4, scoped, tag = 'scoped memory for mul.10']
  %s0 = inlined_call_operand.vmem [shape: f32[32], index: 0, kind: input, shape index: {}]
  %s1 = inlined_call_operand.vmem [shape: f32[8,32], index: 1, kind: output, shape index: {}]
  // Predicated region
  $region2: #{mul.10} parent=0 // pred_check
    _
  $region3: #{mul.10} parent=0 // pred_check_branch
    %3 = sbr.rel (0) target = $region5
  $region4: #{mul.10} parent=0 // pred_region
    _
  $region5: #{mul.10} parent=0 // pred_fallthru
    _
  %v4 = vld [vmem:[%s0] ss:$0 sm:$0xff]
  %5 = vst [vmem:[%s1] sm:$0xff] %v4

// kernel: hstasnet_forward.5
$region0: #{hstasnet_forward.5}
  #allocation0 [shape = 'u32[]', space=smem, size = 0x4, offset = 0x4, fixed_abs, tag = 'smem constant byte address 0x4 - core index']
  #allocation1 [shape = 'u32[144,128]{1,0:T(1,128)}', space=vmem, size = 0x12000, scoped, tag = 'internal scratch']
  %s0 = inlined_call_operand.vmem [shape: f32[8,2,96], index: 0, kind: input, shape index: {}]
  %s1 = inlined_call_operand.vmem [shape: f32[8,2,66], index: 1, kind: input, shape index: {}]
  %s2 = inlined_call_operand.vmem [shape: f32[96,128], index: 2, kind: input, shape index: {}]
  %s3 = inlined_call_operand.vmem [shape: f32[32,128], index: 3, kind: input, shape index: {}]
  %s4 = inlined_call_operand.vmem [shape: f32[1,128], index: 4, kind: input, shape index: {}]
  %s5 = inlined_call_operand.vmem [shape: f32[66,128], index: 5, kind: input, shape index: {}]
  %s6 = inlined_call_operand.vmem [shape: f32[32,128], index: 6, kind: input, shape index: {}]
  %s7 = inlined_call_operand.vmem [shape: f32[1,128], index: 7, kind: input, shape index: {}]
  %s8 = inlined_call_operand.vmem [shape: f32[32,256], index: 8, kind: input, shape index: {}]
  %s9 = inlined_call_operand.vmem [shape: f32[32,256], index: 9, kind: input, shape index: {}]
  %s10 = inlined_call_operand.vmem [shape: f32[64,256], index: 10, kind: input, shape index: {}]
  %s11 = inlined_call_operand.vmem [shape: f32[1,256], index: 11, kind: input, shape index: {}]
  %s12 = inlined_call_operand.vmem [shape: f32[64,128], index: 12, kind: input, shape index: {}]
  %s13 = inlined_call_operand.vmem [shape: f32[32,128], index: 13, kind: input, shape index: {}]
  %s14 = inlined_call_operand.vmem [shape: f32[1,128], index: 14, kind: input, shape index: {}]
  %s15 = inlined_call_operand.vmem [shape: f32[64,128], index: 15, kind: input, shape index: {}]
  %s16 = inlined_call_operand.vmem [shape: f32[32,128], index: 16, kind: input, shape index: {}]
  %s17 = inlined_call_operand.vmem [shape: f32[1,128], index: 17, kind: input, shape index: {}]
  %s18 = inlined_call_operand.vmem [shape: f32[8,2,32], index: 18, kind: output, shape index: {0}]
  %s19 = inlined_call_operand.vmem [shape: f32[8,2,32], index: 19, kind: output, shape index: {1}]
  %20 = xla_tuple %s18, %s19
  %s21 = sld [smem:[#allocation0]]
  $region97: #{hstasnet_forward.5} parent=0
    _
  %s23 = ssub.s32 1, %s21
  %s24 = scalar_select 0, %s23, %s21
  // Predicated region
  $region2: #{hstasnet_forward.5} parent=0 // pred_check
    _
  $region3: #{hstasnet_forward.5} parent=0 // pred_check_branch
    %26 = sbr.rel (0) target = $region5
  $region4: #{hstasnet_forward.5} parent=0 // pred_region
    _
  $region5: #{hstasnet_forward.5} parent=0 // pred_fallthru
    _
  // Predicated region
  $region6: #{hstasnet_forward.5} parent=0 // pred_check
    _
  $region7: #{hstasnet_forward.5} parent=0 // pred_check_branch
    %28 = sbr.rel (0) target = $region9
  $region8: #{hstasnet_forward.5} parent=0 // pred_region
    _
  $region9: #{hstasnet_forward.5} parent=0 // pred_fallthru
    _
  // Predicated region
  $region10: #{hstasnet_forward.5} parent=0 // pred_check
    _
  $region11: #{hstasnet_forward.5} parent=0 // pred_check_branch
    %30 = sbr.rel (0) target = $region13
  $region12: #{hstasnet_forward.5} parent=0 // pred_region
    _
  $region13: #{hstasnet_forward.5} parent=0 // pred_fallthru
    _
  // Predicated region
  $region14: #{hstasnet_forward.5} parent=0 // pred_check
    _
  $region15: #{hstasnet_forward.5} parent=0 // pred_check_branch
    %32 = sbr.rel (0) target = $region17
  $region16: #{hstasnet_forward.5} parent=0 // pred_region
    _
  $region17: #{hstasnet_forward.5} parent=0 // pred_fallthru
    _
  // Predicated region
  $region18: #{hstasnet_forward.5} parent=0 // pred_check
    _
  $region19: #{hstasnet_forward.5} parent=0 // pred_check_branch
    %34 = sbr.rel (0) target = $region21
  $region20: #{hstasnet_forward.5} parent=0 // pred_region
    _
  $region21: #{hstasnet_forward.5} parent=0 // pred_fallthru
    _
  // Predicated region
  $region22: #{hstasnet_forward.5} parent=0 // pred_check
    _
  $region23: #{hstasnet_forward.5} parent=0 // pred_check_branch
    %36 = sbr.rel (0) target = $region25
  $region24: #{hstasnet_forward.5} parent=0 // pred_region
    _
  $region25: #{hstasnet_forward.5} parent=0 // pred_fallthru
    _
  // Predicated region
  $region26: #{hstasnet_forward.5} parent=0 // pred_check
    _
  $region27: #{hstasnet_forward.5} parent=0 // pred_check_branch
    %38 = sbr.rel (0) target = $region29
  $region28: #{hstasnet_forward.5} parent=0 // pred_region
    _
  $region29: #{hstasnet_forward.5} parent=0 // pred_fallthru
    _
  // Predicated region
  $region30: #{hstasnet_forward.5} parent=0 // pred_check
    _
  $region31: #{hstasnet_forward.5} parent=0 // pred_check_branch
    %40 = sbr.rel (0) target = $region33
  $region32: #{hstasnet_forward.5} parent=0 // pred_region
    _
  $region33: #{hstasnet_forward.5} parent=0 // pred_fallthru
    _
  // Predicated region
  $region34: #{hstasnet_forward.5} parent=0 // pred_check
    _
  $region35: #{hstasnet_forward.5} parent=0 // pred_check_branch
    %42 = sbr.rel (0) target = $region37
  $region36: #{hstasnet_forward.5} parent=0 // pred_region
    _
  $region37: #{hstasnet_forward.5} parent=0 // pred_fallthru
    _
  // Predicated region
  $region38: #{hstasnet_forward.5} parent=0 // pred_check
    _
  $region39: #{hstasnet_forward.5} parent=0 // pred_check_branch
    %44 = sbr.rel (0) target = $region41
  $region40: #{hstasnet_forward.5} parent=0 // pred_region
    _
  $region41: #{hstasnet_forward.5} parent=0 // pred_fallthru
    _
  // Predicated region
  $region42: #{hstasnet_forward.5} parent=0 // pred_check
    _
  $region43: #{hstasnet_forward.5} parent=0 // pred_check_branch
    %46 = sbr.rel (0) target = $region45
  $region44: #{hstasnet_forward.5} parent=0 // pred_region
    _
  $region45: #{hstasnet_forward.5} parent=0 // pred_fallthru
    _
  // Predicated region
  $region46: #{hstasnet_forward.5} parent=0 // pred_check
    _
  $region47: #{hstasnet_forward.5} parent=0 // pred_check_branch
    %48 = sbr.rel (0) target = $region49
  $region48: #{hstasnet_forward.5} parent=0 // pred_region
    _
  $region49: #{hstasnet_forward.5} parent=0 // pred_fallthru
    _
  // Predicated region
  $region50: #{hstasnet_forward.5} parent=0 // pred_check
    _
  $region51: #{hstasnet_forward.5} parent=0 // pred_check_branch
    %50 = sbr.rel (0) target = $region53
  $region52: #{hstasnet_forward.5} parent=0 // pred_region
    _
  $region53: #{hstasnet_forward.5} parent=0 // pred_fallthru
    _
  // Predicated region
  $region54: #{hstasnet_forward.5} parent=0 // pred_check
    _
  $region55: #{hstasnet_forward.5} parent=0 // pred_check_branch
    %52 = sbr.rel (0) target = $region57
  $region56: #{hstasnet_forward.5} parent=0 // pred_region
    _
  $region57: #{hstasnet_forward.5} parent=0 // pred_fallthru
    _
  // Predicated region
  $region58: #{hstasnet_forward.5} parent=0 // pred_check
    _
  $region59: #{hstasnet_forward.5} parent=0 // pred_check_branch
    %54 = sbr.rel (0) target = $region61
  $region60: #{hstasnet_forward.5} parent=0 // pred_region
    _
  $region61: #{hstasnet_forward.5} parent=0 // pred_fallthru
    _
  // Predicated region
  $region62: #{hstasnet_forward.5} parent=0 // pred_check
    _
  $region63: #{hstasnet_forward.5} parent=0 // pred_check_branch
    %56 = sbr.rel (0) target = $region65
  $region64: #{hstasnet_forward.5} parent=0 // pred_region
    _
  $region65: #{hstasnet_forward.5} parent=0 // pred_fallthru
    _
  // Predicated region
  $region66: #{hstasnet_forward.5} parent=0 // pred_check
    _
  $region67: #{hstasnet_forward.5} parent=0 // pred_check_branch
    %58 = sbr.rel (0) target = $region69
  $region68: #{hstasnet_forward.5} parent=0 // pred_region
    _
  $region69: #{hstasnet_forward.5} parent=0 // pred_fallthru
    _
  // Predicated region
  $region70: #{hstasnet_forward.5} parent=0 // pred_check
    _
  $region71: #{hstasnet_forward.5} parent=0 // pred_check_branch
    %60 = sbr.rel (0) target = $region73
  $region72: #{hstasnet_forward.5} parent=0 // pred_region
    _
  $region73: #{hstasnet_forward.5} parent=0 // pred_fallthru
    _
  %v61 = vld [vmem:[%s2] sm:$0xff]
  %v62 = vld [vmem:[%s2 + $0x8] sm:$0xff]
  %v63 = vld [vmem:[%s2 + $0x10] sm:$0xff]
  %v64 = vld [vmem:[%s2 + $0x18] sm:$0xff]
  %v65 = vld [vmem:[%s2 + $0x20] sm:$0xff]
  %v66 = vld [vmem:[%s2 + $0x28] sm:$0xff]
  %v67 = vld [vmem:[%s2 + $0x30] sm:$0xff]
  %v68 = vld [vmem:[%s2 + $0x38] sm:$0xff]
  %v69 = vld [vmem:[%s2 + $0x40] sm:$0xff]
  %v70 = vld [vmem:[%s2 + $0x48] sm:$0xff]
  %v71 = vld [vmem:[%s2 + $0x50] sm:$0xff]
  %v72 = vld [vmem:[%s2 + $0x58] sm:$0xff]
  %v73 = vld [vmem:[%s3] sm:$0xff]
  %v74 = vld [vmem:[%s3 + $0x8] sm:$0xff]
  %v75 = vld [vmem:[%s3 + $0x10] sm:$0xff]
  %v76 = vld [vmem:[%s3 + $0x18] sm:$0xff]
  %v77 = vld [vmem:[%s4] sm:$0x1]
  %v78 = vld [vmem:[%s5] sm:$0xff]
  %v79 = vld [vmem:[%s5 + $0x8] sm:$0xff]
  %v80 = vld [vmem:[%s5 + $0x10] sm:$0xff]
  %v81 = vld [vmem:[%s5 + $0x18] sm:$0xff]
  %v82 = vld [vmem:[%s5 + $0x20] sm:$0xff]
  %v83 = vld [vmem:[%s5 + $0x28] sm:$0xff]
  %v84 = vld [vmem:[%s5 + $0x30] sm:$0xff]
  %v85 = vld [vmem:[%s5 + $0x38] sm:$0xff]
  %v86 = vld [vmem:[%s5 + $0x40] sm:$0x3]
  %v87 = vld [vmem:[%s6] sm:$0xff]
  %v88 = vld [vmem:[%s6 + $0x8] sm:$0xff]
  %v89 = vld [vmem:[%s6 + $0x10] sm:$0xff]
  %v90 = vld [vmem:[%s6 + $0x18] sm:$0xff]
  %v91 = vld [vmem:[%s7] sm:$0x1]
  %v92 = vld [vmem:[%s8] sm:$0xff]
  %v93 = vld [vmem:[%s8 + $0x8] sm:$0xff]
  %v94 = vld [vmem:[%s8 + $0x10] sm:$0xff]
  %v95 = vld [vmem:[%s8 + $0x18] sm:$0xff]
  %v96 = vld [vmem:[%s8 + $0x20] sm:$0xff]
  %v97 = vld [vmem:[%s8 + $0x28] sm:$0xff]
  %v98 = vld [vmem:[%s8 + $0x30] sm:$0xff]
  %v99 = vld [vmem:[%s8 + $0x38] sm:$0xff]
  %v100 = vld [vmem:[%s9] sm:$0xff]
  %v101 = vld [vmem:[%s9 + $0x8] sm:$0xff]
  %v102 = vld [vmem:[%s9 + $0x10] sm:$0xff]
  %v103 = vld [vmem:[%s9 + $0x18] sm:$0xff]
  %v104 = vld [vmem:[%s9 + $0x20] sm:$0xff]
  %v105 = vld [vmem:[%s9 + $0x28] sm:$0xff]
  %v106 = vld [vmem:[%s9 + $0x30] sm:$0xff]
  %v107 = vld [vmem:[%s9 + $0x38] sm:$0xff]
  %v108 = vld [vmem:[%s10] sm:$0xff]
  %v109 = vld [vmem:[%s10 + $0x8] sm:$0xff]
  %v110 = vld [vmem:[%s10 + $0x10] sm:$0xff]
  %v111 = vld [vmem:[%s10 + $0x18] sm:$0xff]
  %v112 = vld [vmem:[%s10 + $0x20] sm:$0xff]
  %v113 = vld [vmem:[%s10 + $0x28] sm:$0xff]
  %v114 = vld [vmem:[%s10 + $0x30] sm:$0xff]
  %v115 = vld [vmem:[%s10 + $0x38] sm:$0xff]
  %v116 = vld [vmem:[%s10 + $0x40] sm:$0xff]
  %v117 = vld [vmem:[%s10 + $0x48] sm:$0xff]
  %v118 = vld [vmem:[%s10 + $0x50] sm:$0xff]
  %v119 = vld [vmem:[%s10 + $0x58] sm:$0xff]
  %v120 = vld [vmem:[%s10 + $0x60] sm:$0xff]
  %v121 = vld [vmem:[%s10 + $0x68] sm:$0xff]
  %v122 = vld [vmem:[%s10 + $0x70] sm:$0xff]
  %v123 = vld [vmem:[%s10 + $0x78] sm:$0xff]
  %v124 = vld [vmem:[%s11] sm:$0x3]
  %v125 = vld [vmem:[%s12] sm:$0xff]
  %v126 = vld [vmem:[%s12 + $0x8] sm:$0xff]
  %v127 = vld [vmem:[%s12 + $0x10] sm:$0xff]
  %v128 = vld [vmem:[%s12 + $0x18] sm:$0xff]
  %v129 = vld [vmem:[%s12 + $0x20] sm:$0xff]
  %v130 = vld [vmem:[%s12 + $0x28] sm:$0xff]
  %v131 = vld [vmem:[%s12 + $0x30] sm:$0xff]
  %v132 = vld [vmem:[%s12 + $0x38] sm:$0xff]
  %v133 = vld [vmem:[%s13] sm:$0xff]
  %v134 = vld [vmem:[%s13 + $0x8] sm:$0xff]
  %v135 = vld [vmem:[%s13 + $0x10] sm:$0xff]
  %v136 = vld [vmem:[%s13 + $0x18] sm:$0xff]
  %v137 = vld [vmem:[%s14] sm:$0x1]
  %v138 = vld [vmem:[%s15] sm:$0xff]
  %v139 = vld [vmem:[%s15 + $0x8] sm:$0xff]
  %v140 = vld [vmem:[%s15 + $0x10] sm:$0xff]
  %v141 = vld [vmem:[%s15 + $0x18] sm:$0xff]
  %v142 = vld [vmem:[%s15 + $0x20] sm:$0xff]
  %v143 = vld [vmem:[%s15 + $0x28] sm:$0xff]
  %v144 = vld [vmem:[%s15 + $0x30] sm:$0xff]
  %v145 = vld [vmem:[%s15 + $0x38] sm:$0xff]
  %v146 = vld [vmem:[%s16] sm:$0xff]
  %v147 = vld [vmem:[%s16 + $0x8] sm:$0xff]
  %v148 = vld [vmem:[%s16 + $0x10] sm:$0xff]
  %v149 = vld [vmem:[%s16 + $0x18] sm:$0xff]
  %v150 = vld [vmem:[%s17] sm:$0x1]
  loop: start=0, step=1, limit=8
  $region74: #{hstasnet_forward.5} parent=0 // loop_pre_header
    _
  $region75: #{hstasnet_forward.5} parent=0 // loop_header
    %s152 = sphi 0, %s156
    %p153 = scmp.ge.s32.totalorder %s152, 8
    %v157 = vphi 0.0, %v350
    %v158 = vphi 0.0, %v344
    %v159 = vphi 0.0, %v536
    %v160 = vphi 0.0, %v530
    %v161 = vphi 0.0, %v802
    %v162 = vphi 0.0, %v800
    %v163 = vphi 0.0, %v983
    %v164 = vphi 0.0, %v977
    %v165 = vphi 0.0, %v1159
    %v166 = vphi 0.0, %v1153
  $region76: #{hstasnet_forward.5} parent=0 // loop_header_branch
    %155 = sbr.rel (%p153) target = $region80
  $region77: #{hstasnet_forward.5} parent=0 // loop_body
    %s167 = smul.u32 %s152, 2
    %s168 = scalar_lea.vmem %s0, %s167
    %v169 = vld [vmem:[%s168] sm:$0x3]
    %171 = vrot.lane.b32.xlu0 %v157, 32
    %v172 = vpop.permute.xlu0 %171
    %vm173 = vcmask 261120
    %v174 = vsel %vm173, %v172, 0
    %176 = vmatprep.subr.mxu0 0.0
    %177 = vmatpush1.msra.mxu0 0.0
    %178 = vmatprep.subr.mxu0 0.0
    %179 = vmatpush1.msra.mxu0 0.0
    %180 = vmatprep.subr.mxu0 0.0
    %181 = vmatpush1.msra.mxu0 0.0
    %182 = vmatprep.subr.mxu0 0.0
    %183 = vmatpush1.msra.mxu0 0.0
    %184 = vmatprep.subr.mxu0 0.0
    %185 = vmatpush1.msra.mxu0 0.0
    %186 = vmatprep.subr.mxu0 0.0
    %187 = vmatpush1.msra.mxu0 0.0
    %188 = vmatprep.subr.mxu0 0.0
    %189 = vmatpush1.msra.mxu0 0.0
    %190 = vmatprep.subr.mxu0 0.0
    %191 = vmatpush1.msra.mxu0 0.0
    %192 = vmatprep.subr.mxu0 0.0
    %193 = vmatpush1.msra.mxu0 0.0
    %194 = vmatprep.subr.mxu0 0.0
    %195 = vmatpush1.msra.mxu0 0.0
    %196 = vmatprep.subr.mxu0 0.0
    %197 = vmatpush1.msra.mxu0 0.0
    %198 = vmatprep.subr.mxu0 0.0
    %199 = vmatpush1.msra.mxu0 0.0
    %200 = vmatprep.subr.mxu0 0.0
    %201 = vmatpush1.msra.mxu0 %v76
    %202 = vmatprep.subr.mxu0 0.0
    %203 = vmatpush1.msra.mxu0 %v75
    %204 = vmatprep.subr.mxu0 0.0
    %205 = vmatpush1.msra.mxu0 %v74
    %206 = vmatprep.subr.mxu0 0.0
    %207 = vmatpush1.msra.mxu0 %v73
    %208 = vmatprep.subr.mxu0 0.0
    %209 = vmatpush2.msra.mxu0 0.0
    %210 = vmatprep.subr.mxu0 0.0
    %211 = vmatpush2.msra.mxu0 0.0
    %212 = vmatprep.subr.mxu0 0.0
    %213 = vmatpush2.msra.mxu0 0.0
    %214 = vmatprep.subr.mxu0 0.0
    %215 = vmatpush2.msra.mxu0 0.0
    %216 = vmatprep.subr.mxu0 0.0
    %217 = vmatpush2.msra.mxu0 0.0
    %218 = vmatprep.subr.mxu0 0.0
    %219 = vmatpush2.msra.mxu0 0.0
    %220 = vmatprep.subr.mxu0 0.0
    %221 = vmatpush2.msra.mxu0 0.0
    %222 = vmatprep.subr.mxu0 0.0
    %223 = vmatpush2.msra.mxu0 0.0
    %224 = vmatprep.subr.mxu0 0.0
    %225 = vmatpush2.msra.mxu0 0.0
    %226 = vmatprep.subr.mxu0 0.0
    %227 = vmatpush2.msra.mxu0 0.0
    %228 = vmatprep.subr.mxu0 0.0
    %229 = vmatpush2.msra.mxu0 0.0
    %230 = vmatprep.subr.mxu0 0.0
    %231 = vmatpush2.msra.mxu0 0.0
    %232 = vmatprep.subr.mxu0 0.0
    %233 = vmatpush2.msra.mxu0 0.0
    %234 = vmatprep.subr.mxu0 0.0
    %235 = vmatpush2.msra.mxu0 0.0
    %236 = vmatprep.subr.mxu0 0.0
    %237 = vmatpush2.msra.mxu0 0.0
    %238 = vmatprep.subr.mxu0 0.0
    %239 = vmatpush2.msra.mxu0 0.0
    %240 = vmatprep.mubr.f32.mxu0 0.0
    %241 = vmatmul.mubr.f32.gmra.mxu0 %v174
    %v242 = vpop.f32.mrf.mxu0
    %v243 = vadd.f32 0.0, %v242
    %v244 = vpop.f32.mrf.mxu0
    %245 = vdwg.mxu0
    %vm246 = vcmask 785408
    %v248 = vsel %vm246, %v169, 0
    %250 = vmatprep.subr.mxu0 0.0
    %251 = vmatpush1.msra.mxu0 0.0
    %252 = vmatprep.subr.mxu0 0.0
    %253 = vmatpush1.msra.mxu0 0.0
    %254 = vmatprep.subr.mxu0 0.0
    %255 = vmatpush1.msra.mxu0 0.0
    %256 = vmatprep.subr.mxu0 0.0
    %257 = vmatpush1.msra.mxu0 0.0
    %258 = vmatprep.subr.mxu0 0.0
    %259 = vmatpush1.msra.mxu0 %v72
    %260 = vmatprep.subr.mxu0 0.0
    %261 = vmatpush1.msra.mxu0 %v71
    %262 = vmatprep.subr.mxu0 0.0
    %263 = vmatpush1.msra.mxu0 %v70
    %264 = vmatprep.subr.mxu0 0.0
    %265 = vmatpush1.msra.mxu0 %v69
    %266 = vmatprep.subr.mxu0 0.0
    %267 = vmatpush1.msra.mxu0 %v68
    %268 = vmatprep.subr.mxu0 0.0
    %269 = vmatpush1.msra.mxu0 %v67
    %270 = vmatprep.subr.mxu0 0.0
    %271 = vmatpush1.msra.mxu0 %v66
    %272 = vmatprep.subr.mxu0 0.0
    %273 = vmatpush1.msra.mxu0 %v65
    %274 = vmatprep.subr.mxu0 0.0
    %275 = vmatpush1.msra.mxu0 %v64
    %276 = vmatprep.subr.mxu0 0.0
    %277 = vmatpush1.msra.mxu0 %v63
    %278 = vmatprep.subr.mxu0 0.0
    %279 = vmatpush1.msra.mxu0 %v62
    %280 = vmatprep.subr.mxu0 0.0
    %281 = vmatpush1.msra.mxu0 %v61
    %282 = vmatprep.subr.mxu0 0.0
    %283 = vmatpush2.msra.mxu0 0.0
    %284 = vmatprep.subr.mxu0 0.0
    %285 = vmatpush2.msra.mxu0 0.0
    %286 = vmatprep.subr.mxu0 0.0
    %287 = vmatpush2.msra.mxu0 0.0
    %288 = vmatprep.subr.mxu0 0.0
    %289 = vmatpush2.msra.mxu0 0.0
    %290 = vmatprep.subr.mxu0 0.0
    %291 = vmatpush2.msra.mxu0 0.0
    %292 = vmatprep.subr.mxu0 0.0
    %293 = vmatpush2.msra.mxu0 0.0
    %294 = vmatprep.subr.mxu0 0.0
    %295 = vmatpush2.msra.mxu0 0.0
    %296 = vmatprep.subr.mxu0 0.0
    %297 = vmatpush2.msra.mxu0 0.0
    %298 = vmatprep.subr.mxu0 0.0
    %299 = vmatpush2.msra.mxu0 0.0
    %300 = vmatprep.subr.mxu0 0.0
    %301 = vmatpush2.msra.mxu0 0.0
    %302 = vmatprep.subr.mxu0 0.0
    %303 = vmatpush2.msra.mxu0 0.0
    %304 = vmatprep.subr.mxu0 0.0
    %305 = vmatpush2.msra.mxu0 0.0
    %306 = vmatprep.subr.mxu0 0.0
    %307 = vmatpush2.msra.mxu0 0.0
    %308 = vmatprep.subr.mxu0 0.0
    %309 = vmatpush2.msra.mxu0 0.0
    %310 = vmatprep.subr.mxu0 0.0
    %311 = vmatpush2.msra.mxu0 0.0
    %312 = vmatprep.subr.mxu0 0.0
    %313 = vmatpush2.msra.mxu0 0.0
    %314 = vmatprep.mubr.f32.mxu0 0.0
    %315 = vmatmul.mubr.f32.gmra.mxu0 %v248
    %v316 = vpop.f32.mrf.mxu0
    %v317 = vadd.f32 %v243, %v316
    %v318 = vpop.f32.mrf.mxu0
    %319 = vdwg.mxu0
    %v321 = vlaneseq
    %v322 = vshrl.u32 %v321, 7
    %v323 = vsub.s32 0, %v322
    %v324 = vrot.slane %v77, %v323
    %v326 = vadd.f32 %v317, %v324
    %v327 = vxor.u32 %v326, 2147483648
    %v328 = vmul.f32 %v327, 1.442695
    %v329 = vpow.pop %v328
    %v330 = vadd.f32 %v329, 1.0
    %v331 = vrcp.pop %v330
    %v332 = vmul.f32 1.0, %v331
    %v333 = vtanh.pop %v326
    %v334 = vmul.f32 %v332, %v158
    %336 = vrot.lane.b32.xlu0 %v333, 64
    %v337 = vpop.permute.xlu0 %336
    %v339 = vmul.f32 %v332, %v337
    %341 = vrot.lane.b32.xlu0 %v339, 32
    %v342 = vpop.permute.xlu0 %341
    %v344 = vadd.f32 %v334, %v342
    %v345 = vtanh.pop %v344
    %347 = vrot.lane.b32.xlu0 %v345, 64
    %v348 = vpop.permute.xlu0 %347
    %v350 = vmul.f32 %v332, %v348
    %s351 = scalar_lea.vmem %s1, %s167
    %v352 = vld [vmem:[%s351] sm:$0x3]
    %354 = vrot.lane.b32.xlu0 %v159, 32
    %v355 = vpop.permute.xlu0 %354
    %v356 = vsel %vm173, %v355, 0
    %358 = vmatprep.subr.mxu0 0.0
    %359 = vmatpush1.msra.mxu0 0.0
    %360 = vmatprep.subr.mxu0 0.0
    %361 = vmatpush1.msra.mxu0 0.0
    %362 = vmatprep.subr.mxu0 0.0
    %363 = vmatpush1.msra.mxu0 0.0
    %364 = vmatprep.subr.mxu0 0.0
    %365 = vmatpush1.msra.mxu0 0.0
    %366 = vmatprep.subr.mxu0 0.0
    %367 = vmatpush1.msra.mxu0 0.0
    %368 = vmatprep.subr.mxu0 0.0
    %369 = vmatpush1.msra.mxu0 0.0
    %370 = vmatprep.subr.mxu0 0.0
    %371 = vmatpush1.msra.mxu0 0.0
    %372 = vmatprep.subr.mxu0 0.0
    %373 = vmatpush1.msra.mxu0 0.0
    %374 = vmatprep.subr.mxu0 0.0
    %375 = vmatpush1.msra.mxu0 0.0
    %376 = vmatprep.subr.mxu0 0.0
    %377 = vmatpush1.msra.mxu0 0.0
    %378 = vmatprep.subr.mxu0 0.0
    %379 = vmatpush1.msra.mxu0 0.0
    %380 = vmatprep.subr.mxu0 0.0
    %381 = vmatpush1.msra.mxu0 0.0
    %382 = vmatprep.subr.mxu0 0.0
    %383 = vmatpush1.msra.mxu0 %v90
    %384 = vmatprep.subr.mxu0 0.0
    %385 = vmatpush1.msra.mxu0 %v89
    %386 = vmatprep.subr.mxu0 0.0
    %387 = vmatpush1.msra.mxu0 %v88
    %388 = vmatprep.subr.mxu0 0.0
    %389 = vmatpush1.msra.mxu0 %v87
    %390 = vmatprep.subr.mxu0 0.0
    %391 = vmatpush2.msra.mxu0 0.0
    %392 = vmatprep.subr.mxu0 0.0
    %393 = vmatpush2.msra.mxu0 0.0
    %394 = vmatprep.subr.mxu0 0.0
    %395 = vmatpush2.msra.mxu0 0.0
    %396 = vmatprep.subr.mxu0 0.0
    %397 = vmatpush2.msra.mxu0 0.0
    %398 = vmatprep.subr.mxu0 0.0
    %399 = vmatpush2.msra.mxu0 0.0
    %400 = vmatprep.subr.mxu0 0.0
    %401 = vmatpush2.msra.mxu0 0.0
    %402 = vmatprep.subr.mxu0 0.0
    %403 = vmatpush2.msra.mxu0 0.0
    %404 = vmatprep.subr.mxu0 0.0
    %405 = vmatpush2.msra.mxu0 0.0
    %406 = vmatprep.subr.mxu0 0.0
    %407 = vmatpush2.msra.mxu0 0.0
    %408 = vmatprep.subr.mxu0 0.0
    %409 = vmatpush2.msra.mxu0 0.0
    %410 = vmatprep.subr.mxu0 0.0
    %411 = vmatpush2.msra.mxu0 0.0
    %412 = vmatprep.subr.mxu0 0.0
    %413 = vmatpush2.msra.mxu0 0.0
    %414 = vmatprep.subr.mxu0 0.0
    %415 = vmatpush2.msra.mxu0 0.0
    %416 = vmatprep.subr.mxu0 0.0
    %417 = vmatpush2.msra.mxu0 0.0
    %418 = vmatprep.subr.mxu0 0.0
    %419 = vmatpush2.msra.mxu0 0.0
    %420 = vmatprep.subr.mxu0 0.0
    %421 = vmatpush2.msra.mxu0 0.0
    %422 = vmatprep.mubr.f32.mxu0 0.0
    %423 = vmatmul.mubr.f32.gmra.mxu0 %v356
    %v424 = vpop.f32.mrf.mxu0
    %v425 = vadd.f32 0.0, %v424
    %v426 = vpop.f32.mrf.mxu0
    %427 = vdwg.mxu0
    %vm428 = vcmask 539648
    %v430 = vsel %vm428, %v352, 0
    %vm432 = vcmask 1041408
    %v434 = vsel %vm432, %v86, 0
    %436 = vmatprep.subr.mxu0 0.0
    %437 = vmatpush1.msra.mxu0 0.0
    %438 = vmatprep.subr.mxu0 0.0
    %439 = vmatpush1.msra.mxu0 0.0
    %440 = vmatprep.subr.mxu0 0.0
    %441 = vmatpush1.msra.mxu0 0.0
    %442 = vmatprep.subr.mxu0 0.0
    %443 = vmatpush1.msra.mxu0 0.0
    %444 = vmatprep.subr.mxu0 0.0
    %445 = vmatpush1.msra.mxu0 0.0
    %446 = vmatprep.subr.mxu0 0.0
    %447 = vmatpush1.msra.mxu0 0.0
    %448 = vmatprep.subr.mxu0 0.0
    %449 = vmatpush1.msra.mxu0 0.0
    %450 = vmatprep.subr.mxu0 0.0
    %451 = vmatpush1.msra.mxu0 %v434
    %452 = vmatprep.subr.mxu0 0.0
    %453 = vmatpush1.msra.mxu0 %v85
    %454 = vmatprep.subr.mxu0 0.0
    %455 = vmatpush1.msra.mxu0 %v84
    %456 = vmatprep.subr.mxu0 0.0
    %457 = vmatpush1.msra.mxu0 %v83
    %458 = vmatprep.subr.mxu0 0.0
    %459 = vmatpush1.msra.mxu0 %v82
    %460 = vmatprep.subr.mxu0 0.0
    %461 = vmatpush1.msra.mxu0 %v81
    %462 = vmatprep.subr.mxu0 0.0
    %463 = vmatpush1.msra.mxu0 %v80
    %464 = vmatprep.subr.mxu0 0.0
    %465 = vmatpush1.msra.mxu0 %v79
    %466 = vmatprep.subr.mxu0 0.0
    %467 = vmatpush1.msra.mxu0 %v78
    %468 = vmatprep.subr.mxu0 0.0
    %469 = vmatpush2.msra.mxu0 0.0
    %470 = vmatprep.subr.mxu0 0.0
    %471 = vmatpush2.msra.mxu0 0.0
    %472 = vmatprep.subr.mxu0 0.0
    %473 = vmatpush2.msra.mxu0 0.0
    %474 = vmatprep.subr.mxu0 0.0
    %475 = vmatpush2.msra.mxu0 0.0
    %476 = vmatprep.subr.mxu0 0.0
    %477 = vmatpush2.msra.mxu0 0.0
    %478 = vmatprep.subr.mxu0 0.0
    %479 = vmatpush2.msra.mxu0 0.0
    %480 = vmatprep.subr.mxu0 0.0
    %481 = vmatpush2.msra.mxu0 0.0
    %482 = vmatprep.subr.mxu0 0.0
    %483 = vmatpush2.msra.mxu0 0.0
    %484 = vmatprep.subr.mxu0 0.0
    %485 = vmatpush2.msra.mxu0 0.0
    %486 = vmatprep.subr.mxu0 0.0
    %487 = vmatpush2.msra.mxu0 0.0
    %488 = vmatprep.subr.mxu0 0.0
    %489 = vmatpush2.msra.mxu0 0.0
    %490 = vmatprep.subr.mxu0 0.0
    %491 = vmatpush2.msra.mxu0 0.0
    %492 = vmatprep.subr.mxu0 0.0
    %493 = vmatpush2.msra.mxu0 0.0
    %494 = vmatprep.subr.mxu0 0.0
    %495 = vmatpush2.msra.mxu0 0.0
    %496 = vmatprep.subr.mxu0 0.0
    %497 = vmatpush2.msra.mxu0 0.0
    %498 = vmatprep.subr.mxu0 0.0
    %499 = vmatpush2.msra.mxu0 0.0
    %500 = vmatprep.mubr.f32.mxu0 0.0
    %501 = vmatmul.mubr.f32.gmra.mxu0 %v430
    %v502 = vpop.f32.mrf.mxu0
    %v503 = vadd.f32 %v425, %v502
    %v504 = vpop.f32.mrf.mxu0
    %505 = vdwg.mxu0
    %v507 = vlaneseq
    %v508 = vshrl.u32 %v507, 7
    %v509 = vsub.s32 0, %v508
    %v510 = vrot.slane %v91, %v509
    %v512 = vadd.f32 %v503, %v510
    %v513 = vxor.u32 %v512, 2147483648
    %v514 = vmul.f32 %v513, 1.442695
    %v515 = vpow.pop %v514
    %v516 = vadd.f32 %v515, 1.0
    %v517 = vrcp.pop %v516
    %v518 = vmul.f32 1.0, %v517
    %v519 = vtanh.pop %v512
    %v520 = vmul.f32 %v518, %v160
    %522 = vrot.lane.b32.xlu0 %v519, 64
    %v523 = vpop.permute.xlu0 %522
    %v525 = vmul.f32 %v518, %v523
    %527 = vrot.lane.b32.xlu0 %v525, 32
    %v528 = vpop.permute.xlu0 %527
    %v530 = vadd.f32 %v520, %v528
    %v531 = vtanh.pop %v530
    %533 = vrot.lane.b32.xlu0 %v531, 64
    %v534 = vpop.permute.xlu0 %533
    %v536 = vmul.f32 %v518, %v534
    %538 = vrot.lane.b32.xlu0 %v536, 32
    %v539 = vpop.permute.xlu0 %538
    %v540 = vsel %vm173, %v539, 0
    %542 = vmatprep.subr.mxu0 0.0
    %543 = vmatpush1.msra.mxu0 0.0
    %544 = vmatprep.subr.mxu0 0.0
    %545 = vmatpush1.msra.mxu0 0.0
    %546 = vmatprep.subr.mxu0 0.0
    %547 = vmatpush1.msra.mxu0 0.0
    %548 = vmatprep.subr.mxu0 0.0
    %549 = vmatpush1.msra.mxu0 0.0
    %550 = vmatprep.subr.mxu0 0.0
    %551 = vmatpush1.msra.mxu0 0.0
    %552 = vmatprep.subr.mxu0 0.0
    %553 = vmatpush1.msra.mxu0 0.0
    %554 = vmatprep.subr.mxu0 0.0
    %555 = vmatpush1.msra.mxu0 0.0
    %556 = vmatprep.subr.mxu0 0.0
    %557 = vmatpush1.msra.mxu0 0.0
    %558 = vmatprep.subr.mxu0 0.0
    %559 = vmatpush1.msra.mxu0 0.0
    %560 = vmatprep.subr.mxu0 0.0
    %561 = vmatpush1.msra.mxu0 0.0
    %562 = vmatprep.subr.mxu0 0.0
    %563 = vmatpush1.msra.mxu0 0.0
    %564 = vmatprep.subr.mxu0 0.0
    %565 = vmatpush1.msra.mxu0 0.0
    %566 = vmatprep.subr.mxu0 %v107
    %567 = vmatpush1.msra.mxu0 %v106
    %568 = vmatprep.subr.mxu0 %v105
    %569 = vmatpush1.msra.mxu0 %v104
    %570 = vmatprep.subr.mxu0 %v103
    %571 = vmatpush1.msra.mxu0 %v102
    %572 = vmatprep.subr.mxu0 %v101
    %573 = vmatpush1.msra.mxu0 %v100
    %574 = vmatprep.subr.mxu0 0.0
    %575 = vmatpush2.msra.mxu0 0.0
    %576 = vmatprep.subr.mxu0 0.0
    %577 = vmatpush2.msra.mxu0 0.0
    %578 = vmatprep.subr.mxu0 0.0
    %579 = vmatpush2.msra.mxu0 0.0
    %580 = vmatprep.subr.mxu0 0.0
    %581 = vmatpush2.msra.mxu0 0.0
    %582 = vmatprep.subr.mxu0 0.0
    %583 = vmatpush2.msra.mxu0 0.0
    %584 = vmatprep.subr.mxu0 0.0
    %585 = vmatpush2.msra.mxu0 0.0
    %586 = vmatprep.subr.mxu0 0.0
    %587 = vmatpush2.msra.mxu0 0.0
    %588 = vmatprep.subr.mxu0 0.0
    %589 = vmatpush2.msra.mxu0 0.0
    %590 = vmatprep.subr.mxu0 0.0
    %591 = vmatpush2.msra.mxu0 0.0
    %592 = vmatprep.subr.mxu0 0.0
    %593 = vmatpush2.msra.mxu0 0.0
    %594 = vmatprep.subr.mxu0 0.0
    %595 = vmatpush2.msra.mxu0 0.0
    %596 = vmatprep.subr.mxu0 0.0
    %597 = vmatpush2.msra.mxu0 0.0
    %598 = vmatprep.subr.mxu0 0.0
    %599 = vmatpush2.msra.mxu0 0.0
    %600 = vmatprep.subr.mxu0 0.0
    %601 = vmatpush2.msra.mxu0 0.0
    %602 = vmatprep.subr.mxu0 0.0
    %603 = vmatpush2.msra.mxu0 0.0
    %604 = vmatprep.subr.mxu0 0.0
    %605 = vmatpush2.msra.mxu0 0.0
    %606 = vmatprep.mubr.f32.mxu0 0.0
    %607 = vmatmul.mubr.f32.gmra.mxu0 %v540
    %v608 = vpop.f32.mrf.mxu0
    %v609 = vadd.f32 0.0, %v608
    %v610 = vpop.f32.mrf.mxu0
    %v611 = vadd.f32 0.0, %v610
    %612 = vdwg.mxu0
    %614 = vrot.lane.b32.xlu0 %v350, 32
    %v615 = vpop.permute.xlu0 %614
    %v616 = vsel %vm173, %v615, 0
    %618 = vmatprep.subr.mxu0 0.0
    %619 = vmatpush1.msra.mxu0 0.0
    %620 = vmatprep.subr.mxu0 0.0
    %621 = vmatpush1.msra.mxu0 0.0
    %622 = vmatprep.subr.mxu0 0.0
    %623 = vmatpush1.msra.mxu0 0.0
    %624 = vmatprep.subr.mxu0 0.0
    %625 = vmatpush1.msra.mxu0 0.0
    %626 = vmatprep.subr.mxu0 0.0
    %627 = vmatpush1.msra.mxu0 0.0
    %628 = vmatprep.subr.mxu0 0.0
    %629 = vmatpush1.msra.mxu0 0.0
    %630 = vmatprep.subr.mxu0 0.0
    %631 = vmatpush1.msra.mxu0 0.0
    %632 = vmatprep.subr.mxu0 0.0
    %633 = vmatpush1.msra.mxu0 0.0
    %634 = vmatprep.subr.mxu0 0.0
    %635 = vmatpush1.msra.mxu0 0.0
    %636 = vmatprep.subr.mxu0 0.0
    %637 = vmatpush1.msra.mxu0 0.0
    %638 = vmatprep.subr.mxu0 0.0
    %639 = vmatpush1.msra.mxu0 0.0
    %640 = vmatprep.subr.mxu0 0.0
    %641 = vmatpush1.msra.mxu0 0.0
    %642 = vmatprep.subr.mxu0 %v99
    %643 = vmatpush1.msra.mxu0 %v98
    %644 = vmatprep.subr.mxu0 %v97
    %645 = vmatpush1.msra.mxu0 %v96
    %646 = vmatprep.subr.mxu0 %v95
    %647 = vmatpush1.msra.mxu0 %v94
    %648 = vmatprep.subr.mxu0 %v93
    %649 = vmatpush1.msra.mxu0 %v92
    %650 = vmatprep.subr.mxu0 0.0
    %651 = vmatpush2.msra.mxu0 0.0
    %652 = vmatprep.subr.mxu0 0.0
    %653 = vmatpush2.msra.mxu0 0.0
    %654 = vmatprep.subr.mxu0 0.0
    %655 = vmatpush2.msra.mxu0 0.0
    %656 = vmatprep.subr.mxu0 0.0
    %657 = vmatpush2.msra.mxu0 0.0
    %658 = vmatprep.subr.mxu0 0.0
    %659 = vmatpush2.msra.mxu0 0.0
    %660 = vmatprep.subr.mxu0 0.0
    %661 = vmatpush2.msra.mxu0 0.0
    %662 = vmatprep.subr.mxu0 0.0
    %663 = vmatpush2.msra.mxu0 0.0
    %664 = vmatprep.subr.mxu0 0.0
    %665 = vmatpush2.msra.mxu0 0.0
    %666 = vmatprep.subr.mxu0 0.0
    %667 = vmatpush2.msra.mxu0 0.0
    %668 = vmatprep.subr.mxu0 0.0
    %669 = vmatpush2.msra.mxu0 0.0
    %670 = vmatprep.subr.mxu0 0.0
    %671 = vmatpush2.msra.mxu0 0.0
    %672 = vmatprep.subr.mxu0 0.0
    %673 = vmatpush2.msra.mxu0 0.0
    %674 = vmatprep.subr.mxu0 0.0
    %675 = vmatpush2.msra.mxu0 0.0
    %676 = vmatprep.subr.mxu0 0.0
    %677 = vmatpush2.msra.mxu0 0.0
    %678 = vmatprep.subr.mxu0 0.0
    %679 = vmatpush2.msra.mxu0 0.0
    %680 = vmatprep.subr.mxu0 0.0
    %681 = vmatpush2.msra.mxu0 0.0
    %682 = vmatprep.mubr.f32.mxu0 0.0
    %683 = vmatmul.mubr.f32.gmra.mxu0 %v616
    %v684 = vpop.f32.mrf.mxu0
    %v685 = vadd.f32 %v609, %v684
    %v686 = vpop.f32.mrf.mxu0
    %v687 = vadd.f32 %v611, %v686
    %688 = vdwg.mxu0
    %690 = vrot.lane.b32.xlu0 %v161, 64
    %v691 = vpop.permute.xlu0 %690
    %vm692 = vcmask 523264
    %v693 = vsel %vm692, %v691, 0
    %695 = vmatprep.subr.mxu0 0.0
    %696 = vmatpush1.msra.mxu0 0.0
    %697 = vmatprep.subr.mxu0 0.0
    %698 = vmatpush1.msra.mxu0 0.0
    %699 = vmatprep.subr.mxu0 0.0
    %700 = vmatpush1.msra.mxu0 0.0
    %701 = vmatprep.subr.mxu0 0.0
    %702 = vmatpush1.msra.mxu0 0.0
    %703 = vmatprep.subr.mxu0 0.0
    %704 = vmatpush1.msra.mxu0 0.0
    %705 = vmatprep.subr.mxu0 0.0
    %706 = vmatpush1.msra.mxu0 0.0
    %707 = vmatprep.subr.mxu0 0.0
    %708 = vmatpush1.msra.mxu0 0.0
    %709 = vmatprep.subr.mxu0 0.0
    %710 = vmatpush1.msra.mxu0 0.0
    %711 = vmatprep.subr.mxu0 %v123
    %712 = vmatpush1.msra.mxu0 %v122
    %713 = vmatprep.subr.mxu0 %v121
    %714 = vmatpush1.msra.mxu0 %v120
    %715 = vmatprep.subr.mxu0 %v119
    %716 = vmatpush1.msra.mxu0 %v118
    %717 = vmatprep.subr.mxu0 %v117
    %718 = vmatpush1.msra.mxu0 %v116
    %719 = vmatprep.subr.mxu0 %v115
    %720 = vmatpush1.msra.mxu0 %v114
    %721 = vmatprep.subr.mxu0 %v113
    %722 = vmatpush1.msra.mxu0 %v112
    %723 = vmatprep.subr.mxu0 %v111
    %724 = vmatpush1.msra.mxu0 %v110
    %725 = vmatprep.subr.mxu0 %v109
    %726 = vmatpush1.msra.mxu0 %v108
    %727 = vmatprep.subr.mxu0 0.0
    %728 = vmatpush2.msra.mxu0 0.0
    %729 = vmatprep.subr.mxu0 0.0
    %730 = vmatpush2.msra.mxu0 0.0
    %731 = vmatprep.subr.mxu0 0.0
    %732 = vmatpush2.msra.mxu0 0.0
    %733 = vmatprep.subr.mxu0 0.0
    %734 = vmatpush2.msra.mxu0 0.0
    %735 = vmatprep.subr.mxu0 0.0
    %736 = vmatpush2.msra.mxu0 0.0
    %737 = vmatprep.subr.mxu0 0.0
    %738 = vmatpush2.msra.mxu0 0.0
    %739 = vmatprep.subr.mxu0 0.0
    %740 = vmatpush2.msra.mxu0 0.0
    %741 = vmatprep.subr.mxu0 0.0
    %742 = vmatpush2.msra.mxu0 0.0
    %743 = vmatprep.subr.mxu0 0.0
    %744 = vmatpush2.msra.mxu0 0.0
    %745 = vmatprep.subr.mxu0 0.0
    %746 = vmatpush2.msra.mxu0 0.0
    %747 = vmatprep.subr.mxu0 0.0
    %748 = vmatpush2.msra.mxu0 0.0
    %749 = vmatprep.subr.mxu0 0.0
    %750 = vmatpush2.msra.mxu0 0.0
    %751 = vmatprep.subr.mxu0 0.0
    %752 = vmatpush2.msra.mxu0 0.0
    %753 = vmatprep.subr.mxu0 0.0
    %754 = vmatpush2.msra.mxu0 0.0
    %755 = vmatprep.subr.mxu0 0.0
    %756 = vmatpush2.msra.mxu0 0.0
    %757 = vmatprep.subr.mxu0 0.0
    %758 = vmatpush2.msra.mxu0 0.0
    %759 = vmatprep.mubr.f32.mxu0 0.0
    %760 = vmatmul.mubr.f32.gmra.mxu0 %v693
    %v761 = vpop.f32.mrf.mxu0
    %v762 = vadd.f32 0.0, %v761
    %v763 = vpop.f32.mrf.mxu0
    %v764 = vadd.f32 0.0, %v763
    %765 = vdwg.mxu0
    %v766 = vadd.f32 %v685, %v762
    %v767 = vadd.f32 %v687, %v764
    %v769 = vlaneseq
    %v770 = vshrl.u32 %v769, 7
    %v771 = vsub.s32 0, %v770
    %v772 = vrot.slane %v124, %v771
    %v773 = vlaneseq
    %v774 = vshrl.u32 %v773, 7
    %v775 = vsub.s32 1, %v774
    %v776 = vrot.slane %v124, %v775
    %v779 = vadd.f32 %v766, %v772
    %v780 = vadd.f32 %v767, %v776
    %v781 = vxor.u32 %v779, 2147483648
    %v782 = vmul.f32 %v781, 1.442695
    %v783 = vpow.pop %v782
    %v784 = vadd.f32 %v783, 1.0
    %v785 = vrcp.pop %v784
    %v786 = vmul.f32 1.0, %v785
    %v787 = vtanh.pop %v780
    %v788 = vxor.u32 %v780, 2147483648
    %v789 = vmul.f32 %v788, 1.442695
    %v790 = vpow.pop %v789
    %v791 = vadd.f32 %v790, 1.0
    %v792 = vrcp.pop %v791
    %v793 = vmul.f32 1.0, %v792
    %v794 = vmul.f32 %v786, %v162
    %v795 = vmul.f32 %v786, %v787
    %797 = vrot.lane.b32.xlu0 %v795, 64
    %v798 = vpop.permute.xlu0 %797
    %v800 = vadd.f32 %v794, %v798
    %v801 = vtanh.pop %v800
    %v802 = vmul.f32 %v793, %v801
    %804 = vrot.lane.b32.xlu0 %v163, 32
    %v805 = vpop.permute.xlu0 %804
    %v806 = vsel %vm173, %v805, 0
    %808 = vmatprep.subr.mxu0 0.0
    %809 = vmatpush1.msra.mxu0 0.0
    %810 = vmatprep.subr.mxu0 0.0
    %811 = vmatpush1.msra.mxu0 0.0
    %812 = vmatprep.subr.mxu0 0.0
    %813 = vmatpush1.msra.mxu0 0.0
    %814 = vmatprep.subr.mxu0 0.0
    %815 = vmatpush1.msra.mxu0 0.0
    %816 = vmatprep.subr.mxu0 0.0
    %817 = vmatpush1.msra.mxu0 0.0
    %818 = vmatprep.subr.mxu0 0.0
    %819 = vmatpush1.msra.mxu0 0.0
    %820 = vmatprep.subr.mxu0 0.0
    %821 = vmatpush1.msra.mxu0 0.0
    %822 = vmatprep.subr.mxu0 0.0
    %823 = vmatpush1.msra.mxu0 0.0
    %824 = vmatprep.subr.mxu0 0.0
    %825 = vmatpush1.msra.mxu0 0.0
    %826 = vmatprep.subr.mxu0 0.0
    %827 = vmatpush1.msra.mxu0 0.0
    %828 = vmatprep.subr.mxu0 0.0
    %829 = vmatpush1.msra.mxu0 0.0
    %830 = vmatprep.subr.mxu0 0.0
    %831 = vmatpush1.msra.mxu0 0.0
    %832 = vmatprep.subr.mxu0 0.0
    %833 = vmatpush1.msra.mxu0 %v136
    %834 = vmatprep.subr.mxu0 0.0
    %835 = vmatpush1.msra.mxu0 %v135
    %836 = vmatprep.subr.mxu0 0.0
    %837 = vmatpush1.msra.mxu0 %v134
    %838 = vmatprep.subr.mxu0 0.0
    %839 = vmatpush1.msra.mxu0 %v133
    %840 = vmatprep.subr.mxu0 0.0
    %841 = vmatpush2.msra.mxu0 0.0
    %842 = vmatprep.subr.mxu0 0.0
    %843 = vmatpush2.msra.mxu0 0.0
    %844 = vmatprep.subr.mxu0 0.0
    %845 = vmatpush2.msra.mxu0 0.0
    %846 = vmatprep.subr.mxu0 0.0
    %847 = vmatpush2.msra.mxu0 0.0
    %848 = vmatprep.subr.mxu0 0.0
    %849 = vmatpush2.msra.mxu0 0.0
    %850 = vmatprep.subr.mxu0 0.0
    %851 = vmatpush2.msra.mxu0 0.0
    %852 = vmatprep.subr.mxu0 0.0
    %853 = vmatpush2.msra.mxu0 0.0
    %854 = vmatprep.subr.mxu0 0.0
    %855 = vmatpush2.msra.mxu0 0.0
    %856 = vmatprep.subr.mxu0 0.0
    %857 = vmatpush2.msra.mxu0 0.0
    %858 = vmatprep.subr.mxu0 0.0
    %859 = vmatpush2.msra.mxu0 0.0
    %860 = vmatprep.subr.mxu0 0.0
    %861 = vmatpush2.msra.mxu0 0.0
    %862 = vmatprep.subr.mxu0 0.0
    %863 = vmatpush2.msra.mxu0 0.0
    %864 = vmatprep.subr.mxu0 0.0
    %865 = vmatpush2.msra.mxu0 0.0
    %866 = vmatprep.subr.mxu0 0.0
    %867 = vmatpush2.msra.mxu0 0.0
    %868 = vmatprep.subr.mxu0 0.0
    %869 = vmatpush2.msra.mxu0 0.0
    %870 = vmatprep.subr.mxu0 0.0
    %871 = vmatpush2.msra.mxu0 0.0
    %872 = vmatprep.mubr.f32.mxu0 0.0
    %873 = vmatmul.mubr.f32.gmra.mxu0 %v806
    %v874 = vpop.f32.mrf.mxu0
    %v875 = vadd.f32 0.0, %v874
    %v876 = vpop.f32.mrf.mxu0
    %877 = vdwg.mxu0
    %879 = vrot.lane.b32.xlu0 %v802, 64
    %v880 = vpop.permute.xlu0 %879
    %v881 = vsel %vm692, %v880, 0
    %883 = vmatprep.subr.mxu0 0.0
    %884 = vmatpush1.msra.mxu0 0.0
    %885 = vmatprep.subr.mxu0 0.0
    %886 = vmatpush1.msra.mxu0 0.0
    %887 = vmatprep.subr.mxu0 0.0
    %888 = vmatpush1.msra.mxu0 0.0
    %889 = vmatprep.subr.mxu0 0.0
    %890 = vmatpush1.msra.mxu0 0.0
    %891 = vmatprep.subr.mxu0 0.0
    %892 = vmatpush1.msra.mxu0 0.0
    %893 = vmatprep.subr.mxu0 0.0
    %894 = vmatpush1.msra.mxu0 0.0
    %895 = vmatprep.subr.mxu0 0.0
    %896 = vmatpush1.msra.mxu0 0.0
    %897 = vmatprep.subr.mxu0 0.0
    %898 = vmatpush1.msra.mxu0 0.0
    %899 = vmatprep.subr.mxu0 0.0
    %900 = vmatpush1.msra.mxu0 %v132
    %901 = vmatprep.subr.mxu0 0.0
    %902 = vmatpush1.msra.mxu0 %v131
    %903 = vmatprep.subr.mxu0 0.0
    %904 = vmatpush1.msra.mxu0 %v130
    %905 = vmatprep.subr.mxu0 0.0
    %906 = vmatpush1.msra.mxu0 %v129
    %907 = vmatprep.subr.mxu0 0.0
    %908 = vmatpush1.msra.mxu0 %v128
    %909 = vmatprep.subr.mxu0 0.0
    %910 = vmatpush1.msra.mxu0 %v127
    %911 = vmatprep.subr.mxu0 0.0
    %912 = vmatpush1.msra.mxu0 %v126
    %913 = vmatprep.subr.mxu0 0.0
    %914 = vmatpush1.msra.mxu0 %v125
    %915 = vmatprep.subr.mxu0 0.0
    %916 = vmatpush2.msra.mxu0 0.0
    %917 = vmatprep.subr.mxu0 0.0
    %918 = vmatpush2.msra.mxu0 0.0
    %919 = vmatprep.subr.mxu0 0.0
    %920 = vmatpush2.msra.mxu0 0.0
    %921 = vmatprep.subr.mxu0 0.0
    %922 = vmatpush2.msra.mxu0 0.0
    %923 = vmatprep.subr.mxu0 0.0
    %924 = vmatpush2.msra.mxu0 0.0
    %925 = vmatprep.subr.mxu0 0.0
    %926 = vmatpush2.msra.mxu0 0.0
    %927 = vmatprep.subr.mxu0 0.0
    %928 = vmatpush2.msra.mxu0 0.0
    %929 = vmatprep.subr.mxu0 0.0
    %930 = vmatpush2.msra.mxu0 0.0
    %931 = vmatprep.subr.mxu0 0.0
    %932 = vmatpush2.msra.mxu0 0.0
    %933 = vmatprep.subr.mxu0 0.0
    %934 = vmatpush2.msra.mxu0 0.0
    %935 = vmatprep.subr.mxu0 0.0
    %936 = vmatpush2.msra.mxu0 0.0
    %937 = vmatprep.subr.mxu0 0.0
    %938 = vmatpush2.msra.mxu0 0.0
    %939 = vmatprep.subr.mxu0 0.0
    %940 = vmatpush2.msra.mxu0 0.0
    %941 = vmatprep.subr.mxu0 0.0
    %942 = vmatpush2.msra.mxu0 0.0
    %943 = vmatprep.subr.mxu0 0.0
    %944 = vmatpush2.msra.mxu0 0.0
    %945 = vmatprep.subr.mxu0 0.0
    %946 = vmatpush2.msra.mxu0 0.0
    %947 = vmatprep.mubr.f32.mxu0 0.0
    %948 = vmatmul.mubr.f32.gmra.mxu0 %v881
    %v949 = vpop.f32.mrf.mxu0
    %v950 = vadd.f32 %v875, %v949
    %v951 = vpop.f32.mrf.mxu0
    %952 = vdwg.mxu0
    %v954 = vlaneseq
    %v955 = vshrl.u32 %v954, 7
    %v956 = vsub.s32 0, %v955
    %v957 = vrot.slane %v137, %v956
    %v959 = vadd.f32 %v950, %v957
    %v960 = vxor.u32 %v959, 2147483648
    %v961 = vmul.f32 %v960, 1.442695
    %v962 = vpow.pop %v961
    %v963 = vadd.f32 %v962, 1.0
    %v964 = vrcp.pop %v963
    %v965 = vmul.f32 1.0, %v964
    %v966 = vtanh.pop %v959
    %v967 = vmul.f32 %v965, %v164
    %969 = vrot.lane.b32.xlu0 %v966, 64
    %v970 = vpop.permute.xlu0 %969
    %v972 = vmul.f32 %v965, %v970
    %974 = vrot.lane.b32.xlu0 %v972, 32
    %v975 = vpop.permute.xlu0 %974
    %v977 = vadd.f32 %v967, %v975
    %v978 = vtanh.pop %v977
    %980 = vrot.lane.b32.xlu0 %v978, 64
    %v981 = vpop.permute.xlu0 %980
    %v983 = vmul.f32 %v965, %v981
    %985 = vrot.lane.b32.xlu0 %v165, 32
    %v986 = vpop.permute.xlu0 %985
    %v987 = vsel %vm173, %v986, 0
    %989 = vmatprep.subr.mxu0 0.0
    %990 = vmatpush1.msra.mxu0 0.0
    %991 = vmatprep.subr.mxu0 0.0
    %992 = vmatpush1.msra.mxu0 0.0
    %993 = vmatprep.subr.mxu0 0.0
    %994 = vmatpush1.msra.mxu0 0.0
    %995 = vmatprep.subr.mxu0 0.0
    %996 = vmatpush1.msra.mxu0 0.0
    %997 = vmatprep.subr.mxu0 0.0
    %998 = vmatpush1.msra.mxu0 0.0
    %999 = vmatprep.subr.mxu0 0.0
    %1000 = vmatpush1.msra.mxu0 0.0
    %1001 = vmatprep.subr.mxu0 0.0
    %1002 = vmatpush1.msra.mxu0 0.0
    %1003 = vmatprep.subr.mxu0 0.0
    %1004 = vmatpush1.msra.mxu0 0.0
    %1005 = vmatprep.subr.mxu0 0.0
    %1006 = vmatpush1.msra.mxu0 0.0
    %1007 = vmatprep.subr.mxu0 0.0
    %1008 = vmatpush1.msra.mxu0 0.0
    %1009 = vmatprep.subr.mxu0 0.0
    %1010 = vmatpush1.msra.mxu0 0.0
    %1011 = vmatprep.subr.mxu0 0.0
    %1012 = vmatpush1.msra.mxu0 0.0
    %1013 = vmatprep.subr.mxu0 0.0
    %1014 = vmatpush1.msra.mxu0 %v149
    %1015 = vmatprep.subr.mxu0 0.0
    %1016 = vmatpush1.msra.mxu0 %v148
    %1017 = vmatprep.subr.mxu0 0.0
    %1018 = vmatpush1.msra.mxu0 %v147
    %1019 = vmatprep.subr.mxu0 0.0
    %1020 = vmatpush1.msra.mxu0 %v146
    %1021 = vmatprep.subr.mxu0 0.0
    %1022 = vmatpush2.msra.mxu0 0.0
    %1023 = vmatprep.subr.mxu0 0.0
    %1024 = vmatpush2.msra.mxu0 0.0
    %1025 = vmatprep.subr.mxu0 0.0
    %1026 = vmatpush2.msra.mxu0 0.0
    %1027 = vmatprep.subr.mxu0 0.0
    %1028 = vmatpush2.msra.mxu0 0.0
    %1029 = vmatprep.subr.mxu0 0.0
    %1030 = vmatpush2.msra.mxu0 0.0
    %1031 = vmatprep.subr.mxu0 0.0
    %1032 = vmatpush2.msra.mxu0 0.0
    %1033 = vmatprep.subr.mxu0 0.0
    %1034 = vmatpush2.msra.mxu0 0.0
    %1035 = vmatprep.subr.mxu0 0.0
    %1036 = vmatpush2.msra.mxu0 0.0
    %1037 = vmatprep.subr.mxu0 0.0
    %1038 = vmatpush2.msra.mxu0 0.0
    %1039 = vmatprep.subr.mxu0 0.0
    %1040 = vmatpush2.msra.mxu0 0.0
    %1041 = vmatprep.subr.mxu0 0.0
    %1042 = vmatpush2.msra.mxu0 0.0
    %1043 = vmatprep.subr.mxu0 0.0
    %1044 = vmatpush2.msra.mxu0 0.0
    %1045 = vmatprep.subr.mxu0 0.0
    %1046 = vmatpush2.msra.mxu0 0.0
    %1047 = vmatprep.subr.mxu0 0.0
    %1048 = vmatpush2.msra.mxu0 0.0
    %1049 = vmatprep.subr.mxu0 0.0
    %1050 = vmatpush2.msra.mxu0 0.0
    %1051 = vmatprep.subr.mxu0 0.0
    %1052 = vmatpush2.msra.mxu0 0.0
    %1053 = vmatprep.mubr.f32.mxu0 0.0
    %1054 = vmatmul.mubr.f32.gmra.mxu0 %v987
    %v1055 = vpop.f32.mrf.mxu0
    %v1056 = vadd.f32 0.0, %v1055
    %v1057 = vpop.f32.mrf.mxu0
    %1058 = vdwg.mxu0
    %1059 = vmatprep.subr.mxu0 0.0
    %1060 = vmatpush1.msra.mxu0 0.0
    %1061 = vmatprep.subr.mxu0 0.0
    %1062 = vmatpush1.msra.mxu0 0.0
    %1063 = vmatprep.subr.mxu0 0.0
    %1064 = vmatpush1.msra.mxu0 0.0
    %1065 = vmatprep.subr.mxu0 0.0
    %1066 = vmatpush1.msra.mxu0 0.0
    %1067 = vmatprep.subr.mxu0 0.0
    %1068 = vmatpush1.msra.mxu0 0.0
    %1069 = vmatprep.subr.mxu0 0.0
    %1070 = vmatpush1.msra.mxu0 0.0
    %1071 = vmatprep.subr.mxu0 0.0
    %1072 = vmatpush1.msra.mxu0 0.0
    %1073 = vmatprep.subr.mxu0 0.0
    %1074 = vmatpush1.msra.mxu0 0.0
    %1075 = vmatprep.subr.mxu0 0.0
    %1076 = vmatpush1.msra.mxu0 %v145
    %1077 = vmatprep.subr.mxu0 0.0
    %1078 = vmatpush1.msra.mxu0 %v144
    %1079 = vmatprep.subr.mxu0 0.0
    %1080 = vmatpush1.msra.mxu0 %v143
    %1081 = vmatprep.subr.mxu0 0.0
    %1082 = vmatpush1.msra.mxu0 %v142
    %1083 = vmatprep.subr.mxu0 0.0
    %1084 = vmatpush1.msra.mxu0 %v141
    %1085 = vmatprep.subr.mxu0 0.0
    %1086 = vmatpush1.msra.mxu0 %v140
    %1087 = vmatprep.subr.mxu0 0.0
    %1088 = vmatpush1.msra.mxu0 %v139
    %1089 = vmatprep.subr.mxu0 0.0
    %1090 = vmatpush1.msra.mxu0 %v138
    %1091 = vmatprep.subr.mxu0 0.0
    %1092 = vmatpush2.msra.mxu0 0.0
    %1093 = vmatprep.subr.mxu0 0.0
    %1094 = vmatpush2.msra.mxu0 0.0
    %1095 = vmatprep.subr.mxu0 0.0
    %1096 = vmatpush2.msra.mxu0 0.0
    %1097 = vmatprep.subr.mxu0 0.0
    %1098 = vmatpush2.msra.mxu0 0.0
    %1099 = vmatprep.subr.mxu0 0.0
    %1100 = vmatpush2.msra.mxu0 0.0
    %1101 = vmatprep.subr.mxu0 0.0
    %1102 = vmatpush2.msra.mxu0 0.0
    %1103 = vmatprep.subr.mxu0 0.0
    %1104 = vmatpush2.msra.mxu0 0.0
    %1105 = vmatprep.subr.mxu0 0.0
    %1106 = vmatpush2.msra.mxu0 0.0
    %1107 = vmatprep.subr.mxu0 0.0
    %1108 = vmatpush2.msra.mxu0 0.0
    %1109 = vmatprep.subr.mxu0 0.0
    %1110 = vmatpush2.msra.mxu0 0.0
    %1111 = vmatprep.subr.mxu0 0.0
    %1112 = vmatpush2.msra.mxu0 0.0
    %1113 = vmatprep.subr.mxu0 0.0
    %1114 = vmatpush2.msra.mxu0 0.0
    %1115 = vmatprep.subr.mxu0 0.0
    %1116 = vmatpush2.msra.mxu0 0.0
    %1117 = vmatprep.subr.mxu0 0.0
    %1118 = vmatpush2.msra.mxu0 0.0
    %1119 = vmatprep.subr.mxu0 0.0
    %1120 = vmatpush2.msra.mxu0 0.0
    %1121 = vmatprep.subr.mxu0 0.0
    %1122 = vmatpush2.msra.mxu0 0.0
    %1123 = vmatprep.mubr.f32.mxu0 0.0
    %1124 = vmatmul.mubr.f32.gmra.mxu0 %v881
    %v1125 = vpop.f32.mrf.mxu0
    %v1126 = vadd.f32 %v1056, %v1125
    %v1127 = vpop.f32.mrf.mxu0
    %1128 = vdwg.mxu0
    %v1130 = vlaneseq
    %v1131 = vshrl.u32 %v1130, 7
    %v1132 = vsub.s32 0, %v1131
    %v1133 = vrot.slane %v150, %v1132
    %v1135 = vadd.f32 %v1126, %v1133
    %v1136 = vxor.u32 %v1135, 2147483648
    %v1137 = vmul.f32 %v1136, 1.442695
    %v1138 = vpow.pop %v1137
    %v1139 = vadd.f32 %v1138, 1.0
    %v1140 = vrcp.pop %v1139
    %v1141 = vmul.f32 1.0, %v1140
    %v1142 = vtanh.pop %v1135
    %v1143 = vmul.f32 %v1141, %v166
    %1145 = vrot.lane.b32.xlu0 %v1142, 64
    %v1146 = vpop.permute.xlu0 %1145
    %v1148 = vmul.f32 %v1141, %v1146
    %1150 = vrot.lane.b32.xlu0 %v1148, 32
    %v1151 = vpop.permute.xlu0 %1150
    %v1153 = vadd.f32 %v1143, %v1151
    %v1154 = vtanh.pop %v1153
    %1156 = vrot.lane.b32.xlu0 %v1154, 64
    %v1157 = vpop.permute.xlu0 %1156
    %v1159 = vmul.f32 %v1141, %v1157
    %1161 = vrot.lane.b32.xlu0 %v983, 32
    %v1162 = vpop.permute.xlu0 %1161
    %s1164 = scalar_lea.vmem %s18, %s167
    %vm1165 = vcmask 254976
    %1166 = vst.msk [vmem:[%s1164] sm:$0x3] %vm1165, %v1162
    %1168 = vrot.lane.b32.xlu0 %v1159, 32
    %v1169 = vpop.permute.xlu0 %1168
    %s1171 = scalar_lea.vmem %s19, %s167
    %1172 = vst.msk [vmem:[%s1171] sm:$0x3] %vm1165, %v1169
  $region78: #{hstasnet_forward.5} parent=0 // loop_footer
    %s156 = sadd.s32 1, %s152
  $region79: #{hstasnet_forward.5} parent=0 // loop_footer_branch
    %151 = sbr.rel target = $region75
  $region80: #{hstasnet_forward.5} parent=0 // loop_exit
    _
  // Predicated region
  $region81: #{hstasnet_forward.5} parent=0 // pred_check
    _
  $region82: #{hstasnet_forward.5} parent=0 // pred_check_branch
    %1174 = sbr.rel (0) target = $region84
  $region83: #{hstasnet_forward.5} parent=0 // pred_region
    _
  $region84: #{hstasnet_forward.5} parent=0 // pred_fallthru
    _
  // Predicated region
  $region85: #{hstasnet_forward.5} parent=0 // pred_check
    _
  $region86: #{hstasnet_forward.5} parent=0 // pred_check_branch
    %1176 = sbr.rel (0) target = $region88
  $region87: #{hstasnet_forward.5} parent=0 // pred_region
    _
  $region88: #{hstasnet_forward.5} parent=0 // pred_fallthru
    _
  // Predicated region
  $region89: #{hstasnet_forward.5} parent=0 // pred_check
    _
  $region90: #{hstasnet_forward.5} parent=0 // pred_check_branch
    %1178 = sbr.rel (0) target = $region92
  $region91: #{hstasnet_forward.5} parent=0 // pred_region
    _
  $region92: #{hstasnet_forward.5} parent=0 // pred_fallthru
    _
  // Predicated region
  $region93: #{hstasnet_forward.5} parent=0 // pred_check
    _
  $region94: #{hstasnet_forward.5} parent=0 // pred_check_branch
    %1180 = sbr.rel (0) target = $region96
  $region95: #{hstasnet_forward.5} parent=0 // pred_region
    _
  $region96: #{hstasnet_forward.5} parent=0 // pred_fallthru
    _

// kernel: hstasnet_forward.7
$region0: #{hstasnet_forward.7}
  #allocation0 [shape = 'u32[]', space=smem, size = 0x4, offset = 0x4, fixed_abs, tag = 'smem constant byte address 0x4 - core index']
  #allocation1 [shape = 'u32[144,128]{1,0:T(1,128)}', space=vmem, size = 0x12000, scoped, tag = 'internal scratch']
  %s0 = inlined_call_operand.vmem [shape: f32[16,32], index: 0, kind: input, shape index: {}]
  %s1 = inlined_call_operand.vmem [shape: f32[16,66], index: 1, kind: input, shape index: {}]
  %s2 = inlined_call_operand.vmem [shape: f32[16,66], index: 2, kind: input, shape index: {}]
  %s3 = inlined_call_operand.vmem [shape: f32[66,32], index: 3, kind: input, shape index: {}]
  %s4 = inlined_call_operand.vmem [shape: f32[1,32], index: 4, kind: input, shape index: {}]
  %s5 = inlined_call_operand.vmem [shape: f32[2,32,66], index: 5, kind: input, shape index: {}]
  %s6 = inlined_call_operand.vmem [shape: f32[2,1,66], index: 6, kind: input, shape index: {}]
  %s7 = inlined_call_operand.vmem [shape: f32[66,128], index: 7, kind: input, shape index: {}]
  %s8 = inlined_call_operand.vmem [shape: f32[66,128], index: 8, kind: input, shape index: {}]
  %s9 = inlined_call_operand.vmem [shape: f32[1,128], index: 9, kind: input, shape index: {}]
  %s10 = inlined_call_operand.vmem [shape: f32[2,16,128], index: 10, kind: output, shape index: {}]
  %s11 = sld [smem:[#allocation0]]
  $region73: #{hstasnet_forward.7} parent=0
    _
  %s13 = ssub.s32 1, %s11
  %s14 = scalar_select 0, %s13, %s11
  loop: start=0, step=1, limit=4
  $region2: #{hstasnet_forward.7} parent=0 // loop_pre_header
    _
  $region3: #{hstasnet_forward.7} parent=0 // loop_header
    %s16 = sphi 0, %s20
    %p17 = scmp.ge.s32.totalorder %s16, 4
    %s23 = sphi 0, %s35
    %s24 = sphi 0, %s31
    %s25 = sphi 0, %s23
    %s26 = sphi 0, %s24
    %s27 = sphi 0, %s25
    %s28 = sphi 0, %s26
    %s38 = sphi 0, %s40
    %s41 = sphi 0, %s38
    %s42 = sphi 0, %s41
    %s58 = sphi 0, %s42
    %s64 = sphi 0, %s66
    %s67 = sphi 0, %s64
    %s68 = sphi 0, %s67
    %s84 = sphi 0, %s68
    %s90 = sphi 0, %s92
    %s93 = sphi 0, %s90
    %s94 = sphi 0, %s93
    %s110 = sphi 0, %s94
    %s114 = sphi 0, %s114
    %s116 = sphi 0, %s114
    %s117 = sphi 0, %s116
    %s131 = sphi 0, %s117
    %s135 = sphi 0, %s135
    %s137 = sphi 0, %s135
    %s138 = sphi 0, %s137
    %s152 = sphi 0, %s138
    %s158 = sphi 0, %s160
    %s161 = sphi 0, %s158
    %s162 = sphi 0, %s161
    %s178 = sphi 0, %s162
    %s184 = sphi 0, %s186
    %s187 = sphi 0, %s184
    %s188 = sphi 0, %s187
    %s204 = sphi 0, %s188
    %s208 = sphi 0, %s208
    %s210 = sphi 0, %s208
    %s211 = sphi 0, %s210
    %s225 = sphi 0, %s211
    %s229 = sphi 0, %s229
    %s231 = sphi 0, %s229
    %s232 = sphi 0, %s231
    %s246 = sphi 0, %s232
    %s250 = sphi 0, %s250
    %s252 = sphi 0, %s250
    %s253 = sphi 0, %s252
    %s267 = sphi 0, %s253
    %s275 = sphi 0, %s277
    %s278 = sphi 0, %s275
    %s279 = sphi 0, %s278
    %s295 = sphi 0, %s279
  $region4: #{hstasnet_forward.7} parent=0 // loop_header_branch
    %19 = sbr.rel (%p17) target = $region8
  $region5: #{hstasnet_forward.7} parent=0 // loop_body
    %s21 = ssub.s32 %s16, 1
    %s22 = ssub.s32 %s16, 2
    %s29 = sadd.s32 1, %s24
    %p30 = scmp.ge.s32.totalorder %s29, 2
    %s31 = scalar_select %p30, 0, %s29
    %s32 = sadd.s32 1, %s23
    %s33 = scalar_select %p30, %s32, %s23
    %p34 = scmp.ge.s32.totalorder %s33, 1
    %s35 = scalar_select %p34, 0, %s33
    %s36 = ssub.s32 %s23, %s35
    %p37 = scmp.eq.s32.totalorder %s36, 0
    %s39 = sadd.s32 %s38, 1
    %s40 = scalar_select %p37, %s38, %s39
    %p43 = pneg %p37
    %p44 = scmp.eq.s32.totalorder %s16, 1
    %p45 = por %p43, %p44
    %p46 = scmp.ne.s32.totalorder %s38, %s41
    %p47 = scmp.eq.s32.totalorder %s16, 0
    %p48 = por %p46, %p47
    %p49 = scmp.ne.s32.totalorder %s38, %s41
    %p50 = scmp.eq.s32.totalorder %s21, 1
    %p51 = por %p49, %p50
    %p52 = scmp.ne.s32.totalorder %s41, %s42
    %p53 = scmp.eq.s32.totalorder %s21, 0
    %p54 = por %p52, %p53
    %p55 = scmp.ne.s32.totalorder %s41, %s42
    %p56 = scmp.eq.s32.totalorder %s22, 1
    %p57 = por %p55, %p56
    %p59 = scmp.ne.s32.totalorder %s42, %s58
    %p60 = scmp.eq.s32.totalorder %s22, 0
    %p61 = por %p59, %p60
    %s62 = ssub.s32 %s23, %s35
    %p63 = scmp.eq.s32.totalorder %s62, 0
    %s65 = sadd.s32 %s64, 1
    %s66 = scalar_select %p63, %s64, %s65
    %p69 = pneg %p63
    %p70 = scmp.eq.s32.totalorder %s16, 1
    %p71 = por %p69, %p70
    %p72 = scmp.ne.s32.totalorder %s64, %s67
    %p73 = scmp.eq.s32.totalorder %s16, 0
    %p74 = por %p72, %p73
    %p75 = scmp.ne.s32.totalorder %s64, %s67
    %p76 = scmp.eq.s32.totalorder %s21, 1
    %p77 = por %p75, %p76
    %p78 = scmp.ne.s32.totalorder %s67, %s68
    %p79 = scmp.eq.s32.totalorder %s21, 0
    %p80 = por %p78, %p79
    %p81 = scmp.ne.s32.totalorder %s67, %s68
    %p82 = scmp.eq.s32.totalorder %s22, 1
    %p83 = por %p81, %p82
    %p85 = scmp.ne.s32.totalorder %s68, %s84
    %p86 = scmp.eq.s32.totalorder %s22, 0
    %p87 = por %p85, %p86
    %s88 = ssub.s32 %s23, %s35
    %p89 = scmp.eq.s32.totalorder %s88, 0
    %s91 = sadd.s32 %s90, 1
    %s92 = scalar_select %p89, %s90, %s91
    %p95 = pneg %p89
    %p96 = scmp.eq.s32.totalorder %s16, 1
    %p97 = por %p95, %p96
    %p98 = scmp.ne.s32.totalorder %s90, %s93
    %p99 = scmp.eq.s32.totalorder %s16, 0
    %p100 = por %p98, %p99
    %p101 = scmp.ne.s32.totalorder %s90, %s93
    %p102 = scmp.eq.s32.totalorder %s21, 1
    %p103 = por %p101, %p102
    %p104 = scmp.ne.s32.totalorder %s93, %s94
    %p105 = scmp.eq.s32.totalorder %s21, 0
    %p106 = por %p104, %p105
    %p107 = scmp.ne.s32.totalorder %s93, %s94
    %p108 = scmp.eq.s32.totalorder %s22, 1
    %p109 = por %p107, %p108
    %p111 = scmp.ne.s32.totalorder %s94, %s110
    %p112 = scmp.eq.s32.totalorder %s22, 0
    %p113 = por %p111, %p112
    %s115 = sadd.s32 %s114, 1
    %p118 = scmp.eq.s32.totalorder %s16, 1
    %p119 = scmp.ne.s32.totalorder %s114, %s116
    %p120 = scmp.eq.s32.totalorder %s16, 0
    %p121 = por %p119, %p120
    %p122 = scmp.ne.s32.totalorder %s114, %s116
    %p123 = scmp.eq.s32.totalorder %s21, 1
    %p124 = por %p122, %p123
    %p125 = scmp.ne.s32.totalorder %s116, %s117
    %p126 = scmp.eq.s32.totalorder %s21, 0
    %p127 = por %p125, %p126
    %p128 = scmp.ne.s32.totalorder %s116, %s117
    %p129 = scmp.eq.s32.totalorder %s22, 1
    %p130 = por %p128, %p129
    %p132 = scmp.ne.s32.totalorder %s117, %s131
    %p133 = scmp.eq.s32.totalorder %s22, 0
    %p134 = por %p132, %p133
    %s136 = sadd.s32 %s135, 1
    %p139 = scmp.eq.s32.totalorder %s16, 1
    %p140 = scmp.ne.s32.totalorder %s135, %s137
    %p141 = scmp.eq.s32.totalorder %s16, 0
    %p142 = por %p140, %p141
    %p143 = scmp.ne.s32.totalorder %s135, %s137
    %p144 = scmp.eq.s32.totalorder %s21, 1
    %p145 = por %p143, %p144
    %p146 = scmp.ne.s32.totalorder %s137, %s138
    %p147 = scmp.eq.s32.totalorder %s21, 0
    %p148 = por %p146, %p147
    %p149 = scmp.ne.s32.totalorder %s137, %s138
    %p150 = scmp.eq.s32.totalorder %s22, 1
    %p151 = por %p149, %p150
    %p153 = scmp.ne.s32.totalorder %s138, %s152
    %p154 = scmp.eq.s32.totalorder %s22, 0
    %p155 = por %p153, %p154
    %s156 = ssub.s32 %s24, %s31
    %p157 = scmp.eq.s32.totalorder %s156, 0
    %s159 = sadd.s32 %s158, 1
    %s160 = scalar_select %p157, %s158, %s159
    %p163 = pneg %p157
    %p164 = scmp.eq.s32.totalorder %s16, 1
    %p165 = por %p163, %p164
    %p166 = scmp.ne.s32.totalorder %s158, %s161
    %p167 = scmp.eq.s32.totalorder %s16, 0
    %p168 = por %p166, %p167
    %p169 = scmp.ne.s32.totalorder %s158, %s161
    %p170 = scmp.eq.s32.totalorder %s21, 1
    %p171 = por %p169, %p170
    %p172 = scmp.ne.s32.totalorder %s161, %s162
    %p173 = scmp.eq.s32.totalorder %s21, 0
    %p174 = por %p172, %p173
    %p175 = scmp.ne.s32.totalorder %s161, %s162
    %p176 = scmp.eq.s32.totalorder %s22, 1
    %p177 = por %p175, %p176
    %p179 = scmp.ne.s32.totalorder %s162, %s178
    %p180 = scmp.eq.s32.totalorder %s22, 0
    %p181 = por %p179, %p180
    %s182 = ssub.s32 %s24, %s31
    %p183 = scmp.eq.s32.totalorder %s182, 0
    %s185 = sadd.s32 %s184, 1
    %s186 = scalar_select %p183, %s184, %s185
    %p189 = pneg %p183
    %p190 = scmp.eq.s32.totalorder %s16, 1
    %p191 = por %p189, %p190
    %p192 = scmp.ne.s32.totalorder %s184, %s187
    %p193 = scmp.eq.s32.totalorder %s16, 0
    %p194 = por %p192, %p193
    %p195 = scmp.ne.s32.totalorder %s184, %s187
    %p196 = scmp.eq.s32.totalorder %s21, 1
    %p197 = por %p195, %p196
    %p198 = scmp.ne.s32.totalorder %s187, %s188
    %p199 = scmp.eq.s32.totalorder %s21, 0
    %p200 = por %p198, %p199
    %p201 = scmp.ne.s32.totalorder %s187, %s188
    %p202 = scmp.eq.s32.totalorder %s22, 1
    %p203 = por %p201, %p202
    %p205 = scmp.ne.s32.totalorder %s188, %s204
    %p206 = scmp.eq.s32.totalorder %s22, 0
    %p207 = por %p205, %p206
    %s209 = sadd.s32 %s208, 1
    %p212 = scmp.eq.s32.totalorder %s16, 1
    %p213 = scmp.ne.s32.totalorder %s208, %s210
    %p214 = scmp.eq.s32.totalorder %s16, 0
    %p215 = por %p213, %p214
    %p216 = scmp.ne.s32.totalorder %s208, %s210
    %p217 = scmp.eq.s32.totalorder %s21, 1
    %p218 = por %p216, %p217
    %p219 = scmp.ne.s32.totalorder %s210, %s211
    %p220 = scmp.eq.s32.totalorder %s21, 0
    %p221 = por %p219, %p220
    %p222 = scmp.ne.s32.totalorder %s210, %s211
    %p223 = scmp.eq.s32.totalorder %s22, 1
    %p224 = por %p222, %p223
    %p226 = scmp.ne.s32.totalorder %s211, %s225
    %p227 = scmp.eq.s32.totalorder %s22, 0
    %p228 = por %p226, %p227
    %s230 = sadd.s32 %s229, 1
    %p233 = scmp.eq.s32.totalorder %s16, 1
    %p234 = scmp.ne.s32.totalorder %s229, %s231
    %p235 = scmp.eq.s32.totalorder %s16, 0
    %p236 = por %p234, %p235
    %p237 = scmp.ne.s32.totalorder %s229, %s231
    %p238 = scmp.eq.s32.totalorder %s21, 1
    %p239 = por %p237, %p238
    %p240 = scmp.ne.s32.totalorder %s231, %s232
    %p241 = scmp.eq.s32.totalorder %s21, 0
    %p242 = por %p240, %p241
    %p243 = scmp.ne.s32.totalorder %s231, %s232
    %p244 = scmp.eq.s32.totalorder %s22, 1
    %p245 = por %p243, %p244
    %p247 = scmp.ne.s32.totalorder %s232, %s246
    %p248 = scmp.eq.s32.totalorder %s22, 0
    %p249 = por %p247, %p248
    %s251 = sadd.s32 %s250, 1
    %p254 = scmp.eq.s32.totalorder %s16, 1
    %p255 = scmp.ne.s32.totalorder %s250, %s252
    %p256 = scmp.eq.s32.totalorder %s16, 0
    %p257 = por %p255, %p256
    %p258 = scmp.ne.s32.totalorder %s250, %s252
    %p259 = scmp.eq.s32.totalorder %s21, 1
    %p260 = por %p258, %p259
    %p261 = scmp.ne.s32.totalorder %s252, %s253
    %p262 = scmp.eq.s32.totalorder %s21, 0
    %p263 = por %p261, %p262
    %p264 = scmp.ne.s32.totalorder %s252, %s253
    %p265 = scmp.eq.s32.totalorder %s22, 1
    %p266 = por %p264, %p265
    %p268 = scmp.ne.s32.totalorder %s253, %s267
    %p269 = scmp.eq.s32.totalorder %s22, 0
    %p270 = por %p268, %p269
    %s271 = ssub.s32 %s24, %s31
    %s272 = ssub.s32 %s23, %s35
    %s273 = sor.u32 %s271, %s272
    %p274 = scmp.eq.s32.totalorder %s273, 0
    %s276 = sadd.s32 %s275, 1
    %s277 = scalar_select %p274, %s275, %s276
    %p280 = pneg %p274
    %p281 = scmp.eq.s32.totalorder %s16, 1
    %p282 = por %p280, %p281
    %p283 = scmp.ne.s32.totalorder %s275, %s278
    %p284 = scmp.eq.s32.totalorder %s16, 0
    %p285 = por %p283, %p284
    %p286 = scmp.ne.s32.totalorder %s275, %s278
    %p287 = scmp.eq.s32.totalorder %s21, 1
    %p288 = por %p286, %p287
    %p289 = scmp.ne.s32.totalorder %s278, %s279
    %p290 = scmp.eq.s32.totalorder %s21, 0
    %p291 = por %p289, %p290
    %p292 = scmp.ne.s32.totalorder %s278, %s279
    %p293 = scmp.eq.s32.totalorder %s22, 1
    %p294 = por %p292, %p293
    %p296 = scmp.ne.s32.totalorder %s279, %s295
    %p297 = scmp.eq.s32.totalorder %s22, 0
    %p298 = por %p296, %p297
    %p299 = scmp.le.s32.totalorder 1, %s16
    %p300 = scmp.lt.s32.totalorder %s16, 3
    %p301 = pnand %p299, %p300
    %p302 = pneg %p301
    // Predicated region
    $region9: #{hstasnet_forward.7} parent=5 // pred_check
      _
    $region10: #{hstasnet_forward.7} parent=5 // pred_check_branch
      %304 = sbr.rel (%p301) target = $region12
    $region11: #{hstasnet_forward.7} parent=5 // pred_region
      %s305 = ssub.s32 %s16, 1
      // Predicated region
      $region13: #{hstasnet_forward.7} parent=11 // pred_check
        %p306 = pneg %p54
      $region14: #{hstasnet_forward.7} parent=11 // pred_check_branch
        %308 = sbr.rel (%p306) target = $region16
      $region15: #{hstasnet_forward.7} parent=11 // pred_region
        %s309 = smul.u32 2, %s25
        %p310 = scmp.lt.s32.totalorder %s309, 1
        %s311 = scalar_select %p310, %s309, 1
        %s312 = smul.addr %s311, 8
        %s313 = scalar_lea.vmem %s0, %s312
        %s314 = smul.u32 2, %s25
      $region16: #{hstasnet_forward.7} parent=11 // pred_fallthru
        _
      // Predicated region
      $region17: #{hstasnet_forward.7} parent=11 // pred_check
        %p315 = pneg %p80
      $region18: #{hstasnet_forward.7} parent=11 // pred_check_branch
        %317 = sbr.rel (%p315) target = $region20
      $region19: #{hstasnet_forward.7} parent=11 // pred_region
        %s318 = smul.u32 2, %s25
        %p319 = scmp.lt.s32.totalorder %s318, 1
        %s320 = scalar_select %p319, %s318, 1
        %s321 = smul.addr %s320, 8
        %s322 = scalar_lea.vmem %s1, %s321
        %s323 = smul.u32 2, %s25
      $region20: #{hstasnet_forward.7} parent=11 // pred_fallthru
        _
      // Predicated region
      $region21: #{hstasnet_forward.7} parent=11 // pred_check
        %p324 = pneg %p106
      $region22: #{hstasnet_forward.7} parent=11 // pred_check_branch
        %326 = sbr.rel (%p324) target = $region24
      $region23: #{hstasnet_forward.7} parent=11 // pred_region
        %s327 = smul.u32 2, %s25
        %p328 = scmp.lt.s32.totalorder %s327, 1
        %s329 = scalar_select %p328, %s327, 1
        %s330 = smul.addr %s329, 8
        %s331 = scalar_lea.vmem %s2, %s330
        %s332 = smul.u32 2, %s25
      $region24: #{hstasnet_forward.7} parent=11 // pred_fallthru
        _
      // Predicated region
      $region25: #{hstasnet_forward.7} parent=11 // pred_check
        %p333 = pneg %p127
      $region26: #{hstasnet_forward.7} parent=11 // pred_check_branch
        %335 = sbr.rel (%p333) target = $region28
      $region27: #{hstasnet_forward.7} parent=11 // pred_region
        _
      $region28: #{hstasnet_forward.7} parent=11 // pred_fallthru
        _
      // Predicated region
      $region29: #{hstasnet_forward.7} parent=11 // pred_check
        %p336 = pneg %p148
      $region30: #{hstasnet_forward.7} parent=11 // pred_check_branch
        %338 = sbr.rel (%p336) target = $region32
      $region31: #{hstasnet_forward.7} parent=11 // pred_region
        _
      $region32: #{hstasnet_forward.7} parent=11 // pred_fallthru
        _
      // Predicated region
      $region33: #{hstasnet_forward.7} parent=11 // pred_check
        %p339 = pneg %p221
      $region34: #{hstasnet_forward.7} parent=11 // pred_check_branch
        %341 = sbr.rel (%p339) target = $region36
      $region35: #{hstasnet_forward.7} parent=11 // pred_region
        _
      $region36: #{hstasnet_forward.7} parent=11 // pred_fallthru
        _
      // Predicated region
      $region37: #{hstasnet_forward.7} parent=11 // pred_check
        %p342 = pneg %p242
      $region38: #{hstasnet_forward.7} parent=11 // pred_check_branch
        %344 = sbr.rel (%p342) target = $region40
      $region39: #{hstasnet_forward.7} parent=11 // pred_region
        _
      $region40: #{hstasnet_forward.7} parent=11 // pred_fallthru
        _
      // Predicated region
      $region41: #{hstasnet_forward.7} parent=11 // pred_check
        %p345 = pneg %p263
      $region42: #{hstasnet_forward.7} parent=11 // pred_check_branch
        %347 = sbr.rel (%p345) target = $region44
      $region43: #{hstasnet_forward.7} parent=11 // pred_region
        _
      $region44: #{hstasnet_forward.7} parent=11 // pred_fallthru
        _
    $region12: #{hstasnet_forward.7} parent=5 // pred_fallthru
      _
    %p348 = scmp.lt.s32.totalorder %s16, 2
    // Predicated region
    $region45: #{hstasnet_forward.7} parent=5 // pred_check
      %p349 = pneg %p348
    $region46: #{hstasnet_forward.7} parent=5 // pred_check_branch
      %351 = sbr.rel (%p349) target = $region48
    $region47: #{hstasnet_forward.7} parent=5 // pred_region
      // Predicated region
      $region49: #{hstasnet_forward.7} parent=47 // pred_check
        %p352 = pneg %p168
      $region50: #{hstasnet_forward.7} parent=47 // pred_check_branch
        %354 = sbr.rel (%p352) target = $region52
      $region51: #{hstasnet_forward.7} parent=47 // pred_region
        %p355 = scmp.lt.s32.totalorder %s24, 1
        %s356 = scalar_select %p355, %s24, 1
        %s357 = smul.addr %s356, 4
        %s358 = smul.addr %s357, 8
        %s359 = scalar_lea.vmem %s5, %s358
      $region52: #{hstasnet_forward.7} parent=47 // pred_fallthru
        _
      // Predicated region
      $region53: #{hstasnet_forward.7} parent=47 // pred_check
        %p360 = pneg %p194
      $region54: #{hstasnet_forward.7} parent=47 // pred_check_branch
        %362 = sbr.rel (%p360) target = $region56
      $region55: #{hstasnet_forward.7} parent=47 // pred_region
        %p363 = scmp.lt.s32.totalorder %s24, 1
        %s364 = scalar_select %p363, %s24, 1
        %s365 = scalar_lea.vmem %s6, %s364
      $region56: #{hstasnet_forward.7} parent=47 // pred_fallthru
        _
    $region48: #{hstasnet_forward.7} parent=5 // pred_fallthru
      _
    %p366 = scmp.le.s32.totalorder 1, %s16
    %p367 = scmp.lt.s32.totalorder %s16, 3
    %p368 = pnand %p366, %p367
    %p369 = pneg %p368
    // Predicated region
    $region57: #{hstasnet_forward.7} parent=5 // pred_check
      _
    $region58: #{hstasnet_forward.7} parent=5 // pred_check_branch
      %371 = sbr.rel (%p368) target = $region60
    $region59: #{hstasnet_forward.7} parent=5 // pred_region
      %s372 = ssub.s32 %s16, 1
      %s373 = smul.u32 2, %s25
      %p374 = scmp.lt.s32.totalorder %s373, 1
      %s375 = scalar_select %p374, %s373, 1
      %s376 = smul.addr %s375, 8
      %s377 = scalar_lea.vmem %s0, %s376
      %p378 = pneg %p54
      %p379 = pneg %p51
      %s380 = smul.u32 2, %s25
      %p381 = scmp.lt.s32.totalorder %s380, 1
      %s382 = scalar_select %p381, %s380, 1
      %s383 = smul.addr %s382, 8
      %s384 = scalar_lea.vmem %s1, %s383
      %p385 = pneg %p80
      %p386 = pneg %p77
      %s387 = smul.u32 2, %s25
      %p388 = scmp.lt.s32.totalorder %s387, 1
      %s389 = scalar_select %p388, %s387, 1
      %s390 = smul.addr %s389, 8
      %s391 = scalar_lea.vmem %s2, %s390
      %p392 = pneg %p106
      %p393 = pneg %p103
      %p394 = pneg %p127
      %p395 = pneg %p124
      %p396 = pneg %p148
      %p397 = pneg %p145
      %p398 = scmp.lt.s32.totalorder %s26, 1
      %s399 = scalar_select %p398, %s26, 1
      %s400 = smul.addr %s399, 4
      %s401 = smul.addr %s400, 8
      %s402 = scalar_lea.vmem %s5, %s401
      %p403 = pneg %p174
      %p404 = pneg %p171
      %p405 = scmp.lt.s32.totalorder %s26, 1
      %s406 = scalar_select %p405, %s26, 1
      %s407 = scalar_lea.vmem %s6, %s406
      %p408 = pneg %p200
      %p409 = pneg %p197
      %p410 = pneg %p221
      %p411 = pneg %p218
      %p412 = pneg %p242
      %p413 = pneg %p239
      %p414 = pneg %p263
      %p415 = pneg %p260
      %p416 = pneg %p291
      %p417 = pneg %p288
      %s418 = smul.u32 2, %s25
      %p419 = scmp.lt.s32.totalorder %s26, 1
      %s420 = scalar_select %p419, %s26, 1
      %p421 = scmp.lt.s32.totalorder %s418, 1
      %s422 = scalar_select %p421, %s418, 1
      %s423 = smul.addr %s420, 2
      %s424 = sadd.s32 %s422, %s423
      %s425 = smul.addr %s424, 8
      %s426 = scalar_lea.vmem %s10, %s425
      %s427 = smul.u32 2, %s25
      %p428 = scmp.lt.s32.totalorder %s427, 1
      %s429 = scalar_select %p428, %s427, 1
      %s430 = smul.addr %s429, 8
      %s431 = scalar_lea.vmem %s0, %s430
      %s432 = smul.u32 2, %s25
      %s433 = smul.u32 2, %s25
      %p434 = scmp.lt.s32.totalorder %s433, 1
      %s435 = scalar_select %p434, %s433, 1
      %s436 = smul.addr %s435, 8
      %s437 = scalar_lea.vmem %s1, %s436
      %s438 = smul.u32 2, %s25
      %s439 = smul.u32 2, %s25
      %p440 = scmp.lt.s32.totalorder %s439, 1
      %s441 = scalar_select %p440, %s439, 1
      %s442 = smul.addr %s441, 8
      %s443 = scalar_lea.vmem %s2, %s442
      %s444 = smul.u32 2, %s25
      %p445 = scmp.lt.s32.totalorder %s26, 1
      %s446 = scalar_select %p445, %s26, 1
      %s447 = smul.addr %s446, 4
      %s448 = smul.addr %s447, 8
      %s449 = scalar_lea.vmem %s5, %s448
      %p450 = scmp.lt.s32.totalorder %s26, 1
      %s451 = scalar_select %p450, %s26, 1
      %s452 = scalar_lea.vmem %s6, %s451
      %s453 = smul.u32 2, %s25
      %p454 = scmp.lt.s32.totalorder %s26, 1
      %s455 = scalar_select %p454, %s26, 1
      %p456 = scmp.lt.s32.totalorder %s453, 1
      %s457 = scalar_select %p456, %s453, 1
      %s458 = smul.addr %s455, 2
      %s459 = sadd.s32 %s457, %s458
      %s460 = smul.addr %s459, 8
      %s461 = scalar_lea.vmem %s10, %s460
      %s462 = smul.u32 2, %s25
      %v463 = vld [vmem:[%s437] sm:$0xff]
      %v464 = vld [vmem:[%s437 + $0x8] sm:$0xff]
      %v465 = vld [vmem:[%s443] sm:$0xff]
      %v466 = vld [vmem:[%s443 + $0x8] sm:$0xff]
      %v467 = vmul.f32 %v463, %v463
      %v468 = vmul.f32 %v464, %v464
      %v469 = vmul.f32 %v465, %v465
      %v470 = vmul.f32 %v466, %v466
      %v471 = vadd.f32 %v467, %v469
      %v472 = vadd.f32 %v468, %v470
      %v473 = vrsqrt.pop %v471
      %v474 = vmul.f32 %v471, %v473
      %vm475 = vcmp.eq.f32.partialorder %v471, inf
      %v476 = vsel %vm475, %v471, %v474
      %vm477 = vcmp.eq.f32.partialorder %v471, 0.0
      %v478 = vand.u32 %v471, 2147483648
      %v479 = vsel %vm477, %v478, %v476
      %v480 = vrsqrt.pop %v472
      %v481 = vmul.f32 %v472, %v480
      %vm482 = vcmp.eq.f32.partialorder %v472, inf
      %v483 = vsel %vm482, %v472, %v481
      %vm484 = vcmp.eq.f32.partialorder %v472, 0.0
      %v485 = vand.u32 %v472, 2147483648
      %v486 = vsel %vm484, %v485, %v483
      %v487 = vld [vmem:[%s3] sm:$0xff]
      %v488 = vld [vmem:[%s3 + $0x8] sm:$0xff]
      %v489 = vld [vmem:[%s3 + $0x10] sm:$0xff]
      %v490 = vld [vmem:[%s3 + $0x18] sm:$0xff]
      %v491 = vld [vmem:[%s3 + $0x20] sm:$0xff]
      %v492 = vld [vmem:[%s3 + $0x28] sm:$0xff]
      %v493 = vld [vmem:[%s3 + $0x30] sm:$0xff]
      %v494 = vld [vmem:[%s3 + $0x38] sm:$0xff]
      %v495 = vld [vmem:[%s3 + $0x40] sm:$0x3]
      %v496 = vld [vmem:[%s4] sm:$0x1]
      %v498 = vlaneseq
      %v499 = vshrl.u32 %v498, 7
      %v500 = vsub.s32 0, %v499
      %v501 = vrot.slane %v496, %v500
      %vm503 = vcmask 539648
      %v505 = vsel %vm503, %v479, 0
      %v508 = vsel %vm503, %v486, 0
      %vm510 = vcmask 1041408
      %v512 = vsel %vm510, %v495, 0
      %514 = vmatprep.subr.mxu0 0.0
      %515 = vmatpush1.msra.mxu0 0.0
      %516 = vmatprep.subr.mxu0 0.0
      %517 = vmatpush1.msra.mxu0 0.0
      %518 = vmatprep.subr.mxu0 0.0
      %519 = vmatpush1.msra.mxu0 0.0
      %520 = vmatprep.subr.mxu0 0.0
      %521 = vmatpush1.msra.mxu0 0.0
      %522 = vmatprep.subr.mxu0 0.0
      %523 = vmatpush1.msra.mxu0 0.0
      %524 = vmatprep.subr.mxu0 0.0
      %525 = vmatpush1.msra.mxu0 0.0
      %526 = vmatprep.subr.mxu0 0.0
      %527 = vmatpush1.msra.mxu0 0.0
      %528 = vmatprep.subr.mxu0 0.0
      %529 = vmatpush1.msra.mxu0 %v512
      %530 = vmatprep.subr.mxu0 0.0
      %531 = vmatpush1.msra.mxu0 %v494
      %532 = vmatprep.subr.mxu0 0.0
      %533 = vmatpush1.msra.mxu0 %v493
      %534 = vmatprep.subr.mxu0 0.0
      %535 = vmatpush1.msra.mxu0 %v492
      %536 = vmatprep.subr.mxu0 0.0
      %537 = vmatpush1.msra.mxu0 %v491
      %538 = vmatprep.subr.mxu0 0.0
      %539 = vmatpush1.msra.mxu0 %v490
      %540 = vmatprep.subr.mxu0 0.0
      %541 = vmatpush1.msra.mxu0 %v489
      %542 = vmatprep.subr.mxu0 0.0
      %543 = vmatpush1.msra.mxu0 %v488
      %544 = vmatprep.subr.mxu0 0.0
      %545 = vmatpush1.msra.mxu0 %v487
      %546 = vmatprep.subr.mxu0 0.0
      %547 = vmatpush2.msra.mxu0 0.0
      %548 = vmatprep.subr.mxu0 0.0
      %549 = vmatpush2.msra.mxu0 0.0
      %550 = vmatprep.subr.mxu0 0.0
      %551 = vmatpush2.msra.mxu0 0.0
      %552 = vmatprep.subr.mxu0 0.0
      %553 = vmatpush2.msra.mxu0 0.0
      %554 = vmatprep.subr.mxu0 0.0
      %555 = vmatpush2.msra.mxu0 0.0
      %556 = vmatprep.subr.mxu0 0.0
      %557 = vmatpush2.msra.mxu0 0.0
      %558 = vmatprep.subr.mxu0 0.0
      %559 = vmatpush2.msra.mxu0 0.0
      %560 = vmatprep.subr.mxu0 0.0
      %561 = vmatpush2.msra.mxu0 0.0
      %562 = vmatprep.subr.mxu0 0.0
      %563 = vmatpush2.msra.mxu0 0.0
      %564 = vmatprep.subr.mxu0 0.0
      %565 = vmatpush2.msra.mxu0 0.0
      %566 = vmatprep.subr.mxu0 0.0
      %567 = vmatpush2.msra.mxu0 0.0
      %568 = vmatprep.subr.mxu0 0.0
      %569 = vmatpush2.msra.mxu0 0.0
      %570 = vmatprep.subr.mxu0 0.0
      %571 = vmatpush2.msra.mxu0 0.0
      %572 = vmatprep.subr.mxu0 0.0
      %573 = vmatpush2.msra.mxu0 0.0
      %574 = vmatprep.subr.mxu0 0.0
      %575 = vmatpush2.msra.mxu0 0.0
      %576 = vmatprep.subr.mxu0 0.0
      %577 = vmatpush2.msra.mxu0 0.0
      %578 = vmatprep.mubr.f32.mxu0 0.0
      %579 = vmatmul.mubr.f32.gmra.mxu0 %v505
      %v580 = vpop.f32.mrf.mxu0
      %v581 = vadd.f32 %v501, %v580
      %v582 = vpop.f32.mrf.mxu0
      %583 = vmatprep.mubr.f32.mxu0 0.0
      %584 = vmatmul.mubr.f32.gmra.mxu0 %v508
      %v585 = vpop.f32.mrf.mxu0
      %v586 = vadd.f32 %v501, %v585
      %v587 = vpop.f32.mrf.mxu0
      %588 = vdwg.mxu0
      %v589 = vld [vmem:[%s431] sm:$0xff]
      %v590 = vld [vmem:[%s431 + $0x8] sm:$0xff]
      %v591 = vadd.f32 %v589, %v581
      %v592 = vadd.f32 %v590, %v586
      %v593 = vld [vmem:[%s449] sm:$0xff]
      %v594 = vld [vmem:[%s449 + $0x8] sm:$0xff]
      %v595 = vld [vmem:[%s449 + $0x10] sm:$0xff]
      %v596 = vld [vmem:[%s449 + $0x18] sm:$0xff]
      %v597 = vld [vmem:[%s452] sm:$0x1]
      %v599 = vlaneseq
      %v600 = vshrl.u32 %v599, 7
      %v601 = vsub.s32 0, %v600
      %v602 = vrot.slane %v597, %v601
      %vm604 = vcmask 261120
      %v606 = vsel %vm604, %v591, 0
      %v609 = vsel %vm604, %v592, 0
      %611 = vmatprep.subr.mxu0 0.0
      %612 = vmatpush1.msra.mxu0 0.0
      %613 = vmatprep.subr.mxu0 0.0
      %614 = vmatpush1.msra.mxu0 0.0
      %615 = vmatprep.subr.mxu0 0.0
      %616 = vmatpush1.msra.mxu0 0.0
      %617 = vmatprep.subr.mxu0 0.0
      %618 = vmatpush1.msra.mxu0 0.0
      %619 = vmatprep.subr.mxu0 0.0
      %620 = vmatpush1.msra.mxu0 0.0
      %621 = vmatprep.subr.mxu0 0.0
      %622 = vmatpush1.msra.mxu0 0.0
      %623 = vmatprep.subr.mxu0 0.0
      %624 = vmatpush1.msra.mxu0 0.0
      %625 = vmatprep.subr.mxu0 0.0
      %626 = vmatpush1.msra.mxu0 0.0
      %627 = vmatprep.subr.mxu0 0.0
      %628 = vmatpush1.msra.mxu0 0.0
      %629 = vmatprep.subr.mxu0 0.0
      %630 = vmatpush1.msra.mxu0 0.0
      %631 = vmatprep.subr.mxu0 0.0
      %632 = vmatpush1.msra.mxu0 0.0
      %633 = vmatprep.subr.mxu0 0.0
      %634 = vmatpush1.msra.mxu0 0.0
      %635 = vmatprep.subr.mxu0 0.0
      %636 = vmatpush1.msra.mxu0 %v596
      %637 = vmatprep.subr.mxu0 0.0
      %638 = vmatpush1.msra.mxu0 %v595
      %639 = vmatprep.subr.mxu0 0.0
      %640 = vmatpush1.msra.mxu0 %v594
      %641 = vmatprep.subr.mxu0 0.0
      %642 = vmatpush1.msra.mxu0 %v593
      %643 = vmatprep.subr.mxu0 0.0
      %644 = vmatpush2.msra.mxu0 0.0
      %645 = vmatprep.subr.mxu0 0.0
      %646 = vmatpush2.msra.mxu0 0.0
      %647 = vmatprep.subr.mxu0 0.0
      %648 = vmatpush2.msra.mxu0 0.0
      %649 = vmatprep.subr.mxu0 0.0
      %650 = vmatpush2.msra.mxu0 0.0
      %651 = vmatprep.subr.mxu0 0.0
      %652 = vmatpush2.msra.mxu0 0.0
      %653 = vmatprep.subr.mxu0 0.0
      %654 = vmatpush2.msra.mxu0 0.0
      %655 = vmatprep.subr.mxu0 0.0
      %656 = vmatpush2.msra.mxu0 0.0
      %657 = vmatprep.subr.mxu0 0.0
      %658 = vmatpush2.msra.mxu0 0.0
      %659 = vmatprep.subr.mxu0 0.0
      %660 = vmatpush2.msra.mxu0 0.0
      %661 = vmatprep.subr.mxu0 0.0
      %662 = vmatpush2.msra.mxu0 0.0
      %663 = vmatprep.subr.mxu0 0.0
      %664 = vmatpush2.msra.mxu0 0.0
      %665 = vmatprep.subr.mxu0 0.0
      %666 = vmatpush2.msra.mxu0 0.0
      %667 = vmatprep.subr.mxu0 0.0
      %668 = vmatpush2.msra.mxu0 0.0
      %669 = vmatprep.subr.mxu0 0.0
      %670 = vmatpush2.msra.mxu0 0.0
      %671 = vmatprep.subr.mxu0 0.0
      %672 = vmatpush2.msra.mxu0 0.0
      %673 = vmatprep.subr.mxu0 0.0
      %674 = vmatpush2.msra.mxu0 0.0
      %675 = vmatprep.mubr.f32.mxu0 0.0
      %676 = vmatmul.mubr.f32.gmra.mxu0 %v606
      %v677 = vpop.f32.mrf.mxu0
      %v678 = vadd.f32 %v602, %v677
      %v679 = vpop.f32.mrf.mxu0
      %680 = vmatprep.mubr.f32.mxu0 0.0
      %681 = vmatmul.mubr.f32.gmra.mxu0 %v609
      %v682 = vpop.f32.mrf.mxu0
      %v683 = vadd.f32 %v602, %v682
      %v684 = vpop.f32.mrf.mxu0
      %685 = vdwg.mxu0
      %v686 = vmul.f32 %v678, %v463
      %v687 = vmul.f32 %v683, %v464
      %v688 = vld [vmem:[%s7] sm:$0xff]
      %v689 = vld [vmem:[%s7 + $0x8] sm:$0xff]
      %v690 = vld [vmem:[%s7 + $0x10] sm:$0xff]
      %v691 = vld [vmem:[%s7 + $0x18] sm:$0xff]
      %v692 = vld [vmem:[%s7 + $0x20] sm:$0xff]
      %v693 = vld [vmem:[%s7 + $0x28] sm:$0xff]
      %v694 = vld [vmem:[%s7 + $0x30] sm:$0xff]
      %v695 = vld [vmem:[%s7 + $0x38] sm:$0xff]
      %v696 = vld [vmem:[%s7 + $0x40] sm:$0x3]
      %v697 = vmul.f32 %v678, %v465
      %v698 = vmul.f32 %v683, %v466
      %v699 = vld [vmem:[%s8] sm:$0xff]
      %v700 = vld [vmem:[%s8 + $0x8] sm:$0xff]
      %v701 = vld [vmem:[%s8 + $0x10] sm:$0xff]
      %v702 = vld [vmem:[%s8 + $0x18] sm:$0xff]
      %v703 = vld [vmem:[%s8 + $0x20] sm:$0xff]
      %v704 = vld [vmem:[%s8 + $0x28] sm:$0xff]
      %v705 = vld [vmem:[%s8 + $0x30] sm:$0xff]
      %v706 = vld [vmem:[%s8 + $0x38] sm:$0xff]
      %v707 = vld [vmem:[%s8 + $0x40] sm:$0x3]
      %v709 = vsel %vm503, %v697, 0
      %v712 = vsel %vm503, %v698, 0
      %v715 = vsel %vm510, %v707, 0
      %717 = vmatprep.subr.mxu0 0.0
      %718 = vmatpush1.msra.mxu0 0.0
      %719 = vmatprep.subr.mxu0 0.0
      %720 = vmatpush1.msra.mxu0 0.0
      %721 = vmatprep.subr.mxu0 0.0
      %722 = vmatpush1.msra.mxu0 0.0
      %723 = vmatprep.subr.mxu0 0.0
      %724 = vmatpush1.msra.mxu0 0.0
      %725 = vmatprep.subr.mxu0 0.0
      %726 = vmatpush1.msra.mxu0 0.0
      %727 = vmatprep.subr.mxu0 0.0
      %728 = vmatpush1.msra.mxu0 0.0
      %729 = vmatprep.subr.mxu0 0.0
      %730 = vmatpush1.msra.mxu0 0.0
      %731 = vmatprep.subr.mxu0 0.0
      %732 = vmatpush1.msra.mxu0 %v715
      %733 = vmatprep.subr.mxu0 0.0
      %734 = vmatpush1.msra.mxu0 %v706
      %735 = vmatprep.subr.mxu0 0.0
      %736 = vmatpush1.msra.mxu0 %v705
      %737 = vmatprep.subr.mxu0 0.0
      %738 = vmatpush1.msra.mxu0 %v704
      %739 = vmatprep.subr.mxu0 0.0
      %740 = vmatpush1.msra.mxu0 %v703
      %741 = vmatprep.subr.mxu0 0.0
      %742 = vmatpush1.msra.mxu0 %v702
      %743 = vmatprep.subr.mxu0 0.0
      %744 = vmatpush1.msra.mxu0 %v701
      %745 = vmatprep.subr.mxu0 0.0
      %746 = vmatpush1.msra.mxu0 %v700
      %747 = vmatprep.subr.mxu0 0.0
      %748 = vmatpush1.msra.mxu0 %v699
      %749 = vmatprep.subr.mxu0 0.0
      %750 = vmatpush2.msra.mxu0 0.0
      %751 = vmatprep.subr.mxu0 0.0
      %752 = vmatpush2.msra.mxu0 0.0
      %753 = vmatprep.subr.mxu0 0.0
      %754 = vmatpush2.msra.mxu0 0.0
      %755 = vmatprep.subr.mxu0 0.0
      %756 = vmatpush2.msra.mxu0 0.0
      %757 = vmatprep.subr.mxu0 0.0
      %758 = vmatpush2.msra.mxu0 0.0
      %759 = vmatprep.subr.mxu0 0.0
      %760 = vmatpush2.msra.mxu0 0.0
      %761 = vmatprep.subr.mxu0 0.0
      %762 = vmatpush2.msra.mxu0 0.0
      %763 = vmatprep.subr.mxu0 0.0
      %764 = vmatpush2.msra.mxu0 0.0
      %765 = vmatprep.subr.mxu0 0.0
      %766 = vmatpush2.msra.mxu0 0.0
      %767 = vmatprep.subr.mxu0 0.0
      %768 = vmatpush2.msra.mxu0 0.0
      %769 = vmatprep.subr.mxu0 0.0
      %770 = vmatpush2.msra.mxu0 0.0
      %771 = vmatprep.subr.mxu0 0.0
      %772 = vmatpush2.msra.mxu0 0.0
      %773 = vmatprep.subr.mxu0 0.0
      %774 = vmatpush2.msra.mxu0 0.0
      %775 = vmatprep.subr.mxu0 0.0
      %776 = vmatpush2.msra.mxu0 0.0
      %777 = vmatprep.subr.mxu0 0.0
      %778 = vmatpush2.msra.mxu0 0.0
      %779 = vmatprep.subr.mxu0 0.0
      %780 = vmatpush2.msra.mxu0 0.0
      %781 = vmatprep.mubr.f32.mxu0 0.0
      %782 = vmatmul.mubr.f32.gmra.mxu0 %v709
      %v783 = vpop.f32.mrf.mxu0
      %v784 = vadd.f32 0.0, %v783
      %v785 = vpop.f32.mrf.mxu0
      %786 = vmatprep.mubr.f32.mxu0 0.0
      %787 = vmatmul.mubr.f32.gmra.mxu0 %v712
      %v788 = vpop.f32.mrf.mxu0
      %v789 = vadd.f32 0.0, %v788
      %v790 = vpop.f32.mrf.mxu0
      %791 = vdwg.mxu0
      %v793 = vsel %vm503, %v686, 0
      %v796 = vsel %vm503, %v687, 0
      %v799 = vsel %vm510, %v696, 0
      %801 = vmatprep.subr.mxu0 0.0
      %802 = vmatpush1.msra.mxu0 0.0
      %803 = vmatprep.subr.mxu0 0.0
      %804 = vmatpush1.msra.mxu0 0.0
      %805 = vmatprep.subr.mxu0 0.0
      %806 = vmatpush1.msra.mxu0 0.0
      %807 = vmatprep.subr.mxu0 0.0
      %808 = vmatpush1.msra.mxu0 0.0
      %809 = vmatprep.subr.mxu0 0.0
      %810 = vmatpush1.msra.mxu0 0.0
      %811 = vmatprep.subr.mxu0 0.0
      %812 = vmatpush1.msra.mxu0 0.0
      %813 = vmatprep.subr.mxu0 0.0
      %814 = vmatpush1.msra.mxu0 0.0
      %815 = vmatprep.subr.mxu0 0.0
      %816 = vmatpush1.msra.mxu0 %v799
      %817 = vmatprep.subr.mxu0 0.0
      %818 = vmatpush1.msra.mxu0 %v695
      %819 = vmatprep.subr.mxu0 0.0
      %820 = vmatpush1.msra.mxu0 %v694
      %821 = vmatprep.subr.mxu0 0.0
      %822 = vmatpush1.msra.mxu0 %v693
      %823 = vmatprep.subr.mxu0 0.0
      %824 = vmatpush1.msra.mxu0 %v692
      %825 = vmatprep.subr.mxu0 0.0
      %826 = vmatpush1.msra.mxu0 %v691
      %827 = vmatprep.subr.mxu0 0.0
      %828 = vmatpush1.msra.mxu0 %v690
      %829 = vmatprep.subr.mxu0 0.0
      %830 = vmatpush1.msra.mxu0 %v689
      %831 = vmatprep.subr.mxu0 0.0
      %832 = vmatpush1.msra.mxu0 %v688
      %833 = vmatprep.subr.mxu0 0.0
      %834 = vmatpush2.msra.mxu0 0.0
      %835 = vmatprep.subr.mxu0 0.0
      %836 = vmatpush2.msra.mxu0 0.0
      %837 = vmatprep.subr.mxu0 0.0
      %838 = vmatpush2.msra.mxu0 0.0
      %839 = vmatprep.subr.mxu0 0.0
      %840 = vmatpush2.msra.mxu0 0.0
      %841 = vmatprep.subr.mxu0 0.0
      %842 = vmatpush2.msra.mxu0 0.0
      %843 = vmatprep.subr.mxu0 0.0
      %844 = vmatpush2.msra.mxu0 0.0
      %845 = vmatprep.subr.mxu0 0.0
      %846 = vmatpush2.msra.mxu0 0.0
      %847 = vmatprep.subr.mxu0 0.0
      %848 = vmatpush2.msra.mxu0 0.0
      %849 = vmatprep.subr.mxu0 0.0
      %850 = vmatpush2.msra.mxu0 0.0
      %851 = vmatprep.subr.mxu0 0.0
      %852 = vmatpush2.msra.mxu0 0.0
      %853 = vmatprep.subr.mxu0 0.0
      %854 = vmatpush2.msra.mxu0 0.0
      %855 = vmatprep.subr.mxu0 0.0
      %856 = vmatpush2.msra.mxu0 0.0
      %857 = vmatprep.subr.mxu0 0.0
      %858 = vmatpush2.msra.mxu0 0.0
      %859 = vmatprep.subr.mxu0 0.0
      %860 = vmatpush2.msra.mxu0 0.0
      %861 = vmatprep.subr.mxu0 0.0
      %862 = vmatpush2.msra.mxu0 0.0
      %863 = vmatprep.subr.mxu0 0.0
      %864 = vmatpush2.msra.mxu0 0.0
      %865 = vmatprep.mubr.f32.mxu0 0.0
      %866 = vmatmul.mubr.f32.gmra.mxu0 %v793
      %v867 = vpop.f32.mrf.mxu0
      %v868 = vadd.f32 %v784, %v867
      %v869 = vpop.f32.mrf.mxu0
      %870 = vmatprep.mubr.f32.mxu0 0.0
      %871 = vmatmul.mubr.f32.gmra.mxu0 %v796
      %v872 = vpop.f32.mrf.mxu0
      %v873 = vadd.f32 %v789, %v872
      %v874 = vpop.f32.mrf.mxu0
      %875 = vdwg.mxu0
      %v876 = vld [vmem:[%s9] sm:$0x1]
      %v878 = vlaneseq
      %v879 = vshrl.u32 %v878, 7
      %v880 = vsub.s32 0, %v879
      %v881 = vrot.slane %v876, %v880
      %v883 = vmul.f32 %v868, %v881
      %v884 = vmul.f32 %v873, %v881
      %885 = vst [vmem:[%s461] sm:$0xff] %v883
      %886 = vst [vmem:[%s461 + $0x8] sm:$0xff] %v884
      %s887 = smul.u32 2, %s25
      %p888 = scmp.lt.s32.totalorder %s26, 1
      %s889 = scalar_select %p888, %s26, 1
      %p890 = scmp.lt.s32.totalorder %s887, 1
      %s891 = scalar_select %p890, %s887, 1
      %s892 = smul.addr %s889, 2
      %s893 = sadd.s32 %s891, %s892
      %s894 = smul.addr %s893, 8
      %s895 = scalar_lea.vmem %s10, %s894
      // Predicated region
      $region61: #{hstasnet_forward.7} parent=59 // pred_check
        %p896 = pneg %p288
      $region62: #{hstasnet_forward.7} parent=59 // pred_check_branch
        %898 = sbr.rel (%p896) target = $region64
      $region63: #{hstasnet_forward.7} parent=59 // pred_region
        %s899 = smul.u32 2, %s25
      $region64: #{hstasnet_forward.7} parent=59 // pred_fallthru
        _
    $region60: #{hstasnet_forward.7} parent=5 // pred_fallthru
      _
    %p900 = scmp.le.s32.totalorder 2, %s16
    // Predicated region
    $region65: #{hstasnet_forward.7} parent=5 // pred_check
      %p901 = pneg %p900
    $region66: #{hstasnet_forward.7} parent=5 // pred_check_branch
      %903 = sbr.rel (%p901) target = $region68
    $region67: #{hstasnet_forward.7} parent=5 // pred_region
      %s904 = ssub.s32 %s16, 2
      // Predicated region
      $region69: #{hstasnet_forward.7} parent=67 // pred_check
        %p905 = pneg %p294
      $region70: #{hstasnet_forward.7} parent=67 // pred_check_branch
        %907 = sbr.rel (%p905) target = $region72
      $region71: #{hstasnet_forward.7} parent=67 // pred_region
        %s908 = smul.u32 2, %s27
        %p909 = scmp.lt.s32.totalorder %s28, 1
        %s910 = scalar_select %p909, %s28, 1
        %p911 = scmp.lt.s32.totalorder %s908, 1
        %s912 = scalar_select %p911, %s908, 1
        %s913 = smul.addr %s910, 2
        %s914 = sadd.s32 %s912, %s913
        %s915 = smul.addr %s914, 8
        %s916 = scalar_lea.vmem %s10, %s915
      $region72: #{hstasnet_forward.7} parent=67 // pred_fallthru
        _
    $region68: #{hstasnet_forward.7} parent=5 // pred_fallthru
      _
  $region6: #{hstasnet_forward.7} parent=0 // loop_footer
    %s20 = sadd.s32 1, %s16
  $region7: #{hstasnet_forward.7} parent=0 // loop_footer_branch
    %15 = sbr.rel target = $region3
  $region8: #{hstasnet_forward.7} parent=0 // loop_exit
    _

</llo_original>
